<compile_context>
chip_gen: v5e
topology: v5e:2x2
jax: 0.10.0
libtpu: 0.0.40
codegen_flags: <defaults>
</compile_context>

<pallas_src>
import math
import functools

import numpy as np
import jax
import jax.numpy as jnp
from jax.experimental import pallas as pl
from jax.experimental.pallas import tpu as pltpu

POOL = 4  # self.pool_size


# --------------------------------------------------------------------------- kernel A
def _conv_pool_kernel(x_ref, w_ref, b_ref, amat_ref, max_ref, avg_ref, *, H, W, P):
    """1x1 conv (BN folded) + SiLU + adaptive max/avg pool to PxP for one frame."""
    hs, ws = H // P, W // P
    # conv as matmul (bf16 inputs, f32 accumulation) + SiLU
    y = jnp.dot(x_ref[0], w_ref[...], preferred_element_type=jnp.float32) + b_ref[...]
    y = y * jax.nn.sigmoid(y)                                       # [HW, C] f32

    # avg-pool as an MXU matmul (uniform PxP windows since H, W % P == 0)
    avg_ref[0] = jnp.dot(amat_ref[...], y, preferred_element_type=jnp.float32)

    # max-pool via static window slices (P*P = 16 windows)
    rows = []
    for pi in range(P):
        for pj in range(P):
            mx = None
            for r in range(hs):
                start = (pi * hs + r) * W + pj * ws
                m = jnp.max(y[start:start + ws, :], axis=0, keepdims=True)
                mx = m if mx is None else jnp.maximum(mx, m)
            rows.append(mx)
    max_ref[0] = jnp.concatenate(rows, axis=0)                      # [PP, C]


def conv_pool_pallas(x_nlc, w_fold, b_fold, avg_mat, *, H, W, P):
    n, hw, c = x_nlc.shape
    pp = P * P
    kernel = functools.partial(_conv_pool_kernel, H=H, W=W, P=P)
    return pl.pallas_call(
        kernel,
        grid=(n,),
        in_specs=[
            pl.BlockSpec((1, hw, c), lambda i: (i, 0, 0)),          # one frame per step
            pl.BlockSpec((c, c), lambda i: (0, 0)),                 # folded conv weight
            pl.BlockSpec((1, c), lambda i: (0, 0)),                 # folded BN bias
            pl.BlockSpec((pp, hw), lambda i: (0, 0)),               # avg-pool matrix
        ],
        out_specs=(
            pl.BlockSpec((1, pp, c), lambda i: (i, 0, 0)),
            pl.BlockSpec((1, pp, c), lambda i: (i, 0, 0)),
        ),
        out_shape=(
            jax.ShapeDtypeStruct((n, pp, c), jnp.float32),
            jax.ShapeDtypeStruct((n, pp, c), jnp.float32),
        ),
        compiler_params=pltpu.CompilerParams(dimension_semantics=("parallel",)),
    )(x_nlc, w_fold, b_fold, avg_mat)


# --------------------------------------------------------------------------- kernel B
def _ta_attn_kernel(maxp_ref, avgp_ref, ptc_ref, ftc_ref, wtc_ref, btc_ref,
                    wim_ref, wia_ref, bin_ref, wq_ref, bq_ref, wk_ref, bk_ref,
                    mt_ref, feat_ref, o_ref, *, TP, TF, PP, C):
    mp = maxp_ref[0]                                                # [TP+1, PP, C]
    ap = avgp_ref[0]                                                # [TP+1, PP, C]

    # fc_time_constant: Linear(1, C) + Tanh, time constants already tiled PP times
    # (matches torch.cat([fc_time_constant(t)] * pool_size**2, dim=1) ordering).
    ptc_emb = jnp.tanh(ptc_ref[0] * wtc_ref[...] + btc_ref[...])    # [TP*PP, C]
    ftc_emb = jnp.tanh(ftc_ref[0] * wtc_ref[...] + btc_ref[...])    # [TF*PP, C]

    # ----- past branch: fc_in (split matmul == concat([max,avg]) @ W_in) + SiLU + tpe add + fc_key
    mp_p = mp[:TP].reshape(TP * PP, C)
    ap_p = ap[:TP].reshape(TP * PP, C)
    h_p = (jnp.dot(mp_p, wim_ref[...], preferred_element_type=jnp.float32)
           + jnp.dot(ap_p, wia_ref[...], preferred_element_type=jnp.float32)
           + bin_ref[...])
    h_p = h_p * jax.nn.sigmoid(h_p)                                 # SiLU
    k = jnp.dot(h_p + ptc_emb, wk_ref[...],
                preferred_element_type=jnp.float32) + bk_ref[...]   # [TP*PP, C]

    # ----- value: avg-pool linearity -> avgpool(last) - avgpool(past)
    v = (ap[TP][None] - ap[:TP]).reshape(TP * PP, C)                # [TP*PP, C]

    # ----- future branch: last frame is broadcast over TF, so fc_in runs once
    h_f = (jnp.dot(mp[TP], wim_ref[...], preferred_element_type=jnp.float32)
           + jnp.dot(ap[TP], wia_ref[...], preferred_element_type=jnp.float32)
           + bin_ref[...])
    h_f = h_f * jax.nn.sigmoid(h_f)                                 # [PP, C]

    feat = feat_ref[0]                                              # [C, HW] raw last frame
    for f in range(TF):
        # fc_query (1/sqrt(TF*PP) already folded into wq/bq)
        q_f = jnp.dot(h_f + ftc_emb[f * PP:(f + 1) * PP], wq_ref[...],
                      preferred_element_type=jnp.float32) + bq_ref[...]      # [PP, C]
        # attention: identity activation, eval-mode dropout is a no-op
        s_f = jax.lax.dot_general(q_f, k, (((1,), (1,)), ((), ())),
                                  preferred_element_type=jnp.float32)        # [PP, TP*PP]
        attn_f = jnp.dot(s_f, v, preferred_element_type=jnp.float32)         # [PP, C]
        # bilinear upsample (p_attn/(TP*PP) folded into mt) + residual, channels-first
        up_f = jax.lax.dot_general(attn_f, mt_ref[...], (((0,), (0,)), ((), ())),
                                   preferred_element_type=jnp.float32)       # [C, HW]
        o_ref[0, f] = (feat + up_f).astype(o_ref.dtype)


def ta_attn_pallas(maxp, avgp, ptc_t, ftc_t, wtc, btc, wim, wia, b_in,
                   wq_s, bq_s, wk, bk, mt, feat_last, *, TP, TF, PP, C, HW):
    B = maxp.shape[0]
    Tp1 = TP + 1
    kernel = functools.partial(_ta_attn_kernel, TP=TP, TF=TF, PP=PP, C=C)
    const2 = lambda i: (0, 0)
    return pl.pallas_call(
        kernel,
        grid=(B,),
        in_specs=[
            pl.BlockSpec((1, Tp1, PP, C), lambda i: (i, 0, 0, 0)),  # max pooled
            pl.BlockSpec((1, Tp1, PP, C), lambda i: (i, 0, 0, 0)),  # avg pooled
            pl.BlockSpec((1, TP * PP, 1), lambda i: (i, 0, 0)),     # tiled past tc
            pl.BlockSpec((1, TF * PP, 1), lambda i: (i, 0, 0)),     # tiled future tc
            pl.BlockSpec((1, C), const2),                           # tc weight
            pl.BlockSpec((1, C), const2),                           # tc bias
            pl.BlockSpec((C, C), const2),                           # fc_in W (max half)
            pl.BlockSpec((C, C), const2),                           # fc_in W (avg half)
            pl.BlockSpec((1, C), const2),                           # fc_in bias
            pl.BlockSpec((C, C), const2),                           # fc_query W (scaled)
            pl.BlockSpec((1, C), const2),                           # fc_query bias (scaled)
            pl.BlockSpec((C, C), const2),                           # fc_key W
            pl.BlockSpec((1, C), const2),                           # fc_key bias
            pl.BlockSpec((PP, HW), const2),                         # bilinear matrix (scaled)
            pl.BlockSpec((1, C, HW), lambda i: (i, 0, 0)),          # raw last frame (CHW)
        ],
        out_specs=pl.BlockSpec((1, TF, C, HW), lambda i: (i, 0, 0, 0)),
        out_shape=jax.ShapeDtypeStruct((B, TF, C, HW), jnp.float32),
        compiler_params=pltpu.CompilerParams(dimension_semantics=("parallel",)),
    )(maxp, avgp, ptc_t, ftc_t, wtc, btc, wim, wia, b_in, wq_s, bq_s, wk, bk, mt, feat_last)


# --------------------------------------------------------------------------- host glue
def _interp_weights(out_size, in_size):
    # PyTorch bilinear, align_corners=False
    w = np.zeros((out_size, in_size), np.float32)
    scale = in_size / out_size
    for i in range(out_size):
        src = max((i + 0.5) * scale - 0.5, 0.0)
        i0 = min(int(np.floor(src)), in_size - 1)
        i1 = i0 + 1 if i0 < in_size - 1 else i0
        l1 = src - i0
        w[i, i0] += 1.0 - l1
        w[i, i1] += l1
    return w


def _bilinear_matrix(h, w, p):
    wh = _interp_weights(h, p)
    ww = _interp_weights(w, p)
    return np.einsum("ip,jq->ijpq", wh, ww).reshape(h * w, p * p)   # [HW, PP]


def _avgpool_matrix(h, w, p):
    hs, ws = h // p, w // p
    a = np.zeros((p * p, h * w), np.float32)
    inv = 1.0 / float(hs * ws)
    for pi in range(p):
        for pj in range(p):
            for r in range(hs):
                for c_ in range(ws):
                    a[pi * p + pj, (pi * hs + r) * w + pj * ws + c_] = inv
    return a                                                        # [PP, HW]


def ta_block_forward(feature, past_tc, future_tc, params):
    B, Tp1, C, H, W = feature.shape
    TP = Tp1 - 1
    TF = future_tc.shape[1]
    P = POOL
    PP = P * P
    HW = H * W
    assert H % P == 0 and W % P == 0
    f32 = jnp.float32

    # ---- conv_p fold: 1x1 conv (no bias) + BN (eps=1e-3) + SiLU ----
    bn_scale = params["bn_gamma"] / jnp.sqrt(params["bn_var"] + 1e-3)
    w_fold = (params["conv_w"].reshape(C, C).T * bn_scale[None, :]).astype(jnp.bfloat16)
    b_fold = (params["bn_beta"] - params["bn_mean"] * bn_scale)[None, :].astype(f32)

    # channels-last for the conv matmul; bf16 halves HBM traffic of the only big tensor
    x_nlc = jnp.transpose(feature, (0, 1, 3, 4, 2)).reshape(B * Tp1, HW, C).astype(jnp.bfloat16)
    avg_mat = jnp.asarray(_avgpool_matrix(H, W, P))                 # [PP, HW]

    maxp, avgp = conv_pool_pallas(x_nlc, w_fold, b_fold, avg_mat, H=H, W=W, P=P)
    maxp = maxp.reshape(B, Tp1, PP, C)
    avgp = avgp.reshape(B, Tp1, PP, C)

    # ---- raw time constants tiled PP times (matches torch.cat([tc]*PP, dim=1)) ----
    ptc_t = jnp.tile(past_tc, (1, PP))[..., None].astype(f32)       # [B, TP*PP, 1]
    ftc_t = jnp.tile(future_tc, (1, PP))[..., None].astype(f32)     # [B, TF*PP, 1]

    # ---- fold scales into weights at trace time ----
    w_in = params["fc_in_w"].T                                      # [2C, C]
    wim, wia = w_in[:C], w_in[C:]
    qs = 1.0 / math.sqrt(TF * PP)                                   # 1/sqrt(attn_query.size(1))
    wq_s = params["fc_q_w"].T * qs
    bq_s = (params["fc_q_b"] * qs)[None, :]
    mt = (jnp.asarray(_bilinear_matrix(H, W, P)).T
          * (params["p_attn"] / jnp.float32(TP * PP)))              # [PP, HW]

    # residual uses the RAW last input frame (already NCHW -> no transpose)
    feat_last = feature[:, -1].reshape(B, C, HW).astype(f32)

    pred = ta_attn_pallas(
        maxp, avgp, ptc_t, ftc_t,
        params["tc_w"].T, params["tc_b"][None, :],
        wim, wia, params["fc_in_b"][None, :],
        wq_s, bq_s, params["fc_k_w"].T, params["fc_k_b"][None, :],
        mt, feat_last,
        TP=TP, TF=TF, PP=PP, C=C, HW=HW)
    return pred.reshape(B, TF, C, H, W)                             # NCHW output


# --------------------------------------------------------------------------- main
def init_params(key, c):
    ks = jax.random.split(key, 13)

    def nrm(k, shape, s=0.1):
        return s * jax.random.normal(k, shape, jnp.float32)

    return dict(
        conv_w=nrm(ks[0], (c, c, 1, 1)),
        bn_gamma=1.0 + nrm(ks[1], (c,)),
        bn_beta=nrm(ks[2], (c,)),
        bn_mean=nrm(ks[3], (c,)),
        bn_var=1.0 + 0.1 * jnp.abs(jax.random.normal(ks[4], (c,), jnp.float32)),
        tc_w=nrm(ks[5], (c, 1)),
        tc_b=nrm(ks[6], (c,)),
        fc_in_w=nrm(ks[7], (c, 2 * c)),
        fc_in_b=nrm(ks[8], (c,)),
        fc_q_w=nrm(ks[9], (c, c)),
        fc_q_b=nrm(ks[10], (c,)),
        fc_k_w=nrm(ks[11], (c, c)),
        fc_k_b=nrm(ks[12], (c,)),
        p_attn=jnp.float32(1.0),  # neck_p_init=None default
    )


if __name__ == "__main__":
    B, TP, TF, C, H, W = 2, 3, 2, 8, 16, 16

    key = jax.random.PRNGKey(0)
    k_feat, k_param = jax.random.split(key)
    feature = jax.random.normal(k_feat, (B, TP + 1, C, H, W), jnp.float32)
    past_time_constant = jnp.tile(jnp.arange(-TP, 0, dtype=jnp.float32)[None, :], (B, 1))
    future_time_constant = jnp.tile(jnp.arange(1, TF + 1, dtype=jnp.float32)[None, :], (B, 1))

    params = init_params(k_param, C)

    fwd = jax.jit(ta_block_forward)
    pred = fwd(feature, past_time_constant, future_time_constant, params)
    pred = jax.block_until_ready(pred)

    assert pred.shape == (B, TF, C, H, W), pred.shape
    assert jnp.all(jnp.isfinite(pred))
    print("KERNEL_OK")
</pallas_src>

<mosaic_0001>
module attributes {stable_mosaic.version = 11 : i64} {
  func.func @_conv_pool_kernel(%arg0: i32, %arg1: memref<1x256x8xbf16, #tpu.memory_space<vmem>>, %arg2: memref<8x8xbf16, #tpu.memory_space<vmem>>, %arg3: memref<1x8xf32, #tpu.memory_space<vmem>>, %arg4: memref<16x256xf32, #tpu.memory_space<vmem>>, %arg5: memref<1x16x8xf32, #tpu.memory_space<vmem>>, %arg6: memref<1x16x8xf32, #tpu.memory_space<vmem>>) attributes {dimension_semantics = [#tpu.dimension_semantics<parallel>], iteration_bounds = array<i64: 8>, scalar_prefetch = 0 : i64, scratch_operands = 0 : i64, tpu.core_type = #tpu.core_type<tc>, window_params = [{transform_indices = @transform_0, window_bounds = array<i64: 1, 256, 8>}, {pipeline_mode = #tpu.pipeline_mode<synchronous>, transform_indices = @transform_1, window_bounds = array<i64: 8, 8>}, {pipeline_mode = #tpu.pipeline_mode<synchronous>, transform_indices = @transform_2, window_bounds = array<i64: 1, 8>}, {pipeline_mode = #tpu.pipeline_mode<synchronous>, transform_indices = @transform_3, window_bounds = array<i64: 16, 256>}, {transform_indices = @transform_4, window_bounds = array<i64: 1, 16, 8>}, {transform_indices = @transform_5, window_bounds = array<i64: 1, 16, 8>}]} {
    %c0 = arith.constant 0 : index
    %c0_0 = arith.constant 0 : index
    %c0_1 = arith.constant 0 : index
    %0 = vector.load %arg1[%c0, %c0_0, %c0_1] : memref<1x256x8xbf16, #tpu.memory_space<vmem>>, vector<1x256x8xbf16>
    %1 = vector.shape_cast %0 : vector<1x256x8xbf16> to vector<256x8xbf16>
    %c0_2 = arith.constant 0 : index
    %c0_3 = arith.constant 0 : index
    %2 = vector.load %arg2[%c0_2, %c0_3] : memref<8x8xbf16, #tpu.memory_space<vmem>>, vector<8x8xbf16>
    %cst = arith.constant dense<0.000000e+00> : vector<256x8xf32>
    %3 = tpu.matmul %1, %2, %cst {dimension_numbers = #tpu.dot_dimension_numbers<[1], [0], [0], [1], [0, 0, 1, 1], [], []>} : vector<256x8xbf16>, vector<8x8xbf16>, vector<256x8xf32> -> vector<256x8xf32>
    %c0_4 = arith.constant 0 : index
    %c0_5 = arith.constant 0 : index
    %4 = vector.load %arg3[%c0_4, %c0_5] : memref<1x8xf32, #tpu.memory_space<vmem>>, vector<1x8xf32>
    %5 = vector.broadcast %4 : vector<1x8xf32> to vector<256x8xf32>
    %6 = arith.addf %3, %5 : vector<256x8xf32>
    %7 = arith.negf %6 : vector<256x8xf32>
    %8 = math.exp %7 : vector<256x8xf32>
    %cst_6 = arith.constant 1.000000e+00 : f32
    %9 = vector.broadcast %cst_6 : f32 to vector<256x8xf32>
    %10 = arith.addf %9, %8 : vector<256x8xf32>
    %11 = arith.divf %9, %10 : vector<256x8xf32>
    %12 = arith.mulf %6, %11 : vector<256x8xf32>
    %c0_7 = arith.constant 0 : index
    %c0_8 = arith.constant 0 : index
    %13 = vector.load %arg4[%c0_7, %c0_8] : memref<16x256xf32, #tpu.memory_space<vmem>>, vector<16x256xf32>
    %cst_9 = arith.constant dense<0.000000e+00> : vector<16x8xf32>
    %14 = tpu.matmul %13, %12, %cst_9 {dimension_numbers = #tpu.dot_dimension_numbers<[1], [0], [0], [1], [0, 0, 1, 1], [], []>} : vector<16x256xf32>, vector<256x8xf32>, vector<16x8xf32> -> vector<16x8xf32>
    %c0_10 = arith.constant 0 : index
    %c0_11 = arith.constant 0 : index
    %c0_12 = arith.constant 0 : index
    %15 = vector.load %arg6[%c0_10, %c0_11, %c0_12] : memref<1x16x8xf32, #tpu.memory_space<vmem>>, vector<1x16x8xf32>
    %16 = vector.shape_cast %15 : vector<1x16x8xf32> to vector<16x8xf32>
    %17 = vector.shape_cast %14 : vector<16x8xf32> to vector<1x16x8xf32>
    tpu.vector_store %arg6[%c0_10, %c0_11, %c0_12], %17 {strides = array<i32>} : memref<1x16x8xf32, #tpu.memory_space<vmem>>, vector<1x16x8xf32>,
    %18 = vector.extract_strided_slice %12 {offsets = [0, 0], sizes = [4, 8], strides = [1, 1]} : vector<256x8xf32> to vector<4x8xf32>
    %cst_13 = arith.constant dense<0xFF800000> : vector<8xf32>
    %19 = vector.multi_reduction <maximumf>, %18, %cst_13 [0] : vector<4x8xf32> to vector<8xf32>
    %20 = vector.shape_cast %19 : vector<8xf32> to vector<1x8xf32>
    %21 = vector.extract_strided_slice %12 {offsets = [16, 0], sizes = [4, 8], strides = [1, 1]} : vector<256x8xf32> to vector<4x8xf32>
    %cst_14 = arith.constant dense<0xFF800000> : vector<8xf32>
    %22 = vector.multi_reduction <maximumf>, %21, %cst_14 [0] : vector<4x8xf32> to vector<8xf32>
    %23 = vector.shape_cast %22 : vector<8xf32> to vector<1x8xf32>
    %24 = arith.maximumf %20, %23 : vector<1x8xf32>
    %25 = vector.extract_strided_slice %12 {offsets = [32, 0], sizes = [4, 8], strides = [1, 1]} : vector<256x8xf32> to vector<4x8xf32>
    %cst_15 = arith.constant dense<0xFF800000> : vector<8xf32>
    %26 = vector.multi_reduction <maximumf>, %25, %cst_15 [0] : vector<4x8xf32> to vector<8xf32>
    %27 = vector.shape_cast %26 : vector<8xf32> to vector<1x8xf32>
    %28 = arith.maximumf %24, %27 : vector<1x8xf32>
    %29 = vector.extract_strided_slice %12 {offsets = [48, 0], sizes = [4, 8], strides = [1, 1]} : vector<256x8xf32> to vector<4x8xf32>
    %cst_16 = arith.constant dense<0xFF800000> : vector<8xf32>
    %30 = vector.multi_reduction <maximumf>, %29, %cst_16 [0] : vector<4x8xf32> to vector<8xf32>
    %31 = vector.shape_cast %30 : vector<8xf32> to vector<1x8xf32>
    %32 = arith.maximumf %28, %31 : vector<1x8xf32>
    %33 = vector.extract_strided_slice %12 {offsets = [4, 0], sizes = [4, 8], strides = [1, 1]} : vector<256x8xf32> to vector<4x8xf32>
    %cst_17 = arith.constant dense<0xFF800000> : vector<8xf32>
    %34 = vector.multi_reduction <maximumf>, %33, %cst_17 [0] : vector<4x8xf32> to vector<8xf32>
    %35 = vector.shape_cast %34 : vector<8xf32> to vector<1x8xf32>
    %36 = vector.extract_strided_slice %12 {offsets = [20, 0], sizes = [4, 8], strides = [1, 1]} : vector<256x8xf32> to vector<4x8xf32>
    %cst_18 = arith.constant dense<0xFF800000> : vector<8xf32>
    %37 = vector.multi_reduction <maximumf>, %36, %cst_18 [0] : vector<4x8xf32> to vector<8xf32>
    %38 = vector.shape_cast %37 : vector<8xf32> to vector<1x8xf32>
    %39 = arith.maximumf %35, %38 : vector<1x8xf32>
    %40 = vector.extract_strided_slice %12 {offsets = [36, 0], sizes = [4, 8], strides = [1, 1]} : vector<256x8xf32> to vector<4x8xf32>
    %cst_19 = arith.constant dense<0xFF800000> : vector<8xf32>
    %41 = vector.multi_reduction <maximumf>, %40, %cst_19 [0] : vector<4x8xf32> to vector<8xf32>
    %42 = vector.shape_cast %41 : vector<8xf32> to vector<1x8xf32>
    %43 = arith.maximumf %39, %42 : vector<1x8xf32>
    %44 = vector.extract_strided_slice %12 {offsets = [52, 0], sizes = [4, 8], strides = [1, 1]} : vector<256x8xf32> to vector<4x8xf32>
    %cst_20 = arith.constant dense<0xFF800000> : vector<8xf32>
    %45 = vector.multi_reduction <maximumf>, %44, %cst_20 [0] : vector<4x8xf32> to vector<8xf32>
    %46 = vector.shape_cast %45 : vector<8xf32> to vector<1x8xf32>
    %47 = arith.maximumf %43, %46 : vector<1x8xf32>
    %48 = vector.extract_strided_slice %12 {offsets = [8, 0], sizes = [4, 8], strides = [1, 1]} : vector<256x8xf32> to vector<4x8xf32>
    %cst_21 = arith.constant dense<0xFF800000> : vector<8xf32>
    %49 = vector.multi_reduction <maximumf>, %48, %cst_21 [0] : vector<4x8xf32> to vector<8xf32>
    %50 = vector.shape_cast %49 : vector<8xf32> to vector<1x8xf32>
    %51 = vector.extract_strided_slice %12 {offsets = [24, 0], sizes = [4, 8], strides = [1, 1]} : vector<256x8xf32> to vector<4x8xf32>
    %cst_22 = arith.constant dense<0xFF800000> : vector<8xf32>
    %52 = vector.multi_reduction <maximumf>, %51, %cst_22 [0] : vector<4x8xf32> to vector<8xf32>
    %53 = vector.shape_cast %52 : vector<8xf32> to vector<1x8xf32>
    %54 = arith.maximumf %50, %53 : vector<1x8xf32>
    %55 = vector.extract_strided_slice %12 {offsets = [40, 0], sizes = [4, 8], strides = [1, 1]} : vector<256x8xf32> to vector<4x8xf32>
    %cst_23 = arith.constant dense<0xFF800000> : vector<8xf32>
    %56 = vector.multi_reduction <maximumf>, %55, %cst_23 [0] : vector<4x8xf32> to vector<8xf32>
    %57 = vector.shape_cast %56 : vector<8xf32> to vector<1x8xf32>
    %58 = arith.maximumf %54, %57 : vector<1x8xf32>
    %59 = vector.extract_strided_slice %12 {offsets = [56, 0], sizes = [4, 8], strides = [1, 1]} : vector<256x8xf32> to vector<4x8xf32>
    %cst_24 = arith.constant dense<0xFF800000> : vector<8xf32>
    %60 = vector.multi_reduction <maximumf>, %59, %cst_24 [0] : vector<4x8xf32> to vector<8xf32>
    %61 = vector.shape_cast %60 : vector<8xf32> to vector<1x8xf32>
    %62 = arith.maximumf %58, %61 : vector<1x8xf32>
    %63 = vector.extract_strided_slice %12 {offsets = [12, 0], sizes = [4, 8], strides = [1, 1]} : vector<256x8xf32> to vector<4x8xf32>
    %cst_25 = arith.constant dense<0xFF800000> : vector<8xf32>
    %64 = vector.multi_reduction <maximumf>, %63, %cst_25 [0] : vector<4x8xf32> to vector<8xf32>
    %65 = vector.shape_cast %64 : vector<8xf32> to vector<1x8xf32>
    %66 = vector.extract_strided_slice %12 {offsets = [28, 0], sizes = [4, 8], strides = [1, 1]} : vector<256x8xf32> to vector<4x8xf32>
    %cst_26 = arith.constant dense<0xFF800000> : vector<8xf32>
    %67 = vector.multi_reduction <maximumf>, %66, %cst_26 [0] : vector<4x8xf32> to vector<8xf32>
    %68 = vector.shape_cast %67 : vector<8xf32> to vector<1x8xf32>
    %69 = arith.maximumf %65, %68 : vector<1x8xf32>
    %70 = vector.extract_strided_slice %12 {offsets = [44, 0], sizes = [4, 8], strides = [1, 1]} : vector<256x8xf32> to vector<4x8xf32>
    %cst_27 = arith.constant dense<0xFF800000> : vector<8xf32>
    %71 = vector.multi_reduction <maximumf>, %70, %cst_27 [0] : vector<4x8xf32> to vector<8xf32>
    %72 = vector.shape_cast %71 : vector<8xf32> to vector<1x8xf32>
    %73 = arith.maximumf %69, %72 : vector<1x8xf32>
    %74 = vector.extract_strided_slice %12 {offsets = [60, 0], sizes = [4, 8], strides = [1, 1]} : vector<256x8xf32> to vector<4x8xf32>
    %cst_28 = arith.constant dense<0xFF800000> : vector<8xf32>
    %75 = vector.multi_reduction <maximumf>, %74, %cst_28 [0] : vector<4x8xf32> to vector<8xf32>
    %76 = vector.shape_cast %75 : vector<8xf32> to vector<1x8xf32>
    %77 = arith.maximumf %73, %76 : vector<1x8xf32>
    %78 = vector.extract_strided_slice %12 {offsets = [64, 0], sizes = [4, 8], strides = [1, 1]} : vector<256x8xf32> to vector<4x8xf32>
    %cst_29 = arith.constant dense<0xFF800000> : vector<8xf32>
    %79 = vector.multi_reduction <maximumf>, %78, %cst_29 [0] : vector<4x8xf32> to vector<8xf32>
    %80 = vector.shape_cast %79 : vector<8xf32> to vector<1x8xf32>
    %81 = vector.extract_strided_slice %12 {offsets = [80, 0], sizes = [4, 8], strides = [1, 1]} : vector<256x8xf32> to vector<4x8xf32>
    %cst_30 = arith.constant dense<0xFF800000> : vector<8xf32>
    %82 = vector.multi_reduction <maximumf>, %81, %cst_30 [0] : vector<4x8xf32> to vector<8xf32>
    %83 = vector.shape_cast %82 : vector<8xf32> to vector<1x8xf32>
    %84 = arith.maximumf %80, %83 : vector<1x8xf32>
    %85 = vector.extract_strided_slice %12 {offsets = [96, 0], sizes = [4, 8], strides = [1, 1]} : vector<256x8xf32> to vector<4x8xf32>
    %cst_31 = arith.constant dense<0xFF800000> : vector<8xf32>
    %86 = vector.multi_reduction <maximumf>, %85, %cst_31 [0] : vector<4x8xf32> to vector<8xf32>
    %87 = vector.shape_cast %86 : vector<8xf32> to vector<1x8xf32>
    %88 = arith.maximumf %84, %87 : vector<1x8xf32>
    %89 = vector.extract_strided_slice %12 {offsets = [112, 0], sizes = [4, 8], strides = [1, 1]} : vector<256x8xf32> to vector<4x8xf32>
    %cst_32 = arith.constant dense<0xFF800000> : vector<8xf32>
    %90 = vector.multi_reduction <maximumf>, %89, %cst_32 [0] : vector<4x8xf32> to vector<8xf32>
    %91 = vector.shape_cast %90 : vector<8xf32> to vector<1x8xf32>
    %92 = arith.maximumf %88, %91 : vector<1x8xf32>
    %93 = vector.extract_strided_slice %12 {offsets = [68, 0], sizes = [4, 8], strides = [1, 1]} : vector<256x8xf32> to vector<4x8xf32>
    %cst_33 = arith.constant dense<0xFF800000> : vector<8xf32>
    %94 = vector.multi_reduction <maximumf>, %93, %cst_33 [0] : vector<4x8xf32> to vector<8xf32>
    %95 = vector.shape_cast %94 : vector<8xf32> to vector<1x8xf32>
    %96 = vector.extract_strided_slice %12 {offsets = [84, 0], sizes = [4, 8], strides = [1, 1]} : vector<256x8xf32> to vector<4x8xf32>
    %cst_34 = arith.constant dense<0xFF800000> : vector<8xf32>
    %97 = vector.multi_reduction <maximumf>, %96, %cst_34 [0] : vector<4x8xf32> to vector<8xf32>
    %98 = vector.shape_cast %97 : vector<8xf32> to vector<1x8xf32>
    %99 = arith.maximumf %95, %98 : vector<1x8xf32>
    %100 = vector.extract_strided_slice %12 {offsets = [100, 0], sizes = [4, 8], strides = [1, 1]} : vector<256x8xf32> to vector<4x8xf32>
    %cst_35 = arith.constant dense<0xFF800000> : vector<8xf32>
    %101 = vector.multi_reduction <maximumf>, %100, %cst_35 [0] : vector<4x8xf32> to vector<8xf32>
    %102 = vector.shape_cast %101 : vector<8xf32> to vector<1x8xf32>
    %103 = arith.maximumf %99, %102 : vector<1x8xf32>
    %104 = vector.extract_strided_slice %12 {offsets = [116, 0], sizes = [4, 8], strides = [1, 1]} : vector<256x8xf32> to vector<4x8xf32>
    %cst_36 = arith.constant dense<0xFF800000> : vector<8xf32>
    %105 = vector.multi_reduction <maximumf>, %104, %cst_36 [0] : vector<4x8xf32> to vector<8xf32>
    %106 = vector.shape_cast %105 : vector<8xf32> to vector<1x8xf32>
    %107 = arith.maximumf %103, %106 : vector<1x8xf32>
    %108 = vector.extract_strided_slice %12 {offsets = [72, 0], sizes = [4, 8], strides = [1, 1]} : vector<256x8xf32> to vector<4x8xf32>
    %cst_37 = arith.constant dense<0xFF800000> : vector<8xf32>
    %109 = vector.multi_reduction <maximumf>, %108, %cst_37 [0] : vector<4x8xf32> to vector<8xf32>
    %110 = vector.shape_cast %109 : vector<8xf32> to vector<1x8xf32>
    %111 = vector.extract_strided_slice %12 {offsets = [88, 0], sizes = [4, 8], strides = [1, 1]} : vector<256x8xf32> to vector<4x8xf32>
    %cst_38 = arith.constant dense<0xFF800000> : vector<8xf32>
    %112 = vector.multi_reduction <maximumf>, %111, %cst_38 [0] : vector<4x8xf32> to vector<8xf32>
    %113 = vector.shape_cast %112 : vector<8xf32> to vector<1x8xf32>
    %114 = arith.maximumf %110, %113 : vector<1x8xf32>
    %115 = vector.extract_strided_slice %12 {offsets = [104, 0], sizes = [4, 8], strides = [1, 1]} : vector<256x8xf32> to vector<4x8xf32>
    %cst_39 = arith.constant dense<0xFF800000> : vector<8xf32>
    %116 = vector.multi_reduction <maximumf>, %115, %cst_39 [0] : vector<4x8xf32> to vector<8xf32>
    %117 = vector.shape_cast %116 : vector<8xf32> to vector<1x8xf32>
    %118 = arith.maximumf %114, %117 : vector<1x8xf32>
    %119 = vector.extract_strided_slice %12 {offsets = [120, 0], sizes = [4, 8], strides = [1, 1]} : vector<256x8xf32> to vector<4x8xf32>
    %cst_40 = arith.constant dense<0xFF800000> : vector<8xf32>
    %120 = vector.multi_reduction <maximumf>, %119, %cst_40 [0] : vector<4x8xf32> to vector<8xf32>
    %121 = vector.shape_cast %120 : vector<8xf32> to vector<1x8xf32>
    %122 = arith.maximumf %118, %121 : vector<1x8xf32>
    %123 = vector.extract_strided_slice %12 {offsets = [76, 0], sizes = [4, 8], strides = [1, 1]} : vector<256x8xf32> to vector<4x8xf32>
    %cst_41 = arith.constant dense<0xFF800000> : vector<8xf32>
    %124 = vector.multi_reduction <maximumf>, %123, %cst_41 [0] : vector<4x8xf32> to vector<8xf32>
    %125 = vector.shape_cast %124 : vector<8xf32> to vector<1x8xf32>
    %126 = vector.extract_strided_slice %12 {offsets = [92, 0], sizes = [4, 8], strides = [1, 1]} : vector<256x8xf32> to vector<4x8xf32>
    %cst_42 = arith.constant dense<0xFF800000> : vector<8xf32>
    %127 = vector.multi_reduction <maximumf>, %126, %cst_42 [0] : vector<4x8xf32> to vector<8xf32>
    %128 = vector.shape_cast %127 : vector<8xf32> to vector<1x8xf32>
    %129 = arith.maximumf %125, %128 : vector<1x8xf32>
    %130 = vector.extract_strided_slice %12 {offsets = [108, 0], sizes = [4, 8], strides = [1, 1]} : vector<256x8xf32> to vector<4x8xf32>
    %cst_43 = arith.constant dense<0xFF800000> : vector<8xf32>
    %131 = vector.multi_reduction <maximumf>, %130, %cst_43 [0] : vector<4x8xf32> to vector<8xf32>
    %132 = vector.shape_cast %131 : vector<8xf32> to vector<1x8xf32>
    %133 = arith.maximumf %129, %132 : vector<1x8xf32>
    %134 = vector.extract_strided_slice %12 {offsets = [124, 0], sizes = [4, 8], strides = [1, 1]} : vector<256x8xf32> to vector<4x8xf32>
    %cst_44 = arith.constant dense<0xFF800000> : vector<8xf32>
    %135 = vector.multi_reduction <maximumf>, %134, %cst_44 [0] : vector<4x8xf32> to vector<8xf32>
    %136 = vector.shape_cast %135 : vector<8xf32> to vector<1x8xf32>
    %137 = arith.maximumf %133, %136 : vector<1x8xf32>
    %138 = vector.extract_strided_slice %12 {offsets = [128, 0], sizes = [4, 8], strides = [1, 1]} : vector<256x8xf32> to vector<4x8xf32>
    %cst_45 = arith.constant dense<0xFF800000> : vector<8xf32>
    %139 = vector.multi_reduction <maximumf>, %138, %cst_45 [0] : vector<4x8xf32> to vector<8xf32>
    %140 = vector.shape_cast %139 : vector<8xf32> to vector<1x8xf32>
    %141 = vector.extract_strided_slice %12 {offsets = [144, 0], sizes = [4, 8], strides = [1, 1]} : vector<256x8xf32> to vector<4x8xf32>
    %cst_46 = arith.constant dense<0xFF800000> : vector<8xf32>
    %142 = vector.multi_reduction <maximumf>, %141, %cst_46 [0] : vector<4x8xf32> to vector<8xf32>
    %143 = vector.shape_cast %142 : vector<8xf32> to vector<1x8xf32>
    %144 = arith.maximumf %140, %143 : vector<1x8xf32>
    %145 = vector.extract_strided_slice %12 {offsets = [160, 0], sizes = [4, 8], strides = [1, 1]} : vector<256x8xf32> to vector<4x8xf32>
    %cst_47 = arith.constant dense<0xFF800000> : vector<8xf32>
    %146 = vector.multi_reduction <maximumf>, %145, %cst_47 [0] : vector<4x8xf32> to vector<8xf32>
    %147 = vector.shape_cast %146 : vector<8xf32> to vector<1x8xf32>
    %148 = arith.maximumf %144, %147 : vector<1x8xf32>
    %149 = vector.extract_strided_slice %12 {offsets = [176, 0], sizes = [4, 8], strides = [1, 1]} : vector<256x8xf32> to vector<4x8xf32>
    %cst_48 = arith.constant dense<0xFF800000> : vector<8xf32>
    %150 = vector.multi_reduction <maximumf>, %149, %cst_48 [0] : vector<4x8xf32> to vector<8xf32>
    %151 = vector.shape_cast %150 : vector<8xf32> to vector<1x8xf32>
    %152 = arith.maximumf %148, %151 : vector<1x8xf32>
    %153 = vector.extract_strided_slice %12 {offsets = [132, 0], sizes = [4, 8], strides = [1, 1]} : vector<256x8xf32> to vector<4x8xf32>
    %cst_49 = arith.constant dense<0xFF800000> : vector<8xf32>
    %154 = vector.multi_reduction <maximumf>, %153, %cst_49 [0] : vector<4x8xf32> to vector<8xf32>
    %155 = vector.shape_cast %154 : vector<8xf32> to vector<1x8xf32>
    %156 = vector.extract_strided_slice %12 {offsets = [148, 0], sizes = [4, 8], strides = [1, 1]} : vector<256x8xf32> to vector<4x8xf32>
    %cst_50 = arith.constant dense<0xFF800000> : vector<8xf32>
    %157 = vector.multi_reduction <maximumf>, %156, %cst_50 [0] : vector<4x8xf32> to vector<8xf32>
    %158 = vector.shape_cast %157 : vector<8xf32> to vector<1x8xf32>
    %159 = arith.maximumf %155, %158 : vector<1x8xf32>
    %160 = vector.extract_strided_slice %12 {offsets = [164, 0], sizes = [4, 8], strides = [1, 1]} : vector<256x8xf32> to vector<4x8xf32>
    %cst_51 = arith.constant dense<0xFF800000> : vector<8xf32>
    %161 = vector.multi_reduction <maximumf>, %160, %cst_51 [0] : vector<4x8xf32> to vector<8xf32>
    %162 = vector.shape_cast %161 : vector<8xf32> to vector<1x8xf32>
    %163 = arith.maximumf %159, %162 : vector<1x8xf32>
    %164 = vector.extract_strided_slice %12 {offsets = [180, 0], sizes = [4, 8], strides = [1, 1]} : vector<256x8xf32> to vector<4x8xf32>
    %cst_52 = arith.constant dense<0xFF800000> : vector<8xf32>
    %165 = vector.multi_reduction <maximumf>, %164, %cst_52 [0] : vector<4x8xf32> to vector<8xf32>
    %166 = vector.shape_cast %165 : vector<8xf32> to vector<1x8xf32>
    %167 = arith.maximumf %163, %166 : vector<1x8xf32>
    %168 = vector.extract_strided_slice %12 {offsets = [136, 0], sizes = [4, 8], strides = [1, 1]} : vector<256x8xf32> to vector<4x8xf32>
    %cst_53 = arith.constant dense<0xFF800000> : vector<8xf32>
    %169 = vector.multi_reduction <maximumf>, %168, %cst_53 [0] : vector<4x8xf32> to vector<8xf32>
    %170 = vector.shape_cast %169 : vector<8xf32> to vector<1x8xf32>
    %171 = vector.extract_strided_slice %12 {offsets = [152, 0], sizes = [4, 8], strides = [1, 1]} : vector<256x8xf32> to vector<4x8xf32>
    %cst_54 = arith.constant dense<0xFF800000> : vector<8xf32>
    %172 = vector.multi_reduction <maximumf>, %171, %cst_54 [0] : vector<4x8xf32> to vector<8xf32>
    %173 = vector.shape_cast %172 : vector<8xf32> to vector<1x8xf32>
    %174 = arith.maximumf %170, %173 : vector<1x8xf32>
    %175 = vector.extract_strided_slice %12 {offsets = [168, 0], sizes = [4, 8], strides = [1, 1]} : vector<256x8xf32> to vector<4x8xf32>
    %cst_55 = arith.constant dense<0xFF800000> : vector<8xf32>
    %176 = vector.multi_reduction <maximumf>, %175, %cst_55 [0] : vector<4x8xf32> to vector<8xf32>
    %177 = vector.shape_cast %176 : vector<8xf32> to vector<1x8xf32>
    %178 = arith.maximumf %174, %177 : vector<1x8xf32>
    %179 = vector.extract_strided_slice %12 {offsets = [184, 0], sizes = [4, 8], strides = [1, 1]} : vector<256x8xf32> to vector<4x8xf32>
    %cst_56 = arith.constant dense<0xFF800000> : vector<8xf32>
    %180 = vector.multi_reduction <maximumf>, %179, %cst_56 [0] : vector<4x8xf32> to vector<8xf32>
    %181 = vector.shape_cast %180 : vector<8xf32> to vector<1x8xf32>
    %182 = arith.maximumf %178, %181 : vector<1x8xf32>
    %183 = vector.extract_strided_slice %12 {offsets = [140, 0], sizes = [4, 8], strides = [1, 1]} : vector<256x8xf32> to vector<4x8xf32>
    %cst_57 = arith.constant dense<0xFF800000> : vector<8xf32>
    %184 = vector.multi_reduction <maximumf>, %183, %cst_57 [0] : vector<4x8xf32> to vector<8xf32>
    %185 = vector.shape_cast %184 : vector<8xf32> to vector<1x8xf32>
    %186 = vector.extract_strided_slice %12 {offsets = [156, 0], sizes = [4, 8], strides = [1, 1]} : vector<256x8xf32> to vector<4x8xf32>
    %cst_58 = arith.constant dense<0xFF800000> : vector<8xf32>
    %187 = vector.multi_reduction <maximumf>, %186, %cst_58 [0] : vector<4x8xf32> to vector<8xf32>
    %188 = vector.shape_cast %187 : vector<8xf32> to vector<1x8xf32>
    %189 = arith.maximumf %185, %188 : vector<1x8xf32>
    %190 = vector.extract_strided_slice %12 {offsets = [172, 0], sizes = [4, 8], strides = [1, 1]} : vector<256x8xf32> to vector<4x8xf32>
    %cst_59 = arith.constant dense<0xFF800000> : vector<8xf32>
    %191 = vector.multi_reduction <maximumf>, %190, %cst_59 [0] : vector<4x8xf32> to vector<8xf32>
    %192 = vector.shape_cast %191 : vector<8xf32> to vector<1x8xf32>
    %193 = arith.maximumf %189, %192 : vector<1x8xf32>
    %194 = vector.extract_strided_slice %12 {offsets = [188, 0], sizes = [4, 8], strides = [1, 1]} : vector<256x8xf32> to vector<4x8xf32>
    %cst_60 = arith.constant dense<0xFF800000> : vector<8xf32>
    %195 = vector.multi_reduction <maximumf>, %194, %cst_60 [0] : vector<4x8xf32> to vector<8xf32>
    %196 = vector.shape_cast %195 : vector<8xf32> to vector<1x8xf32>
    %197 = arith.maximumf %193, %196 : vector<1x8xf32>
    %198 = vector.extract_strided_slice %12 {offsets = [192, 0], sizes = [4, 8], strides = [1, 1]} : vector<256x8xf32> to vector<4x8xf32>
    %cst_61 = arith.constant dense<0xFF800000> : vector<8xf32>
    %199 = vector.multi_reduction <maximumf>, %198, %cst_61 [0] : vector<4x8xf32> to vector<8xf32>
    %200 = vector.shape_cast %199 : vector<8xf32> to vector<1x8xf32>
    %201 = vector.extract_strided_slice %12 {offsets = [208, 0], sizes = [4, 8], strides = [1, 1]} : vector<256x8xf32> to vector<4x8xf32>
    %cst_62 = arith.constant dense<0xFF800000> : vector<8xf32>
    %202 = vector.multi_reduction <maximumf>, %201, %cst_62 [0] : vector<4x8xf32> to vector<8xf32>
    %203 = vector.shape_cast %202 : vector<8xf32> to vector<1x8xf32>
    %204 = arith.maximumf %200, %203 : vector<1x8xf32>
    %205 = vector.extract_strided_slice %12 {offsets = [224, 0], sizes = [4, 8], strides = [1, 1]} : vector<256x8xf32> to vector<4x8xf32>
    %cst_63 = arith.constant dense<0xFF800000> : vector<8xf32>
    %206 = vector.multi_reduction <maximumf>, %205, %cst_63 [0] : vector<4x8xf32> to vector<8xf32>
    %207 = vector.shape_cast %206 : vector<8xf32> to vector<1x8xf32>
    %208 = arith.maximumf %204, %207 : vector<1x8xf32>
    %209 = vector.extract_strided_slice %12 {offsets = [240, 0], sizes = [4, 8], strides = [1, 1]} : vector<256x8xf32> to vector<4x8xf32>
    %cst_64 = arith.constant dense<0xFF800000> : vector<8xf32>
    %210 = vector.multi_reduction <maximumf>, %209, %cst_64 [0] : vector<4x8xf32> to vector<8xf32>
    %211 = vector.shape_cast %210 : vector<8xf32> to vector<1x8xf32>
    %212 = arith.maximumf %208, %211 : vector<1x8xf32>
    %213 = vector.extract_strided_slice %12 {offsets = [196, 0], sizes = [4, 8], strides = [1, 1]} : vector<256x8xf32> to vector<4x8xf32>
    %cst_65 = arith.constant dense<0xFF800000> : vector<8xf32>
    %214 = vector.multi_reduction <maximumf>, %213, %cst_65 [0] : vector<4x8xf32> to vector<8xf32>
    %215 = vector.shape_cast %214 : vector<8xf32> to vector<1x8xf32>
    %216 = vector.extract_strided_slice %12 {offsets = [212, 0], sizes = [4, 8], strides = [1, 1]} : vector<256x8xf32> to vector<4x8xf32>
    %cst_66 = arith.constant dense<0xFF800000> : vector<8xf32>
    %217 = vector.multi_reduction <maximumf>, %216, %cst_66 [0] : vector<4x8xf32> to vector<8xf32>
    %218 = vector.shape_cast %217 : vector<8xf32> to vector<1x8xf32>
    %219 = arith.maximumf %215, %218 : vector<1x8xf32>
    %220 = vector.extract_strided_slice %12 {offsets = [228, 0], sizes = [4, 8], strides = [1, 1]} : vector<256x8xf32> to vector<4x8xf32>
    %cst_67 = arith.constant dense<0xFF800000> : vector<8xf32>
    %221 = vector.multi_reduction <maximumf>, %220, %cst_67 [0] : vector<4x8xf32> to vector<8xf32>
    %222 = vector.shape_cast %221 : vector<8xf32> to vector<1x8xf32>
    %223 = arith.maximumf %219, %222 : vector<1x8xf32>
    %224 = vector.extract_strided_slice %12 {offsets = [244, 0], sizes = [4, 8], strides = [1, 1]} : vector<256x8xf32> to vector<4x8xf32>
    %cst_68 = arith.constant dense<0xFF800000> : vector<8xf32>
    %225 = vector.multi_reduction <maximumf>, %224, %cst_68 [0] : vector<4x8xf32> to vector<8xf32>
    %226 = vector.shape_cast %225 : vector<8xf32> to vector<1x8xf32>
    %227 = arith.maximumf %223, %226 : vector<1x8xf32>
    %228 = vector.extract_strided_slice %12 {offsets = [200, 0], sizes = [4, 8], strides = [1, 1]} : vector<256x8xf32> to vector<4x8xf32>
    %cst_69 = arith.constant dense<0xFF800000> : vector<8xf32>
    %229 = vector.multi_reduction <maximumf>, %228, %cst_69 [0] : vector<4x8xf32> to vector<8xf32>
    %230 = vector.shape_cast %229 : vector<8xf32> to vector<1x8xf32>
    %231 = vector.extract_strided_slice %12 {offsets = [216, 0], sizes = [4, 8], strides = [1, 1]} : vector<256x8xf32> to vector<4x8xf32>
    %cst_70 = arith.constant dense<0xFF800000> : vector<8xf32>
    %232 = vector.multi_reduction <maximumf>, %231, %cst_70 [0] : vector<4x8xf32> to vector<8xf32>
    %233 = vector.shape_cast %232 : vector<8xf32> to vector<1x8xf32>
    %234 = arith.maximumf %230, %233 : vector<1x8xf32>
    %235 = vector.extract_strided_slice %12 {offsets = [232, 0], sizes = [4, 8], strides = [1, 1]} : vector<256x8xf32> to vector<4x8xf32>
    %cst_71 = arith.constant dense<0xFF800000> : vector<8xf32>
    %236 = vector.multi_reduction <maximumf>, %235, %cst_71 [0] : vector<4x8xf32> to vector<8xf32>
    %237 = vector.shape_cast %236 : vector<8xf32> to vector<1x8xf32>
    %238 = arith.maximumf %234, %237 : vector<1x8xf32>
    %239 = vector.extract_strided_slice %12 {offsets = [248, 0], sizes = [4, 8], strides = [1, 1]} : vector<256x8xf32> to vector<4x8xf32>
    %cst_72 = arith.constant dense<0xFF800000> : vector<8xf32>
    %240 = vector.multi_reduction <maximumf>, %239, %cst_72 [0] : vector<4x8xf32> to vector<8xf32>
    %241 = vector.shape_cast %240 : vector<8xf32> to vector<1x8xf32>
    %242 = arith.maximumf %238, %241 : vector<1x8xf32>
    %243 = vector.extract_strided_slice %12 {offsets = [204, 0], sizes = [4, 8], strides = [1, 1]} : vector<256x8xf32> to vector<4x8xf32>
    %cst_73 = arith.constant dense<0xFF800000> : vector<8xf32>
    %244 = vector.multi_reduction <maximumf>, %243, %cst_73 [0] : vector<4x8xf32> to vector<8xf32>
    %245 = vector.shape_cast %244 : vector<8xf32> to vector<1x8xf32>
    %246 = vector.extract_strided_slice %12 {offsets = [220, 0], sizes = [4, 8], strides = [1, 1]} : vector<256x8xf32> to vector<4x8xf32>
    %cst_74 = arith.constant dense<0xFF800000> : vector<8xf32>
    %247 = vector.multi_reduction <maximumf>, %246, %cst_74 [0] : vector<4x8xf32> to vector<8xf32>
    %248 = vector.shape_cast %247 : vector<8xf32> to vector<1x8xf32>
    %249 = arith.maximumf %245, %248 : vector<1x8xf32>
    %250 = vector.extract_strided_slice %12 {offsets = [236, 0], sizes = [4, 8], strides = [1, 1]} : vector<256x8xf32> to vector<4x8xf32>
    %cst_75 = arith.constant dense<0xFF800000> : vector<8xf32>
    %251 = vector.multi_reduction <maximumf>, %250, %cst_75 [0] : vector<4x8xf32> to vector<8xf32>
    %252 = vector.shape_cast %251 : vector<8xf32> to vector<1x8xf32>
    %253 = arith.maximumf %249, %252 : vector<1x8xf32>
    %254 = vector.extract_strided_slice %12 {offsets = [252, 0], sizes = [4, 8], strides = [1, 1]} : vector<256x8xf32> to vector<4x8xf32>
    %cst_76 = arith.constant dense<0xFF800000> : vector<8xf32>
    %255 = vector.multi_reduction <maximumf>, %254, %cst_76 [0] : vector<4x8xf32> to vector<8xf32>
    %256 = vector.shape_cast %255 : vector<8xf32> to vector<1x8xf32>
    %257 = arith.maximumf %253, %256 : vector<1x8xf32>
    %258 = tpu.concatenate %32, %47, %62, %77, %92, %107, %122, %137, %152, %167, %182, %197, %212, %227, %242, %257 in 0 : vector<1x8xf32>, vector<1x8xf32>, vector<1x8xf32>, vector<1x8xf32>, vector<1x8xf32>, vector<1x8xf32>, vector<1x8xf32>, vector<1x8xf32>, vector<1x8xf32>, vector<1x8xf32>, vector<1x8xf32>, vector<1x8xf32>, vector<1x8xf32>, vector<1x8xf32>, vector<1x8xf32>, vector<1x8xf32> -> vector<16x8xf32>
    %c0_77 = arith.constant 0 : index
    %c0_78 = arith.constant 0 : index
    %c0_79 = arith.constant 0 : index
    %259 = vector.load %arg5[%c0_77, %c0_78, %c0_79] : memref<1x16x8xf32, #tpu.memory_space<vmem>>, vector<1x16x8xf32>
    %260 = vector.shape_cast %259 : vector<1x16x8xf32> to vector<16x8xf32>
    %261 = vector.shape_cast %258 : vector<16x8xf32> to vector<1x16x8xf32>
    tpu.vector_store %arg5[%c0_77, %c0_78, %c0_79], %261 {strides = array<i32>} : memref<1x16x8xf32, #tpu.memory_space<vmem>>, vector<1x16x8xf32>,
    return
  }
  func.func @transform_0(%arg0: i32) -> (i32, i32, i32) {
    %c0_i32 = arith.constant 0 : i32
    %c0_i32_0 = arith.constant 0 : i32
    %c0_i32_1 = arith.constant 0 : i32
    return %arg0, %c0_i32, %c0_i32_0 : i32, i32, i32
  }
  func.func @transform_1(%arg0: i32) -> (i32, i32) {
    %c0_i32 = arith.constant 0 : i32
    %c0_i32_0 = arith.constant 0 : i32
    %c0_i32_1 = arith.constant 0 : i32
    return %c0_i32, %c0_i32_0 : i32, i32
  }
  func.func @transform_2(%arg0: i32) -> (i32, i32) {
    %c0_i32 = arith.constant 0 : i32
    %c0_i32_0 = arith.constant 0 : i32
    %c0_i32_1 = arith.constant 0 : i32
    return %c0_i32, %c0_i32_0 : i32, i32
  }
  func.func @transform_3(%arg0: i32) -> (i32, i32) {
    %c0_i32 = arith.constant 0 : i32
    %c0_i32_0 = arith.constant 0 : i32
    %c0_i32_1 = arith.constant 0 : i32
    return %c0_i32, %c0_i32_0 : i32, i32
  }
  func.func @transform_4(%arg0: i32) -> (i32, i32, i32) {
    %c0_i32 = arith.constant 0 : i32
    %c0_i32_0 = arith.constant 0 : i32
    %c0_i32_1 = arith.constant 0 : i32
    return %arg0, %c0_i32, %c0_i32_0 : i32, i32, i32
  }
  func.func @transform_5(%arg0: i32) -> (i32, i32, i32) {
    %c0_i32 = arith.constant 0 : i32
    %c0_i32_0 = arith.constant 0 : i32
    %c0_i32_1 = arith.constant 0 : i32
    return %arg0, %c0_i32, %c0_i32_0 : i32, i32, i32
  }
}

module attributes {stable_mosaic.version = 11 : i64} {
  func.func @_ta_attn_kernel(%arg0: i32, %arg1: memref<1x4x16x8xf32, #tpu.memory_space<vmem>>, %arg2: memref<1x4x16x8xf32, #tpu.memory_space<vmem>>, %arg3: memref<1x48x1xf32, #tpu.memory_space<vmem>>, %arg4: memref<1x32x1xf32, #tpu.memory_space<vmem>>, %arg5: memref<1x8xf32, #tpu.memory_space<vmem>>, %arg6: memref<1x8xf32, #tpu.memory_space<vmem>>, %arg7: memref<8x8xf32, #tpu.memory_space<vmem>>, %arg8: memref<8x8xf32, #tpu.memory_space<vmem>>, %arg9: memref<1x8xf32, #tpu.memory_space<vmem>>, %arg10: memref<8x8xf32, #tpu.memory_space<vmem>>, %arg11: memref<1x8xf32, #tpu.memory_space<vmem>>, %arg12: memref<8x8xf32, #tpu.memory_space<vmem>>, %arg13: memref<1x8xf32, #tpu.memory_space<vmem>>, %arg14: memref<16x256xf32, #tpu.memory_space<vmem>>, %arg15: memref<1x8x256xf32, #tpu.memory_space<vmem>>, %arg16: memref<1x2x8x256xf32, #tpu.memory_space<vmem>>) attributes {dimension_semantics = [#tpu.dimension_semantics<parallel>], iteration_bounds = array<i64: 2>, scalar_prefetch = 0 : i64, scratch_operands = 0 : i64, tpu.core_type = #tpu.core_type<tc>, window_params = [{transform_indices = @transform_0, window_bounds = array<i64: 1, 4, 16, 8>}, {transform_indices = @transform_1, window_bounds = array<i64: 1, 4, 16, 8>}, {transform_indices = @transform_2, window_bounds = array<i64: 1, 48, 1>}, {transform_indices = @transform_3, window_bounds = array<i64: 1, 32, 1>}, {pipeline_mode = #tpu.pipeline_mode<synchronous>, transform_indices = @transform_4, window_bounds = array<i64: 1, 8>}, {pipeline_mode = #tpu.pipeline_mode<synchronous>, transform_indices = @transform_5, window_bounds = array<i64: 1, 8>}, {pipeline_mode = #tpu.pipeline_mode<synchronous>, transform_indices = @transform_6, window_bounds = array<i64: 8, 8>}, {pipeline_mode = #tpu.pipeline_mode<synchronous>, transform_indices = @transform_7, window_bounds = array<i64: 8, 8>}, {pipeline_mode = #tpu.pipeline_mode<synchronous>, transform_indices = @transform_8, window_bounds = array<i64: 1, 8>}, {pipeline_mode = #tpu.pipeline_mode<synchronous>, transform_indices = @transform_9, window_bounds = array<i64: 8, 8>}, {pipeline_mode = #tpu.pipeline_mode<synchronous>, transform_indices = @transform_10, window_bounds = array<i64: 1, 8>}, {pipeline_mode = #tpu.pipeline_mode<synchronous>, transform_indices = @transform_11, window_bounds = array<i64: 8, 8>}, {pipeline_mode = #tpu.pipeline_mode<synchronous>, transform_indices = @transform_12, window_bounds = array<i64: 1, 8>}, {pipeline_mode = #tpu.pipeline_mode<synchronous>, transform_indices = @transform_13, window_bounds = array<i64: 16, 256>}, {transform_indices = @transform_14, window_bounds = array<i64: 1, 8, 256>}, {transform_indices = @transform_15, window_bounds = array<i64: 1, 2, 8, 256>}]} {
    %c0 = arith.constant 0 : index
    %c0_0 = arith.constant 0 : index
    %c0_1 = arith.constant 0 : index
    %c0_2 = arith.constant 0 : index
    %0 = vector.load %arg1[%c0, %c0_0, %c0_1, %c0_2] : memref<1x4x16x8xf32, #tpu.memory_space<vmem>>, vector<1x4x16x8xf32>
    %1 = vector.shape_cast %0 : vector<1x4x16x8xf32> to vector<4x16x8xf32>
    %c0_3 = arith.constant 0 : index
    %c0_4 = arith.constant 0 : index
    %c0_5 = arith.constant 0 : index
    %c0_6 = arith.constant 0 : index
    %2 = vector.load %arg2[%c0_3, %c0_4, %c0_5, %c0_6] : memref<1x4x16x8xf32, #tpu.memory_space<vmem>>, vector<1x4x16x8xf32>
    %3 = vector.shape_cast %2 : vector<1x4x16x8xf32> to vector<4x16x8xf32>
    %c0_7 = arith.constant 0 : index
    %c0_8 = arith.constant 0 : index
    %c0_9 = arith.constant 0 : index
    %4 = vector.load %arg3[%c0_7, %c0_8, %c0_9] : memref<1x48x1xf32, #tpu.memory_space<vmem>>, vector<1x48x1xf32>
    %5 = vector.shape_cast %4 : vector<1x48x1xf32> to vector<48x1xf32>
    %c0_10 = arith.constant 0 : index
    %c0_11 = arith.constant 0 : index
    %6 = vector.load %arg5[%c0_10, %c0_11] : memref<1x8xf32, #tpu.memory_space<vmem>>, vector<1x8xf32>
    %7 = vector.broadcast %5 : vector<48x1xf32> to vector<48x8xf32>
    %8 = vector.broadcast %6 : vector<1x8xf32> to vector<48x8xf32>
    %9 = arith.mulf %7, %8 : vector<48x8xf32>
    %c0_12 = arith.constant 0 : index
    %c0_13 = arith.constant 0 : index
    %10 = vector.load %arg6[%c0_12, %c0_13] : memref<1x8xf32, #tpu.memory_space<vmem>>, vector<1x8xf32>
    %11 = vector.broadcast %10 : vector<1x8xf32> to vector<48x8xf32>
    %12 = arith.addf %9, %11 : vector<48x8xf32>
    %13 = math.tanh %12 : vector<48x8xf32>
    %c0_14 = arith.constant 0 : index
    %c0_15 = arith.constant 0 : index
    %c0_16 = arith.constant 0 : index
    %14 = vector.load %arg4[%c0_14, %c0_15, %c0_16] : memref<1x32x1xf32, #tpu.memory_space<vmem>>, vector<1x32x1xf32>
    %15 = vector.shape_cast %14 : vector<1x32x1xf32> to vector<32x1xf32>
    %c0_17 = arith.constant 0 : index
    %c0_18 = arith.constant 0 : index
    %16 = vector.load %arg5[%c0_17, %c0_18] : memref<1x8xf32, #tpu.memory_space<vmem>>, vector<1x8xf32>
    %17 = vector.broadcast %15 : vector<32x1xf32> to vector<32x8xf32>
    %18 = vector.broadcast %16 : vector<1x8xf32> to vector<32x8xf32>
    %19 = arith.mulf %17, %18 : vector<32x8xf32>
    %c0_19 = arith.constant 0 : index
    %c0_20 = arith.constant 0 : index
    %20 = vector.load %arg6[%c0_19, %c0_20] : memref<1x8xf32, #tpu.memory_space<vmem>>, vector<1x8xf32>
    %21 = vector.broadcast %20 : vector<1x8xf32> to vector<32x8xf32>
    %22 = arith.addf %19, %21 : vector<32x8xf32>
    %23 = math.tanh %22 : vector<32x8xf32>
    %24 = vector.extract_strided_slice %1 {offsets = [0, 0, 0], sizes = [3, 16, 8], strides = [1, 1, 1]} : vector<4x16x8xf32> to vector<3x16x8xf32>
    %25 = vector.shape_cast %24 : vector<3x16x8xf32> to vector<48x8xf32>
    %26 = vector.extract_strided_slice %3 {offsets = [0, 0, 0], sizes = [3, 16, 8], strides = [1, 1, 1]} : vector<4x16x8xf32> to vector<3x16x8xf32>
    %27 = vector.shape_cast %26 : vector<3x16x8xf32> to vector<48x8xf32>
    %c0_21 = arith.constant 0 : index
    %c0_22 = arith.constant 0 : index
    %28 = vector.load %arg7[%c0_21, %c0_22] : memref<8x8xf32, #tpu.memory_space<vmem>>, vector<8x8xf32>
    %cst = arith.constant dense<0.000000e+00> : vector<48x8xf32>
    %29 = tpu.matmul %25, %28, %cst {dimension_numbers = #tpu.dot_dimension_numbers<[1], [0], [0], [1], [0, 0, 1, 1], [], []>} : vector<48x8xf32>, vector<8x8xf32>, vector<48x8xf32> -> vector<48x8xf32>
    %c0_23 = arith.constant 0 : index
    %c0_24 = arith.constant 0 : index
    %30 = vector.load %arg8[%c0_23, %c0_24] : memref<8x8xf32, #tpu.memory_space<vmem>>, vector<8x8xf32>
    %cst_25 = arith.constant dense<0.000000e+00> : vector<48x8xf32>
    %31 = tpu.matmul %27, %30, %cst_25 {dimension_numbers = #tpu.dot_dimension_numbers<[1], [0], [0], [1], [0, 0, 1, 1], [], []>} : vector<48x8xf32>, vector<8x8xf32>, vector<48x8xf32> -> vector<48x8xf32>
    %32 = arith.addf %29, %31 : vector<48x8xf32>
    %c0_26 = arith.constant 0 : index
    %c0_27 = arith.constant 0 : index
    %33 = vector.load %arg9[%c0_26, %c0_27] : memref<1x8xf32, #tpu.memory_space<vmem>>, vector<1x8xf32>
    %34 = vector.broadcast %33 : vector<1x8xf32> to vector<48x8xf32>
    %35 = arith.addf %32, %34 : vector<48x8xf32>
    %36 = arith.negf %35 : vector<48x8xf32>
    %37 = math.exp %36 : vector<48x8xf32>
    %cst_28 = arith.constant 1.000000e+00 : f32
    %38 = vector.broadcast %cst_28 : f32 to vector<48x8xf32>
    %39 = arith.addf %38, %37 : vector<48x8xf32>
    %40 = arith.divf %38, %39 : vector<48x8xf32>
    %41 = arith.mulf %35, %40 : vector<48x8xf32>
    %42 = arith.addf %41, %13 : vector<48x8xf32>
    %c0_29 = arith.constant 0 : index
    %c0_30 = arith.constant 0 : index
    %43 = vector.load %arg12[%c0_29, %c0_30] : memref<8x8xf32, #tpu.memory_space<vmem>>, vector<8x8xf32>
    %cst_31 = arith.constant dense<0.000000e+00> : vector<48x8xf32>
    %44 = tpu.matmul %42, %43, %cst_31 {dimension_numbers = #tpu.dot_dimension_numbers<[1], [0], [0], [1], [0, 0, 1, 1], [], []>} : vector<48x8xf32>, vector<8x8xf32>, vector<48x8xf32> -> vector<48x8xf32>
    %c0_32 = arith.constant 0 : index
    %c0_33 = arith.constant 0 : index
    %45 = vector.load %arg13[%c0_32, %c0_33] : memref<1x8xf32, #tpu.memory_space<vmem>>, vector<1x8xf32>
    %46 = vector.broadcast %45 : vector<1x8xf32> to vector<48x8xf32>
    %47 = arith.addf %44, %46 : vector<48x8xf32>
    %48 = vector.extract_strided_slice %3 {offsets = [3, 0, 0], sizes = [1, 16, 8], strides = [1, 1, 1]} : vector<4x16x8xf32> to vector<1x16x8xf32>
    %49 = vector.shape_cast %48 : vector<1x16x8xf32> to vector<16x8xf32>
    %50 = vector.shape_cast %49 : vector<16x8xf32> to vector<1x16x8xf32>
    %51 = vector.extract_strided_slice %3 {offsets = [0, 0, 0], sizes = [3, 16, 8], strides = [1, 1, 1]} : vector<4x16x8xf32> to vector<3x16x8xf32>
    %52 = vector.broadcast %50 : vector<1x16x8xf32> to vector<3x16x8xf32>
    %53 = arith.subf %52, %51 : vector<3x16x8xf32>
    %54 = vector.shape_cast %53 : vector<3x16x8xf32> to vector<48x8xf32>
    %55 = vector.extract_strided_slice %1 {offsets = [3, 0, 0], sizes = [1, 16, 8], strides = [1, 1, 1]} : vector<4x16x8xf32> to vector<1x16x8xf32>
    %56 = vector.shape_cast %55 : vector<1x16x8xf32> to vector<16x8xf32>
    %c0_34 = arith.constant 0 : index
    %c0_35 = arith.constant 0 : index
    %57 = vector.load %arg7[%c0_34, %c0_35] : memref<8x8xf32, #tpu.memory_space<vmem>>, vector<8x8xf32>
    %cst_36 = arith.constant dense<0.000000e+00> : vector<16x8xf32>
    %58 = tpu.matmul %56, %57, %cst_36 {dimension_numbers = #tpu.dot_dimension_numbers<[1], [0], [0], [1], [0, 0, 1, 1], [], []>} : vector<16x8xf32>, vector<8x8xf32>, vector<16x8xf32> -> vector<16x8xf32>
    %59 = vector.extract_strided_slice %3 {offsets = [3, 0, 0], sizes = [1, 16, 8], strides = [1, 1, 1]} : vector<4x16x8xf32> to vector<1x16x8xf32>
    %60 = vector.shape_cast %59 : vector<1x16x8xf32> to vector<16x8xf32>
    %c0_37 = arith.constant 0 : index
    %c0_38 = arith.constant 0 : index
    %61 = vector.load %arg8[%c0_37, %c0_38] : memref<8x8xf32, #tpu.memory_space<vmem>>, vector<8x8xf32>
    %cst_39 = arith.constant dense<0.000000e+00> : vector<16x8xf32>
    %62 = tpu.matmul %60, %61, %cst_39 {dimension_numbers = #tpu.dot_dimension_numbers<[1], [0], [0], [1], [0, 0, 1, 1], [], []>} : vector<16x8xf32>, vector<8x8xf32>, vector<16x8xf32> -> vector<16x8xf32>
    %63 = arith.addf %58, %62 : vector<16x8xf32>
    %c0_40 = arith.constant 0 : index
    %c0_41 = arith.constant 0 : index
    %64 = vector.load %arg9[%c0_40, %c0_41] : memref<1x8xf32, #tpu.memory_space<vmem>>, vector<1x8xf32>
    %65 = vector.broadcast %64 : vector<1x8xf32> to vector<16x8xf32>
    %66 = arith.addf %63, %65 : vector<16x8xf32>
    %67 = arith.negf %66 : vector<16x8xf32>
    %68 = math.exp %67 : vector<16x8xf32>
    %cst_42 = arith.constant 1.000000e+00 : f32
    %69 = vector.broadcast %cst_42 : f32 to vector<16x8xf32>
    %70 = arith.addf %69, %68 : vector<16x8xf32>
    %71 = arith.divf %69, %70 : vector<16x8xf32>
    %72 = arith.mulf %66, %71 : vector<16x8xf32>
    %c0_43 = arith.constant 0 : index
    %c0_44 = arith.constant 0 : index
    %c0_45 = arith.constant 0 : index
    %73 = vector.load %arg15[%c0_43, %c0_44, %c0_45] : memref<1x8x256xf32, #tpu.memory_space<vmem>>, vector<1x8x256xf32>
    %74 = vector.shape_cast %73 : vector<1x8x256xf32> to vector<8x256xf32>
    %75 = vector.extract_strided_slice %23 {offsets = [0, 0], sizes = [16, 8], strides = [1, 1]} : vector<32x8xf32> to vector<16x8xf32>
    %76 = arith.addf %72, %75 : vector<16x8xf32>
    %c0_46 = arith.constant 0 : index
    %c0_47 = arith.constant 0 : index
    %77 = vector.load %arg10[%c0_46, %c0_47] : memref<8x8xf32, #tpu.memory_space<vmem>>, vector<8x8xf32>
    %cst_48 = arith.constant dense<0.000000e+00> : vector<16x8xf32>
    %78 = tpu.matmul %76, %77, %cst_48 {dimension_numbers = #tpu.dot_dimension_numbers<[1], [0], [0], [1], [0, 0, 1, 1], [], []>} : vector<16x8xf32>, vector<8x8xf32>, vector<16x8xf32> -> vector<16x8xf32>
    %c0_49 = arith.constant 0 : index
    %c0_50 = arith.constant 0 : index
    %79 = vector.load %arg11[%c0_49, %c0_50] : memref<1x8xf32, #tpu.memory_space<vmem>>, vector<1x8xf32>
    %80 = vector.broadcast %79 : vector<1x8xf32> to vector<16x8xf32>
    %81 = arith.addf %78, %80 : vector<16x8xf32>
    %cst_51 = arith.constant dense<0.000000e+00> : vector<16x48xf32>
    %82 = tpu.matmul %81, %47, %cst_51 {dimension_numbers = #tpu.dot_dimension_numbers<[1], [1], [0], [0], [0, 0, 1, 0], [], []>} : vector<16x8xf32>, vector<48x8xf32>, vector<16x48xf32> -> vector<16x48xf32>
    %cst_52 = arith.constant dense<0.000000e+00> : vector<16x8xf32>
    %83 = tpu.matmul %82, %54, %cst_52 {dimension_numbers = #tpu.dot_dimension_numbers<[1], [0], [0], [1], [0, 0, 1, 1], [], []>} : vector<16x48xf32>, vector<48x8xf32>, vector<16x8xf32> -> vector<16x8xf32>
    %c0_53 = arith.constant 0 : index
    %c0_54 = arith.constant 0 : index
    %84 = vector.load %arg14[%c0_53, %c0_54] : memref<16x256xf32, #tpu.memory_space<vmem>>, vector<16x256xf32>
    %cst_55 = arith.constant dense<0.000000e+00> : vector<8x256xf32>
    %85 = tpu.matmul %83, %84, %cst_55 {dimension_numbers = #tpu.dot_dimension_numbers<[0], [0], [1], [1], [0, 1, 1, 1], [], []>} : vector<16x8xf32>, vector<16x256xf32>, vector<8x256xf32> -> vector<8x256xf32>
    %86 = arith.addf %74, %85 : vector<8x256xf32>
    %c0_56 = arith.constant 0 : index
    %c0_57 = arith.constant 0 : index
    %c0_58 = arith.constant 0 : index
    %c0_59 = arith.constant 0 : index
    %87 = vector.load %arg16[%c0_56, %c0_57, %c0_58, %c0_59] : memref<1x2x8x256xf32, #tpu.memory_space<vmem>>, vector<1x1x8x256xf32>
    %88 = vector.shape_cast %87 : vector<1x1x8x256xf32> to vector<8x256xf32>
    %89 = vector.shape_cast %86 : vector<8x256xf32> to vector<1x1x8x256xf32>
    tpu.vector_store %arg16[%c0_56, %c0_57, %c0_58, %c0_59], %89 {strides = array<i32>} : memref<1x2x8x256xf32, #tpu.memory_space<vmem>>, vector<1x1x8x256xf32>,
    %90 = vector.extract_strided_slice %23 {offsets = [16, 0], sizes = [16, 8], strides = [1, 1]} : vector<32x8xf32> to vector<16x8xf32>
    %91 = arith.addf %72, %90 : vector<16x8xf32>
    %c0_60 = arith.constant 0 : index
    %c0_61 = arith.constant 0 : index
    %92 = vector.load %arg10[%c0_60, %c0_61] : memref<8x8xf32, #tpu.memory_space<vmem>>, vector<8x8xf32>
    %cst_62 = arith.constant dense<0.000000e+00> : vector<16x8xf32>
    %93 = tpu.matmul %91, %92, %cst_62 {dimension_numbers = #tpu.dot_dimension_numbers<[1], [0], [0], [1], [0, 0, 1, 1], [], []>} : vector<16x8xf32>, vector<8x8xf32>, vector<16x8xf32> -> vector<16x8xf32>
    %c0_63 = arith.constant 0 : index
    %c0_64 = arith.constant 0 : index
    %94 = vector.load %arg11[%c0_63, %c0_64] : memref<1x8xf32, #tpu.memory_space<vmem>>, vector<1x8xf32>
    %95 = vector.broadcast %94 : vector<1x8xf32> to vector<16x8xf32>
    %96 = arith.addf %93, %95 : vector<16x8xf32>
    %cst_65 = arith.constant dense<0.000000e+00> : vector<16x48xf32>
    %97 = tpu.matmul %96, %47, %cst_65 {dimension_numbers = #tpu.dot_dimension_numbers<[1], [1], [0], [0], [0, 0, 1, 0], [], []>} : vector<16x8xf32>, vector<48x8xf32>, vector<16x48xf32> -> vector<16x48xf32>
    %cst_66 = arith.constant dense<0.000000e+00> : vector<16x8xf32>
    %98 = tpu.matmul %97, %54, %cst_66 {dimension_numbers = #tpu.dot_dimension_numbers<[1], [0], [0], [1], [0, 0, 1, 1], [], []>} : vector<16x48xf32>, vector<48x8xf32>, vector<16x8xf32> -> vector<16x8xf32>
    %c0_67 = arith.constant 0 : index
    %c0_68 = arith.constant 0 : index
    %99 = vector.load %arg14[%c0_67, %c0_68] : memref<16x256xf32, #tpu.memory_space<vmem>>, vector<16x256xf32>
    %cst_69 = arith.constant dense<0.000000e+00> : vector<8x256xf32>
    %100 = tpu.matmul %98, %99, %cst_69 {dimension_numbers = #tpu.dot_dimension_numbers<[0], [0], [1], [1], [0, 1, 1, 1], [], []>} : vector<16x8xf32>, vector<16x256xf32>, vector<8x256xf32> -> vector<8x256xf32>
    %101 = arith.addf %74, %100 : vector<8x256xf32>
    %c0_70 = arith.constant 0 : index
    %c1 = arith.constant 1 : index
    %c0_71 = arith.constant 0 : index
    %c0_72 = arith.constant 0 : index
    %102 = vector.load %arg16[%c0_70, %c1, %c0_71, %c0_72] : memref<1x2x8x256xf32, #tpu.memory_space<vmem>>, vector<1x1x8x256xf32>
    %103 = vector.shape_cast %102 : vector<1x1x8x256xf32> to vector<8x256xf32>
    %104 = vector.shape_cast %101 : vector<8x256xf32> to vector<1x1x8x256xf32>
    tpu.vector_store %arg16[%c0_70, %c1, %c0_71, %c0_72], %104 {strides = array<i32>} : memref<1x2x8x256xf32, #tpu.memory_space<vmem>>, vector<1x1x8x256xf32>,
    return
  }
  func.func @transform_0(%arg0: i32) -> (i32, i32, i32, i32) {
    %c0_i32 = arith.constant 0 : i32
    %c0_i32_0 = arith.constant 0 : i32
    %c0_i32_1 = arith.constant 0 : i32
    %c0_i32_2 = arith.constant 0 : i32
    return %arg0, %c0_i32, %c0_i32_0, %c0_i32_1 : i32, i32, i32, i32
  }
  func.func @transform_1(%arg0: i32) -> (i32, i32, i32, i32) {
    %c0_i32 = arith.constant 0 : i32
    %c0_i32_0 = arith.constant 0 : i32
    %c0_i32_1 = arith.constant 0 : i32
    %c0_i32_2 = arith.constant 0 : i32
    return %arg0, %c0_i32, %c0_i32_0, %c0_i32_1 : i32, i32, i32, i32
  }
  func.func @transform_2(%arg0: i32) -> (i32, i32, i32) {
    %c0_i32 = arith.constant 0 : i32
    %c0_i32_0 = arith.constant 0 : i32
    %c0_i32_1 = arith.constant 0 : i32
    return %arg0, %c0_i32, %c0_i32_0 : i32, i32, i32
  }
  func.func @transform_3(%arg0: i32) -> (i32, i32, i32) {
    %c0_i32 = arith.constant 0 : i32
    %c0_i32_0 = arith.constant 0 : i32
    %c0_i32_1 = arith.constant 0 : i32
    return %arg0, %c0_i32, %c0_i32_0 : i32, i32, i32
  }
  func.func @transform_4(%arg0: i32) -> (i32, i32) {
    %c0_i32 = arith.constant 0 : i32
    %c0_i32_0 = arith.constant 0 : i32
    %c0_i32_1 = arith.constant 0 : i32
    return %c0_i32, %c0_i32_0 : i32, i32
  }
  func.func @transform_5(%arg0: i32) -> (i32, i32) {
    %c0_i32 = arith.constant 0 : i32
    %c0_i32_0 = arith.constant 0 : i32
    %c0_i32_1 = arith.constant 0 : i32
    return %c0_i32, %c0_i32_0 : i32, i32
  }
  func.func @transform_6(%arg0: i32) -> (i32, i32) {
    %c0_i32 = arith.constant 0 : i32
    %c0_i32_0 = arith.constant 0 : i32
    %c0_i32_1 = arith.constant 0 : i32
    return %c0_i32, %c0_i32_0 : i32, i32
  }
  func.func @transform_7(%arg0: i32) -> (i32, i32) {
    %c0_i32 = arith.constant 0 : i32
    %c0_i32_0 = arith.constant 0 : i32
    %c0_i32_1 = arith.constant 0 : i32
    return %c0_i32, %c0_i32_0 : i32, i32
  }
  func.func @transform_8(%arg0: i32) -> (i32, i32) {
    %c0_i32 = arith.constant 0 : i32
    %c0_i32_0 = arith.constant 0 : i32
    %c0_i32_1 = arith.constant 0 : i32
    return %c0_i32, %c0_i32_0 : i32, i32
  }
  func.func @transform_9(%arg0: i32) -> (i32, i32) {
    %c0_i32 = arith.constant 0 : i32
    %c0_i32_0 = arith.constant 0 : i32
    %c0_i32_1 = arith.constant 0 : i32
    return %c0_i32, %c0_i32_0 : i32, i32
  }
  func.func @transform_10(%arg0: i32) -> (i32, i32) {
    %c0_i32 = arith.constant 0 : i32
    %c0_i32_0 = arith.constant 0 : i32
    %c0_i32_1 = arith.constant 0 : i32
    return %c0_i32, %c0_i32_0 : i32, i32
  }
  func.func @transform_11(%arg0: i32) -> (i32, i32) {
    %c0_i32 = arith.constant 0 : i32
    %c0_i32_0 = arith.constant 0 : i32
    %c0_i32_1 = arith.constant 0 : i32
    return %c0_i32, %c0_i32_0 : i32, i32
  }
  func.func @transform_12(%arg0: i32) -> (i32, i32) {
    %c0_i32 = arith.constant 0 : i32
    %c0_i32_0 = arith.constant 0 : i32
    %c0_i32_1 = arith.constant 0 : i32
    return %c0_i32, %c0_i32_0 : i32, i32
  }
  func.func @transform_13(%arg0: i32) -> (i32, i32) {
    %c0_i32 = arith.constant 0 : i32
    %c0_i32_0 = arith.constant 0 : i32
    %c0_i32_1 = arith.constant 0 : i32
    return %c0_i32, %c0_i32_0 : i32, i32
  }
  func.func @transform_14(%arg0: i32) -> (i32, i32, i32) {
    %c0_i32 = arith.constant 0 : i32
    %c0_i32_0 = arith.constant 0 : i32
    %c0_i32_1 = arith.constant 0 : i32
    return %arg0, %c0_i32, %c0_i32_0 : i32, i32, i32
  }
  func.func @transform_15(%arg0: i32) -> (i32, i32, i32, i32) {
    %c0_i32 = arith.constant 0 : i32
    %c0_i32_0 = arith.constant 0 : i32
    %c0_i32_1 = arith.constant 0 : i32
    %c0_i32_2 = arith.constant 0 : i32
    return %arg0, %c0_i32, %c0_i32_0, %c0_i32_1 : i32, i32, i32, i32
  }
}

</mosaic_0001>

<llo_original>
// kernel: squeeze.1
$region0: #{squeeze.1}
  %s0 = inlined_call_operand.vmem [shape: f32[2,1,8,16,16], index: 0, kind: input, shape index: {}]
  %s1 = inlined_call_operand.vmem [shape: f32[2,8,256], index: 1, kind: output, shape index: {}]
  %v2 = vld [vmem:[%s0] ss:$8 sm:$0xf]
  %v3 = vld [vmem:[%s0] ss:$8 sm:$0xf0]
  %vm4 = vcmask 1047556
  %v5 = vsel %vm4, %v3, %v2
  %vm6 = vcmask 130048
  %7 = vst.msk [vmem:[%s1] ss:$8 sm:$0x3] %vm6, %v5
  %s8 = scalar_lea.vmem %s1, 4294967281
  %9 = vst.msk [vmem:[%s8] ss:$8 sm:$0xc] %vm6, %v5
  %s10 = scalar_lea.vmem %s1, 4294967266
  %11 = vst.msk [vmem:[%s10] ss:$8 sm:$0x30] %vm6, %v5
  %s12 = scalar_lea.vmem %s1, 4294967251
  %13 = vst.msk [vmem:[%s12] ss:$8 sm:$0xc0] %vm6, %v5
  %s14 = scalar_lea.vmem %s0, 64
  %v15 = vld [vmem:[%s14] ss:$8 sm:$0xf]
  %s16 = scalar_lea.vmem %s0, 64
  %v17 = vld [vmem:[%s16] ss:$8 sm:$0xf0]
  %vm18 = vcmask 1047556
  %v19 = vsel %vm18, %v17, %v15
  %vm20 = vcmask 130048
  %s21 = scalar_lea.vmem %s1, 4
  %22 = vst.msk [vmem:[%s21] ss:$8 sm:$0x3] %vm20, %v19
  %s23 = scalar_lea.vmem %s1, 4294967285
  %24 = vst.msk [vmem:[%s23] ss:$8 sm:$0xc] %vm20, %v19
  %s25 = scalar_lea.vmem %s1, 4294967270
  %26 = vst.msk [vmem:[%s25] ss:$8 sm:$0x30] %vm20, %v19
  %s27 = scalar_lea.vmem %s1, 4294967255
  %28 = vst.msk [vmem:[%s27] ss:$8 sm:$0xc0] %vm20, %v19
  %s29 = scalar_lea.vmem %s0, 128
  %v30 = vld [vmem:[%s29] ss:$8 sm:$0xf]
  %s31 = scalar_lea.vmem %s0, 128
  %v32 = vld [vmem:[%s31] ss:$8 sm:$0xf0]
  %vm33 = vcmask 1047556
  %v34 = vsel %vm33, %v32, %v30
  %vm35 = vcmask 130048
  %s36 = scalar_lea.vmem %s1, 16
  %37 = vst.msk [vmem:[%s36] ss:$8 sm:$0x3] %vm35, %v34
  %s38 = scalar_lea.vmem %s1, 1
  %39 = vst.msk [vmem:[%s38] ss:$8 sm:$0xc] %vm35, %v34
  %s40 = scalar_lea.vmem %s1, 4294967282
  %41 = vst.msk [vmem:[%s40] ss:$8 sm:$0x30] %vm35, %v34
  %s42 = scalar_lea.vmem %s1, 4294967267
  %43 = vst.msk [vmem:[%s42] ss:$8 sm:$0xc0] %vm35, %v34
  %s44 = scalar_lea.vmem %s0, 192
  %v45 = vld [vmem:[%s44] ss:$8 sm:$0xf]
  %s46 = scalar_lea.vmem %s0, 192
  %v47 = vld [vmem:[%s46] ss:$8 sm:$0xf0]
  %vm48 = vcmask 1047556
  %v49 = vsel %vm48, %v47, %v45
  %vm50 = vcmask 130048
  %s51 = scalar_lea.vmem %s1, 20
  %52 = vst.msk [vmem:[%s51] ss:$8 sm:$0x3] %vm50, %v49
  %s53 = scalar_lea.vmem %s1, 5
  %54 = vst.msk [vmem:[%s53] ss:$8 sm:$0xc] %vm50, %v49
  %s55 = scalar_lea.vmem %s1, 4294967286
  %56 = vst.msk [vmem:[%s55] ss:$8 sm:$0x30] %vm50, %v49
  %s57 = scalar_lea.vmem %s1, 4294967271
  %58 = vst.msk [vmem:[%s57] ss:$8 sm:$0xc0] %vm50, %v49
  %s59 = scalar_lea.vmem %s0, 7
  %s60 = smov 3
  %v61 = vld [vmem:[%s59] ss:$16 sm:%s60]
  %s62 = scalar_lea.vmem %s0, 7
  %s63 = smov 12
  %v64 = vld [vmem:[%s62] ss:$16 sm:%s63]
  %vm65 = vcmask 1043458
  %v66 = vsel %vm65, %v64, %v61
  %s67 = scalar_lea.vmem %s0, 7
  %s68 = smov 48
  %v69 = vld [vmem:[%s67] ss:$16 sm:%s68]
  %vm70 = vcmask 1045508
  %v71 = vsel %vm70, %v69, %v66
  %s72 = scalar_lea.vmem %s0, 7
  %s73 = smov 192
  %v74 = vld [vmem:[%s72] ss:$16 sm:%s73]
  %vm75 = vcmask 1047558
  %v76 = vsel %vm75, %v74, %v71
  %77 = vrot.lane.b32.xlu0 %v76, 112
  %v78 = vpop.permute.xlu0 %77
  %vm79 = vcmask 1048448
  %80 = vst.msk [vmem:[%s1] sm:$0xff] %vm79, %v78
  %s81 = scalar_lea.vmem %s0, 15
  %s82 = smov 3
  %v83 = vld [vmem:[%s81] ss:$16 sm:%s82]
  %s84 = scalar_lea.vmem %s0, 15
  %s85 = smov 12
  %v86 = vld [vmem:[%s84] ss:$16 sm:%s85]
  %vm87 = vcmask 1043458
  %v88 = vsel %vm87, %v86, %v83
  %s89 = scalar_lea.vmem %s0, 15
  %s90 = smov 48
  %v91 = vld [vmem:[%s89] ss:$16 sm:%s90]
  %vm92 = vcmask 1045508
  %v93 = vsel %vm92, %v91, %v88
  %s94 = scalar_lea.vmem %s0, 15
  %s95 = smov 192
  %v96 = vld [vmem:[%s94] ss:$16 sm:%s95]
  %vm97 = vcmask 1047558
  %v98 = vsel %vm97, %v96, %v93
  %99 = vrot.lane.b32.xlu0 %v98, 112
  %v100 = vpop.permute.xlu0 %99
  %vm101 = vcmask 1048448
  %s102 = scalar_lea.vmem %s1, 8
  %103 = vst.msk [vmem:[%s102] sm:$0xff] %vm101, %v100
  %s104 = scalar_lea.vmem %s0, 135
  %s105 = smov 3
  %v106 = vld [vmem:[%s104] ss:$16 sm:%s105]
  %s107 = scalar_lea.vmem %s0, 135
  %s108 = smov 12
  %v109 = vld [vmem:[%s107] ss:$16 sm:%s108]
  %vm110 = vcmask 1043458
  %v111 = vsel %vm110, %v109, %v106
  %s112 = scalar_lea.vmem %s0, 135
  %s113 = smov 48
  %v114 = vld [vmem:[%s112] ss:$16 sm:%s113]
  %vm115 = vcmask 1045508
  %v116 = vsel %vm115, %v114, %v111
  %s117 = scalar_lea.vmem %s0, 135
  %s118 = smov 192
  %v119 = vld [vmem:[%s117] ss:$16 sm:%s118]
  %vm120 = vcmask 1047558
  %v121 = vsel %vm120, %v119, %v116
  %122 = vrot.lane.b32.xlu0 %v121, 112
  %v123 = vpop.permute.xlu0 %122
  %vm124 = vcmask 1048448
  %s125 = scalar_lea.vmem %s1, 16
  %126 = vst.msk [vmem:[%s125] sm:$0xff] %vm124, %v123
  %s127 = scalar_lea.vmem %s0, 143
  %s128 = smov 3
  %v129 = vld [vmem:[%s127] ss:$16 sm:%s128]
  %s130 = scalar_lea.vmem %s0, 143
  %s131 = smov 12
  %v132 = vld [vmem:[%s130] ss:$16 sm:%s131]
  %vm133 = vcmask 1043458
  %v134 = vsel %vm133, %v132, %v129
  %s135 = scalar_lea.vmem %s0, 143
  %s136 = smov 48
  %v137 = vld [vmem:[%s135] ss:$16 sm:%s136]
  %vm138 = vcmask 1045508
  %v139 = vsel %vm138, %v137, %v134
  %s140 = scalar_lea.vmem %s0, 143
  %s141 = smov 192
  %v142 = vld [vmem:[%s140] ss:$16 sm:%s141]
  %vm143 = vcmask 1047558
  %v144 = vsel %vm143, %v142, %v139
  %145 = vrot.lane.b32.xlu0 %v144, 112
  %v146 = vpop.permute.xlu0 %145
  %vm147 = vcmask 1048448
  %s148 = scalar_lea.vmem %s1, 24
  %149 = vst.msk [vmem:[%s148] sm:$0xff] %vm147, %v146
  %s150 = scalar_lea.vmem %s0, 6
  %s151 = smov 3
  %v152 = vld [vmem:[%s150] ss:$16 sm:%s151]
  %s153 = scalar_lea.vmem %s0, 6
  %s154 = smov 12
  %v155 = vld [vmem:[%s153] ss:$16 sm:%s154]
  %vm156 = vcmask 1043458
  %v157 = vsel %vm156, %v155, %v152
  %s158 = scalar_lea.vmem %s0, 6
  %s159 = smov 48
  %v160 = vld [vmem:[%s158] ss:$16 sm:%s159]
  %vm161 = vcmask 1045508
  %v162 = vsel %vm161, %v160, %v157
  %s163 = scalar_lea.vmem %s0, 6
  %s164 = smov 192
  %v165 = vld [vmem:[%s163] ss:$16 sm:%s164]
  %vm166 = vcmask 1047558
  %v167 = vsel %vm166, %v165, %v162
  %168 = vrot.lane.b32.xlu0 %v167, 96
  %v169 = vpop.permute.xlu0 %168
  %vm170 = vcmask 917248
  %171 = vst.msk [vmem:[%s1] sm:$0xff] %vm170, %v169
  %s172 = scalar_lea.vmem %s0, 14
  %s173 = smov 3
  %v174 = vld [vmem:[%s172] ss:$16 sm:%s173]
  %s175 = scalar_lea.vmem %s0, 14
  %s176 = smov 12
  %v177 = vld [vmem:[%s175] ss:$16 sm:%s176]
  %vm178 = vcmask 1043458
  %v179 = vsel %vm178, %v177, %v174
  %s180 = scalar_lea.vmem %s0, 14
  %s181 = smov 48
  %v182 = vld [vmem:[%s180] ss:$16 sm:%s181]
  %vm183 = vcmask 1045508
  %v184 = vsel %vm183, %v182, %v179
  %s185 = scalar_lea.vmem %s0, 14
  %s186 = smov 192
  %v187 = vld [vmem:[%s185] ss:$16 sm:%s186]
  %vm188 = vcmask 1047558
  %v189 = vsel %vm188, %v187, %v184
  %190 = vrot.lane.b32.xlu0 %v189, 96
  %v191 = vpop.permute.xlu0 %190
  %vm192 = vcmask 917248
  %s193 = scalar_lea.vmem %s1, 8
  %194 = vst.msk [vmem:[%s193] sm:$0xff] %vm192, %v191
  %s195 = scalar_lea.vmem %s0, 134
  %s196 = smov 3
  %v197 = vld [vmem:[%s195] ss:$16 sm:%s196]
  %s198 = scalar_lea.vmem %s0, 134
  %s199 = smov 12
  %v200 = vld [vmem:[%s198] ss:$16 sm:%s199]
  %vm201 = vcmask 1043458
  %v202 = vsel %vm201, %v200, %v197
  %s203 = scalar_lea.vmem %s0, 134
  %s204 = smov 48
  %v205 = vld [vmem:[%s203] ss:$16 sm:%s204]
  %vm206 = vcmask 1045508
  %v207 = vsel %vm206, %v205, %v202
  %s208 = scalar_lea.vmem %s0, 134
  %s209 = smov 192
  %v210 = vld [vmem:[%s208] ss:$16 sm:%s209]
  %vm211 = vcmask 1047558
  %v212 = vsel %vm211, %v210, %v207
  %213 = vrot.lane.b32.xlu0 %v212, 96
  %v214 = vpop.permute.xlu0 %213
  %vm215 = vcmask 917248
  %s216 = scalar_lea.vmem %s1, 16
  %217 = vst.msk [vmem:[%s216] sm:$0xff] %vm215, %v214
  %s218 = scalar_lea.vmem %s0, 142
  %s219 = smov 3
  %v220 = vld [vmem:[%s218] ss:$16 sm:%s219]
  %s221 = scalar_lea.vmem %s0, 142
  %s222 = smov 12
  %v223 = vld [vmem:[%s221] ss:$16 sm:%s222]
  %vm224 = vcmask 1043458
  %v225 = vsel %vm224, %v223, %v220
  %s226 = scalar_lea.vmem %s0, 142
  %s227 = smov 48
  %v228 = vld [vmem:[%s226] ss:$16 sm:%s227]
  %vm229 = vcmask 1045508
  %v230 = vsel %vm229, %v228, %v225
  %s231 = scalar_lea.vmem %s0, 142
  %s232 = smov 192
  %v233 = vld [vmem:[%s231] ss:$16 sm:%s232]
  %vm234 = vcmask 1047558
  %v235 = vsel %vm234, %v233, %v230
  %236 = vrot.lane.b32.xlu0 %v235, 96
  %v237 = vpop.permute.xlu0 %236
  %vm238 = vcmask 917248
  %s239 = scalar_lea.vmem %s1, 24
  %240 = vst.msk [vmem:[%s239] sm:$0xff] %vm238, %v237
  %s241 = scalar_lea.vmem %s0, 5
  %s242 = smov 3
  %v243 = vld [vmem:[%s241] ss:$16 sm:%s242]
  %s244 = scalar_lea.vmem %s0, 5
  %s245 = smov 12
  %v246 = vld [vmem:[%s244] ss:$16 sm:%s245]
  %vm247 = vcmask 1043458
  %v248 = vsel %vm247, %v246, %v243
  %s249 = scalar_lea.vmem %s0, 5
  %s250 = smov 48
  %v251 = vld [vmem:[%s249] ss:$16 sm:%s250]
  %vm252 = vcmask 1045508
  %v253 = vsel %vm252, %v251, %v248
  %s254 = scalar_lea.vmem %s0, 5
  %s255 = smov 192
  %v256 = vld [vmem:[%s254] ss:$16 sm:%s255]
  %vm257 = vcmask 1047558
  %v258 = vsel %vm257, %v256, %v253
  %259 = vrot.lane.b32.xlu0 %v258, 80
  %v260 = vpop.permute.xlu0 %259
  %vm261 = vcmask 786048
  %262 = vst.msk [vmem:[%s1] sm:$0xff] %vm261, %v260
  %s263 = scalar_lea.vmem %s0, 13
  %s264 = smov 3
  %v265 = vld [vmem:[%s263] ss:$16 sm:%s264]
  %s266 = scalar_lea.vmem %s0, 13
  %s267 = smov 12
  %v268 = vld [vmem:[%s266] ss:$16 sm:%s267]
  %vm269 = vcmask 1043458
  %v270 = vsel %vm269, %v268, %v265
  %s271 = scalar_lea.vmem %s0, 13
  %s272 = smov 48
  %v273 = vld [vmem:[%s271] ss:$16 sm:%s272]
  %vm274 = vcmask 1045508
  %v275 = vsel %vm274, %v273, %v270
  %s276 = scalar_lea.vmem %s0, 13
  %s277 = smov 192
  %v278 = vld [vmem:[%s276] ss:$16 sm:%s277]
  %vm279 = vcmask 1047558
  %v280 = vsel %vm279, %v278, %v275
  %281 = vrot.lane.b32.xlu0 %v280, 80
  %v282 = vpop.permute.xlu0 %281
  %vm283 = vcmask 786048
  %s284 = scalar_lea.vmem %s1, 8
  %285 = vst.msk [vmem:[%s284] sm:$0xff] %vm283, %v282
  %s286 = scalar_lea.vmem %s0, 133
  %s287 = smov 3
  %v288 = vld [vmem:[%s286] ss:$16 sm:%s287]
  %s289 = scalar_lea.vmem %s0, 133
  %s290 = smov 12
  %v291 = vld [vmem:[%s289] ss:$16 sm:%s290]
  %vm292 = vcmask 1043458
  %v293 = vsel %vm292, %v291, %v288
  %s294 = scalar_lea.vmem %s0, 133
  %s295 = smov 48
  %v296 = vld [vmem:[%s294] ss:$16 sm:%s295]
  %vm297 = vcmask 1045508
  %v298 = vsel %vm297, %v296, %v293
  %s299 = scalar_lea.vmem %s0, 133
  %s300 = smov 192
  %v301 = vld [vmem:[%s299] ss:$16 sm:%s300]
  %vm302 = vcmask 1047558
  %v303 = vsel %vm302, %v301, %v298
  %304 = vrot.lane.b32.xlu0 %v303, 80
  %v305 = vpop.permute.xlu0 %304
  %vm306 = vcmask 786048
  %s307 = scalar_lea.vmem %s1, 16
  %308 = vst.msk [vmem:[%s307] sm:$0xff] %vm306, %v305
  %s309 = scalar_lea.vmem %s0, 141
  %s310 = smov 3
  %v311 = vld [vmem:[%s309] ss:$16 sm:%s310]
  %s312 = scalar_lea.vmem %s0, 141
  %s313 = smov 12
  %v314 = vld [vmem:[%s312] ss:$16 sm:%s313]
  %vm315 = vcmask 1043458
  %v316 = vsel %vm315, %v314, %v311
  %s317 = scalar_lea.vmem %s0, 141
  %s318 = smov 48
  %v319 = vld [vmem:[%s317] ss:$16 sm:%s318]
  %vm320 = vcmask 1045508
  %v321 = vsel %vm320, %v319, %v316
  %s322 = scalar_lea.vmem %s0, 141
  %s323 = smov 192
  %v324 = vld [vmem:[%s322] ss:$16 sm:%s323]
  %vm325 = vcmask 1047558
  %v326 = vsel %vm325, %v324, %v321
  %327 = vrot.lane.b32.xlu0 %v326, 80
  %v328 = vpop.permute.xlu0 %327
  %vm329 = vcmask 786048
  %s330 = scalar_lea.vmem %s1, 24
  %331 = vst.msk [vmem:[%s330] sm:$0xff] %vm329, %v328
  %s332 = scalar_lea.vmem %s0, 4
  %s333 = smov 3
  %v334 = vld [vmem:[%s332] ss:$16 sm:%s333]
  %s335 = scalar_lea.vmem %s0, 4
  %s336 = smov 12
  %v337 = vld [vmem:[%s335] ss:$16 sm:%s336]
  %vm338 = vcmask 1043458
  %v339 = vsel %vm338, %v337, %v334
  %s340 = scalar_lea.vmem %s0, 4
  %s341 = smov 48
  %v342 = vld [vmem:[%s340] ss:$16 sm:%s341]
  %vm343 = vcmask 1045508
  %v344 = vsel %vm343, %v342, %v339
  %s345 = scalar_lea.vmem %s0, 4
  %s346 = smov 192
  %v347 = vld [vmem:[%s345] ss:$16 sm:%s346]
  %vm348 = vcmask 1047558
  %v349 = vsel %vm348, %v347, %v344
  %350 = vrot.lane.b32.xlu0 %v349, 64
  %v351 = vpop.permute.xlu0 %350
  %vm352 = vcmask 654848
  %353 = vst.msk [vmem:[%s1] sm:$0xff] %vm352, %v351
  %s354 = scalar_lea.vmem %s0, 12
  %s355 = smov 3
  %v356 = vld [vmem:[%s354] ss:$16 sm:%s355]
  %s357 = scalar_lea.vmem %s0, 12
  %s358 = smov 12
  %v359 = vld [vmem:[%s357] ss:$16 sm:%s358]
  %vm360 = vcmask 1043458
  %v361 = vsel %vm360, %v359, %v356
  %s362 = scalar_lea.vmem %s0, 12
  %s363 = smov 48
  %v364 = vld [vmem:[%s362] ss:$16 sm:%s363]
  %vm365 = vcmask 1045508
  %v366 = vsel %vm365, %v364, %v361
  %s367 = scalar_lea.vmem %s0, 12
  %s368 = smov 192
  %v369 = vld [vmem:[%s367] ss:$16 sm:%s368]
  %vm370 = vcmask 1047558
  %v371 = vsel %vm370, %v369, %v366
  %372 = vrot.lane.b32.xlu0 %v371, 64
  %v373 = vpop.permute.xlu0 %372
  %vm374 = vcmask 654848
  %s375 = scalar_lea.vmem %s1, 8
  %376 = vst.msk [vmem:[%s375] sm:$0xff] %vm374, %v373
  %s377 = scalar_lea.vmem %s0, 132
  %s378 = smov 3
  %v379 = vld [vmem:[%s377] ss:$16 sm:%s378]
  %s380 = scalar_lea.vmem %s0, 132
  %s381 = smov 12
  %v382 = vld [vmem:[%s380] ss:$16 sm:%s381]
  %vm383 = vcmask 1043458
  %v384 = vsel %vm383, %v382, %v379
  %s385 = scalar_lea.vmem %s0, 132
  %s386 = smov 48
  %v387 = vld [vmem:[%s385] ss:$16 sm:%s386]
  %vm388 = vcmask 1045508
  %v389 = vsel %vm388, %v387, %v384
  %s390 = scalar_lea.vmem %s0, 132
  %s391 = smov 192
  %v392 = vld [vmem:[%s390] ss:$16 sm:%s391]
  %vm393 = vcmask 1047558
  %v394 = vsel %vm393, %v392, %v389
  %395 = vrot.lane.b32.xlu0 %v394, 64
  %v396 = vpop.permute.xlu0 %395
  %vm397 = vcmask 654848
  %s398 = scalar_lea.vmem %s1, 16
  %399 = vst.msk [vmem:[%s398] sm:$0xff] %vm397, %v396
  %s400 = scalar_lea.vmem %s0, 140
  %s401 = smov 3
  %v402 = vld [vmem:[%s400] ss:$16 sm:%s401]
  %s403 = scalar_lea.vmem %s0, 140
  %s404 = smov 12
  %v405 = vld [vmem:[%s403] ss:$16 sm:%s404]
  %vm406 = vcmask 1043458
  %v407 = vsel %vm406, %v405, %v402
  %s408 = scalar_lea.vmem %s0, 140
  %s409 = smov 48
  %v410 = vld [vmem:[%s408] ss:$16 sm:%s409]
  %vm411 = vcmask 1045508
  %v412 = vsel %vm411, %v410, %v407
  %s413 = scalar_lea.vmem %s0, 140
  %s414 = smov 192
  %v415 = vld [vmem:[%s413] ss:$16 sm:%s414]
  %vm416 = vcmask 1047558
  %v417 = vsel %vm416, %v415, %v412
  %418 = vrot.lane.b32.xlu0 %v417, 64
  %v419 = vpop.permute.xlu0 %418
  %vm420 = vcmask 654848
  %s421 = scalar_lea.vmem %s1, 24
  %422 = vst.msk [vmem:[%s421] sm:$0xff] %vm420, %v419
  %s423 = scalar_lea.vmem %s0, 3
  %s424 = smov 3
  %v425 = vld [vmem:[%s423] ss:$16 sm:%s424]
  %s426 = scalar_lea.vmem %s0, 3
  %s427 = smov 12
  %v428 = vld [vmem:[%s426] ss:$16 sm:%s427]
  %vm429 = vcmask 1043458
  %v430 = vsel %vm429, %v428, %v425
  %s431 = scalar_lea.vmem %s0, 3
  %s432 = smov 48
  %v433 = vld [vmem:[%s431] ss:$16 sm:%s432]
  %vm434 = vcmask 1045508
  %v435 = vsel %vm434, %v433, %v430
  %s436 = scalar_lea.vmem %s0, 3
  %s437 = smov 192
  %v438 = vld [vmem:[%s436] ss:$16 sm:%s437]
  %vm439 = vcmask 1047558
  %v440 = vsel %vm439, %v438, %v435
  %441 = vrot.lane.b32.xlu0 %v440, 48
  %v442 = vpop.permute.xlu0 %441
  %vm443 = vcmask 523648
  %444 = vst.msk [vmem:[%s1] sm:$0xff] %vm443, %v442
  %s445 = scalar_lea.vmem %s0, 11
  %s446 = smov 3
  %v447 = vld [vmem:[%s445] ss:$16 sm:%s446]
  %s448 = scalar_lea.vmem %s0, 11
  %s449 = smov 12
  %v450 = vld [vmem:[%s448] ss:$16 sm:%s449]
  %vm451 = vcmask 1043458
  %v452 = vsel %vm451, %v450, %v447
  %s453 = scalar_lea.vmem %s0, 11
  %s454 = smov 48
  %v455 = vld [vmem:[%s453] ss:$16 sm:%s454]
  %vm456 = vcmask 1045508
  %v457 = vsel %vm456, %v455, %v452
  %s458 = scalar_lea.vmem %s0, 11
  %s459 = smov 192
  %v460 = vld [vmem:[%s458] ss:$16 sm:%s459]
  %vm461 = vcmask 1047558
  %v462 = vsel %vm461, %v460, %v457
  %463 = vrot.lane.b32.xlu0 %v462, 48
  %v464 = vpop.permute.xlu0 %463
  %vm465 = vcmask 523648
  %s466 = scalar_lea.vmem %s1, 8
  %467 = vst.msk [vmem:[%s466] sm:$0xff] %vm465, %v464
  %s468 = scalar_lea.vmem %s0, 131
  %s469 = smov 3
  %v470 = vld [vmem:[%s468] ss:$16 sm:%s469]
  %s471 = scalar_lea.vmem %s0, 131
  %s472 = smov 12
  %v473 = vld [vmem:[%s471] ss:$16 sm:%s472]
  %vm474 = vcmask 1043458
  %v475 = vsel %vm474, %v473, %v470
  %s476 = scalar_lea.vmem %s0, 131
  %s477 = smov 48
  %v478 = vld [vmem:[%s476] ss:$16 sm:%s477]
  %vm479 = vcmask 1045508
  %v480 = vsel %vm479, %v478, %v475
  %s481 = scalar_lea.vmem %s0, 131
  %s482 = smov 192
  %v483 = vld [vmem:[%s481] ss:$16 sm:%s482]
  %vm484 = vcmask 1047558
  %v485 = vsel %vm484, %v483, %v480
  %486 = vrot.lane.b32.xlu0 %v485, 48
  %v487 = vpop.permute.xlu0 %486
  %vm488 = vcmask 523648
  %s489 = scalar_lea.vmem %s1, 16
  %490 = vst.msk [vmem:[%s489] sm:$0xff] %vm488, %v487
  %s491 = scalar_lea.vmem %s0, 139
  %s492 = smov 3
  %v493 = vld [vmem:[%s491] ss:$16 sm:%s492]
  %s494 = scalar_lea.vmem %s0, 139
  %s495 = smov 12
  %v496 = vld [vmem:[%s494] ss:$16 sm:%s495]
  %vm497 = vcmask 1043458
  %v498 = vsel %vm497, %v496, %v493
  %s499 = scalar_lea.vmem %s0, 139
  %s500 = smov 48
  %v501 = vld [vmem:[%s499] ss:$16 sm:%s500]
  %vm502 = vcmask 1045508
  %v503 = vsel %vm502, %v501, %v498
  %s504 = scalar_lea.vmem %s0, 139
  %s505 = smov 192
  %v506 = vld [vmem:[%s504] ss:$16 sm:%s505]
  %vm507 = vcmask 1047558
  %v508 = vsel %vm507, %v506, %v503
  %509 = vrot.lane.b32.xlu0 %v508, 48
  %v510 = vpop.permute.xlu0 %509
  %vm511 = vcmask 523648
  %s512 = scalar_lea.vmem %s1, 24
  %513 = vst.msk [vmem:[%s512] sm:$0xff] %vm511, %v510
  %s514 = scalar_lea.vmem %s0, 2
  %s515 = smov 3
  %v516 = vld [vmem:[%s514] ss:$16 sm:%s515]
  %s517 = scalar_lea.vmem %s0, 2
  %s518 = smov 12
  %v519 = vld [vmem:[%s517] ss:$16 sm:%s518]
  %vm520 = vcmask 1043458
  %v521 = vsel %vm520, %v519, %v516
  %s522 = scalar_lea.vmem %s0, 2
  %s523 = smov 48
  %v524 = vld [vmem:[%s522] ss:$16 sm:%s523]
  %vm525 = vcmask 1045508
  %v526 = vsel %vm525, %v524, %v521
  %s527 = scalar_lea.vmem %s0, 2
  %s528 = smov 192
  %v529 = vld [vmem:[%s527] ss:$16 sm:%s528]
  %vm530 = vcmask 1047558
  %v531 = vsel %vm530, %v529, %v526
  %532 = vrot.lane.b32.xlu0 %v531, 32
  %v533 = vpop.permute.xlu0 %532
  %vm534 = vcmask 392448
  %535 = vst.msk [vmem:[%s1] sm:$0xff] %vm534, %v533
  %s536 = scalar_lea.vmem %s0, 10
  %s537 = smov 3
  %v538 = vld [vmem:[%s536] ss:$16 sm:%s537]
  %s539 = scalar_lea.vmem %s0, 10
  %s540 = smov 12
  %v541 = vld [vmem:[%s539] ss:$16 sm:%s540]
  %vm542 = vcmask 1043458
  %v543 = vsel %vm542, %v541, %v538
  %s544 = scalar_lea.vmem %s0, 10
  %s545 = smov 48
  %v546 = vld [vmem:[%s544] ss:$16 sm:%s545]
  %vm547 = vcmask 1045508
  %v548 = vsel %vm547, %v546, %v543
  %s549 = scalar_lea.vmem %s0, 10
  %s550 = smov 192
  %v551 = vld [vmem:[%s549] ss:$16 sm:%s550]
  %vm552 = vcmask 1047558
  %v553 = vsel %vm552, %v551, %v548
  %554 = vrot.lane.b32.xlu0 %v553, 32
  %v555 = vpop.permute.xlu0 %554
  %vm556 = vcmask 392448
  %s557 = scalar_lea.vmem %s1, 8
  %558 = vst.msk [vmem:[%s557] sm:$0xff] %vm556, %v555
  %s559 = scalar_lea.vmem %s0, 130
  %s560 = smov 3
  %v561 = vld [vmem:[%s559] ss:$16 sm:%s560]
  %s562 = scalar_lea.vmem %s0, 130
  %s563 = smov 12
  %v564 = vld [vmem:[%s562] ss:$16 sm:%s563]
  %vm565 = vcmask 1043458
  %v566 = vsel %vm565, %v564, %v561
  %s567 = scalar_lea.vmem %s0, 130
  %s568 = smov 48
  %v569 = vld [vmem:[%s567] ss:$16 sm:%s568]
  %vm570 = vcmask 1045508
  %v571 = vsel %vm570, %v569, %v566
  %s572 = scalar_lea.vmem %s0, 130
  %s573 = smov 192
  %v574 = vld [vmem:[%s572] ss:$16 sm:%s573]
  %vm575 = vcmask 1047558
  %v576 = vsel %vm575, %v574, %v571
  %577 = vrot.lane.b32.xlu0 %v576, 32
  %v578 = vpop.permute.xlu0 %577
  %vm579 = vcmask 392448
  %s580 = scalar_lea.vmem %s1, 16
  %581 = vst.msk [vmem:[%s580] sm:$0xff] %vm579, %v578
  %s582 = scalar_lea.vmem %s0, 138
  %s583 = smov 3
  %v584 = vld [vmem:[%s582] ss:$16 sm:%s583]
  %s585 = scalar_lea.vmem %s0, 138
  %s586 = smov 12
  %v587 = vld [vmem:[%s585] ss:$16 sm:%s586]
  %vm588 = vcmask 1043458
  %v589 = vsel %vm588, %v587, %v584
  %s590 = scalar_lea.vmem %s0, 138
  %s591 = smov 48
  %v592 = vld [vmem:[%s590] ss:$16 sm:%s591]
  %vm593 = vcmask 1045508
  %v594 = vsel %vm593, %v592, %v589
  %s595 = scalar_lea.vmem %s0, 138
  %s596 = smov 192
  %v597 = vld [vmem:[%s595] ss:$16 sm:%s596]
  %vm598 = vcmask 1047558
  %v599 = vsel %vm598, %v597, %v594
  %600 = vrot.lane.b32.xlu0 %v599, 32
  %v601 = vpop.permute.xlu0 %600
  %vm602 = vcmask 392448
  %s603 = scalar_lea.vmem %s1, 24
  %604 = vst.msk [vmem:[%s603] sm:$0xff] %vm602, %v601
  %s605 = scalar_lea.vmem %s0, 1
  %s606 = smov 3
  %v607 = vld [vmem:[%s605] ss:$16 sm:%s606]
  %s608 = scalar_lea.vmem %s0, 1
  %s609 = smov 12
  %v610 = vld [vmem:[%s608] ss:$16 sm:%s609]
  %vm611 = vcmask 1043458
  %v612 = vsel %vm611, %v610, %v607
  %s613 = scalar_lea.vmem %s0, 1
  %s614 = smov 48
  %v615 = vld [vmem:[%s613] ss:$16 sm:%s614]
  %vm616 = vcmask 1045508
  %v617 = vsel %vm616, %v615, %v612
  %s618 = scalar_lea.vmem %s0, 1
  %s619 = smov 192
  %v620 = vld [vmem:[%s618] ss:$16 sm:%s619]
  %vm621 = vcmask 1047558
  %v622 = vsel %vm621, %v620, %v617
  %623 = vrot.lane.b32.xlu0 %v622, 16
  %v624 = vpop.permute.xlu0 %623
  %vm625 = vcmask 261248
  %626 = vst.msk [vmem:[%s1] sm:$0xff] %vm625, %v624
  %s627 = scalar_lea.vmem %s0, 9
  %s628 = smov 3
  %v629 = vld [vmem:[%s627] ss:$16 sm:%s628]
  %s630 = scalar_lea.vmem %s0, 9
  %s631 = smov 12
  %v632 = vld [vmem:[%s630] ss:$16 sm:%s631]
  %vm633 = vcmask 1043458
  %v634 = vsel %vm633, %v632, %v629
  %s635 = scalar_lea.vmem %s0, 9
  %s636 = smov 48
  %v637 = vld [vmem:[%s635] ss:$16 sm:%s636]
  %vm638 = vcmask 1045508
  %v639 = vsel %vm638, %v637, %v634
  %s640 = scalar_lea.vmem %s0, 9
  %s641 = smov 192
  %v642 = vld [vmem:[%s640] ss:$16 sm:%s641]
  %vm643 = vcmask 1047558
  %v644 = vsel %vm643, %v642, %v639
  %645 = vrot.lane.b32.xlu0 %v644, 16
  %v646 = vpop.permute.xlu0 %645
  %vm647 = vcmask 261248
  %s648 = scalar_lea.vmem %s1, 8
  %649 = vst.msk [vmem:[%s648] sm:$0xff] %vm647, %v646
  %s650 = scalar_lea.vmem %s0, 129
  %s651 = smov 3
  %v652 = vld [vmem:[%s650] ss:$16 sm:%s651]
  %s653 = scalar_lea.vmem %s0, 129
  %s654 = smov 12
  %v655 = vld [vmem:[%s653] ss:$16 sm:%s654]
  %vm656 = vcmask 1043458
  %v657 = vsel %vm656, %v655, %v652
  %s658 = scalar_lea.vmem %s0, 129
  %s659 = smov 48
  %v660 = vld [vmem:[%s658] ss:$16 sm:%s659]
  %vm661 = vcmask 1045508
  %v662 = vsel %vm661, %v660, %v657
  %s663 = scalar_lea.vmem %s0, 129
  %s664 = smov 192
  %v665 = vld [vmem:[%s663] ss:$16 sm:%s664]
  %vm666 = vcmask 1047558
  %v667 = vsel %vm666, %v665, %v662
  %668 = vrot.lane.b32.xlu0 %v667, 16
  %v669 = vpop.permute.xlu0 %668
  %vm670 = vcmask 261248
  %s671 = scalar_lea.vmem %s1, 16
  %672 = vst.msk [vmem:[%s671] sm:$0xff] %vm670, %v669
  %s673 = scalar_lea.vmem %s0, 137
  %s674 = smov 3
  %v675 = vld [vmem:[%s673] ss:$16 sm:%s674]
  %s676 = scalar_lea.vmem %s0, 137
  %s677 = smov 12
  %v678 = vld [vmem:[%s676] ss:$16 sm:%s677]
  %vm679 = vcmask 1043458
  %v680 = vsel %vm679, %v678, %v675
  %s681 = scalar_lea.vmem %s0, 137
  %s682 = smov 48
  %v683 = vld [vmem:[%s681] ss:$16 sm:%s682]
  %vm684 = vcmask 1045508
  %v685 = vsel %vm684, %v683, %v680
  %s686 = scalar_lea.vmem %s0, 137
  %s687 = smov 192
  %v688 = vld [vmem:[%s686] ss:$16 sm:%s687]
  %vm689 = vcmask 1047558
  %v690 = vsel %vm689, %v688, %v685
  %691 = vrot.lane.b32.xlu0 %v690, 16
  %v692 = vpop.permute.xlu0 %691
  %vm693 = vcmask 261248
  %s694 = scalar_lea.vmem %s1, 24
  %695 = vst.msk [vmem:[%s694] sm:$0xff] %vm693, %v692

// kernel: ta_block_forward.2
$region0: #{ta_block_forward.2}
  #allocation0 [shape = 'u32[]', space=smem, size = 0x4, offset = 0x4, fixed_abs, tag = 'smem constant byte address 0x4 - core index']
  #allocation1 [shape = 'u32[72,128]{1,0:T(1,128)}', space=vmem, size = 0x9000, scoped, tag = 'internal scratch']
  %s0 = inlined_call_operand.vmem [shape: bf16[8,256,8], index: 0, kind: input, shape index: {}]
  %s1 = inlined_call_operand.vmem [shape: bf16[8,8], index: 1, kind: input, shape index: {}]
  %s2 = inlined_call_operand.vmem [shape: f32[1,8], index: 2, kind: input, shape index: {}]
  %s3 = inlined_call_operand.vmem [shape: f32[16,256], index: 3, kind: input, shape index: {}]
  %s4 = inlined_call_operand.vmem [shape: f32[8,16,8], index: 4, kind: output, shape index: {0}]
  %s5 = inlined_call_operand.vmem [shape: f32[8,16,8], index: 5, kind: output, shape index: {1}]
  %6 = xla_tuple %s4, %s5
  %s7 = sld [smem:[#allocation0]]
  $region57: #{ta_block_forward.2} parent=0
    _
  %s9 = ssub.s32 1, %s7
  %s10 = scalar_select 0, %s9, %s7
  loop: start=0, step=1, limit=10
  $region2: #{ta_block_forward.2} parent=0 // loop_pre_header
    _
  $region3: #{ta_block_forward.2} parent=0 // loop_header
    %s12 = sphi 0, %s16
    %p13 = scmp.ge.s32.totalorder %s12, 10
    %s22 = sphi 0, %s24
    %s25 = sphi 0, %s22
    %s26 = sphi 0, %s25
    %s42 = sphi 0, %s26
    %s46 = sphi 0, %s46
    %s48 = sphi 0, %s46
    %s49 = sphi 0, %s48
    %s63 = sphi 0, %s49
    %s67 = sphi 0, %s67
    %s69 = sphi 0, %s67
    %s70 = sphi 0, %s69
    %s84 = sphi 0, %s70
    %s88 = sphi 0, %s88
    %s90 = sphi 0, %s88
    %s91 = sphi 0, %s90
    %s105 = sphi 0, %s91
    %s111 = sphi 0, %s113
    %s114 = sphi 0, %s111
    %s115 = sphi 0, %s114
    %s131 = sphi 0, %s115
    %s137 = sphi 0, %s139
    %s140 = sphi 0, %s137
    %s141 = sphi 0, %s140
    %s157 = sphi 0, %s141
  $region4: #{ta_block_forward.2} parent=0 // loop_header_branch
    %15 = sbr.rel (%p13) target = $region8
  $region5: #{ta_block_forward.2} parent=0 // loop_body
    %s17 = ssub.s32 %s12, 1
    %s18 = ssub.s32 %s12, 2
    %s19 = sadd.s32 %s12, 1
    %s20 = ssub.s32 %s12, %s19
    %p21 = scmp.eq.s32.totalorder %s20, 0
    %s23 = sadd.s32 %s22, 1
    %s24 = scalar_select %p21, %s22, %s23
    %p27 = pneg %p21
    %p28 = scmp.eq.s32.totalorder %s12, 7
    %p29 = por %p27, %p28
    %p30 = scmp.ne.s32.totalorder %s22, %s25
    %p31 = scmp.eq.s32.totalorder %s12, 0
    %p32 = por %p30, %p31
    %p33 = scmp.ne.s32.totalorder %s22, %s25
    %p34 = scmp.eq.s32.totalorder %s17, 7
    %p35 = por %p33, %p34
    %p36 = scmp.ne.s32.totalorder %s25, %s26
    %p37 = scmp.eq.s32.totalorder %s17, 0
    %p38 = por %p36, %p37
    %p39 = scmp.ne.s32.totalorder %s25, %s26
    %p40 = scmp.eq.s32.totalorder %s18, 7
    %p41 = por %p39, %p40
    %p43 = scmp.ne.s32.totalorder %s26, %s42
    %p44 = scmp.eq.s32.totalorder %s18, 0
    %p45 = por %p43, %p44
    %s47 = sadd.s32 %s46, 1
    %p50 = scmp.eq.s32.totalorder %s12, 7
    %p51 = scmp.ne.s32.totalorder %s46, %s48
    %p52 = scmp.eq.s32.totalorder %s12, 0
    %p53 = por %p51, %p52
    %p54 = scmp.ne.s32.totalorder %s46, %s48
    %p55 = scmp.eq.s32.totalorder %s17, 7
    %p56 = por %p54, %p55
    %p57 = scmp.ne.s32.totalorder %s48, %s49
    %p58 = scmp.eq.s32.totalorder %s17, 0
    %p59 = por %p57, %p58
    %p60 = scmp.ne.s32.totalorder %s48, %s49
    %p61 = scmp.eq.s32.totalorder %s18, 7
    %p62 = por %p60, %p61
    %p64 = scmp.ne.s32.totalorder %s49, %s63
    %p65 = scmp.eq.s32.totalorder %s18, 0
    %p66 = por %p64, %p65
    %s68 = sadd.s32 %s67, 1
    %p71 = scmp.eq.s32.totalorder %s12, 7
    %p72 = scmp.ne.s32.totalorder %s67, %s69
    %p73 = scmp.eq.s32.totalorder %s12, 0
    %p74 = por %p72, %p73
    %p75 = scmp.ne.s32.totalorder %s67, %s69
    %p76 = scmp.eq.s32.totalorder %s17, 7
    %p77 = por %p75, %p76
    %p78 = scmp.ne.s32.totalorder %s69, %s70
    %p79 = scmp.eq.s32.totalorder %s17, 0
    %p80 = por %p78, %p79
    %p81 = scmp.ne.s32.totalorder %s69, %s70
    %p82 = scmp.eq.s32.totalorder %s18, 7
    %p83 = por %p81, %p82
    %p85 = scmp.ne.s32.totalorder %s70, %s84
    %p86 = scmp.eq.s32.totalorder %s18, 0
    %p87 = por %p85, %p86
    %s89 = sadd.s32 %s88, 1
    %p92 = scmp.eq.s32.totalorder %s12, 7
    %p93 = scmp.ne.s32.totalorder %s88, %s90
    %p94 = scmp.eq.s32.totalorder %s12, 0
    %p95 = por %p93, %p94
    %p96 = scmp.ne.s32.totalorder %s88, %s90
    %p97 = scmp.eq.s32.totalorder %s17, 7
    %p98 = por %p96, %p97
    %p99 = scmp.ne.s32.totalorder %s90, %s91
    %p100 = scmp.eq.s32.totalorder %s17, 0
    %p101 = por %p99, %p100
    %p102 = scmp.ne.s32.totalorder %s90, %s91
    %p103 = scmp.eq.s32.totalorder %s18, 7
    %p104 = por %p102, %p103
    %p106 = scmp.ne.s32.totalorder %s91, %s105
    %p107 = scmp.eq.s32.totalorder %s18, 0
    %p108 = por %p106, %p107
    %s109 = ssub.s32 %s12, %s19
    %p110 = scmp.eq.s32.totalorder %s109, 0
    %s112 = sadd.s32 %s111, 1
    %s113 = scalar_select %p110, %s111, %s112
    %p116 = pneg %p110
    %p117 = scmp.eq.s32.totalorder %s12, 7
    %p118 = por %p116, %p117
    %p119 = scmp.ne.s32.totalorder %s111, %s114
    %p120 = scmp.eq.s32.totalorder %s12, 0
    %p121 = por %p119, %p120
    %p122 = scmp.ne.s32.totalorder %s111, %s114
    %p123 = scmp.eq.s32.totalorder %s17, 7
    %p124 = por %p122, %p123
    %p125 = scmp.ne.s32.totalorder %s114, %s115
    %p126 = scmp.eq.s32.totalorder %s17, 0
    %p127 = por %p125, %p126
    %p128 = scmp.ne.s32.totalorder %s114, %s115
    %p129 = scmp.eq.s32.totalorder %s18, 7
    %p130 = por %p128, %p129
    %p132 = scmp.ne.s32.totalorder %s115, %s131
    %p133 = scmp.eq.s32.totalorder %s18, 0
    %p134 = por %p132, %p133
    %s135 = ssub.s32 %s12, %s19
    %p136 = scmp.eq.s32.totalorder %s135, 0
    %s138 = sadd.s32 %s137, 1
    %s139 = scalar_select %p136, %s137, %s138
    %p142 = pneg %p136
    %p143 = scmp.eq.s32.totalorder %s12, 7
    %p144 = por %p142, %p143
    %p145 = scmp.ne.s32.totalorder %s137, %s140
    %p146 = scmp.eq.s32.totalorder %s12, 0
    %p147 = por %p145, %p146
    %p148 = scmp.ne.s32.totalorder %s137, %s140
    %p149 = scmp.eq.s32.totalorder %s17, 7
    %p150 = por %p148, %p149
    %p151 = scmp.ne.s32.totalorder %s140, %s141
    %p152 = scmp.eq.s32.totalorder %s17, 0
    %p153 = por %p151, %p152
    %p154 = scmp.ne.s32.totalorder %s140, %s141
    %p155 = scmp.eq.s32.totalorder %s18, 7
    %p156 = por %p154, %p155
    %p158 = scmp.ne.s32.totalorder %s141, %s157
    %p159 = scmp.eq.s32.totalorder %s18, 0
    %p160 = por %p158, %p159
    %p161 = scmp.le.s32.totalorder 1, %s12
    %p162 = scmp.lt.s32.totalorder %s12, 9
    %p163 = pnand %p161, %p162
    %p164 = pneg %p163
    // Predicated region
    $region9: #{ta_block_forward.2} parent=5 // pred_check
      _
    $region10: #{ta_block_forward.2} parent=5 // pred_check_branch
      %166 = sbr.rel (%p163) target = $region12
    $region11: #{ta_block_forward.2} parent=5 // pred_region
      %s167 = ssub.s32 %s12, 1
      // Predicated region
      $region13: #{ta_block_forward.2} parent=11 // pred_check
        %p168 = pneg %p59
      $region14: #{ta_block_forward.2} parent=11 // pred_check_branch
        %170 = sbr.rel (%p168) target = $region16
      $region15: #{ta_block_forward.2} parent=11 // pred_region
        _
      $region16: #{ta_block_forward.2} parent=11 // pred_fallthru
        _
      // Predicated region
      $region17: #{ta_block_forward.2} parent=11 // pred_check
        %p171 = pneg %p80
      $region18: #{ta_block_forward.2} parent=11 // pred_check_branch
        %173 = sbr.rel (%p171) target = $region20
      $region19: #{ta_block_forward.2} parent=11 // pred_region
        _
      $region20: #{ta_block_forward.2} parent=11 // pred_fallthru
        _
      // Predicated region
      $region21: #{ta_block_forward.2} parent=11 // pred_check
        %p174 = pneg %p101
      $region22: #{ta_block_forward.2} parent=11 // pred_check_branch
        %176 = sbr.rel (%p174) target = $region24
      $region23: #{ta_block_forward.2} parent=11 // pred_region
        _
      $region24: #{ta_block_forward.2} parent=11 // pred_fallthru
        _
    $region12: #{ta_block_forward.2} parent=5 // pred_fallthru
      _
    %p177 = scmp.lt.s32.totalorder %s12, 8
    // Predicated region
    $region25: #{ta_block_forward.2} parent=5 // pred_check
      %p178 = pneg %p177
    $region26: #{ta_block_forward.2} parent=5 // pred_check_branch
      %180 = sbr.rel (%p178) target = $region28
    $region27: #{ta_block_forward.2} parent=5 // pred_region
      // Predicated region
      $region29: #{ta_block_forward.2} parent=27 // pred_check
        %p181 = pneg %p32
      $region30: #{ta_block_forward.2} parent=27 // pred_check_branch
        %183 = sbr.rel (%p181) target = $region32
      $region31: #{ta_block_forward.2} parent=27 // pred_region
        %p184 = scmp.lt.s32.totalorder %s12, 7
        %s185 = scalar_select %p184, %s12, 7
        %s186 = smul.addr %s185, 32
        %s187 = smul.addr %s186, 4
        %s188 = scalar_lea.vmem %s0, %s187
      $region32: #{ta_block_forward.2} parent=27 // pred_fallthru
        _
    $region28: #{ta_block_forward.2} parent=5 // pred_fallthru
      _
    %p189 = scmp.le.s32.totalorder 1, %s12
    %p190 = scmp.lt.s32.totalorder %s12, 9
    %p191 = pnand %p189, %p190
    %p192 = pneg %p191
    // Predicated region
    $region33: #{ta_block_forward.2} parent=5 // pred_check
      _
    $region34: #{ta_block_forward.2} parent=5 // pred_check_branch
      %194 = sbr.rel (%p191) target = $region36
    $region35: #{ta_block_forward.2} parent=5 // pred_region
      %s195 = ssub.s32 %s12, 1
      %p196 = scmp.lt.s32.totalorder %s17, 7
      %s197 = scalar_select %p196, %s17, 7
      %s198 = smul.addr %s197, 32
      %s199 = smul.addr %s198, 4
      %s200 = scalar_lea.vmem %s0, %s199
      %p201 = pneg %p38
      %p202 = pneg %p35
      %p203 = pneg %p59
      %p204 = pneg %p56
      %p205 = pneg %p80
      %p206 = pneg %p77
      %p207 = pneg %p101
      %p208 = pneg %p98
      %p209 = pneg %p127
      %p210 = pneg %p124
      %p211 = scmp.lt.s32.totalorder %s17, 7
      %s212 = scalar_select %p211, %s17, 7
      %s213 = smul.addr %s212, 2
      %s214 = smul.addr %s213, 8
      %s215 = scalar_lea.vmem %s4, %s214
      %p216 = pneg %p153
      %p217 = pneg %p150
      %p218 = scmp.lt.s32.totalorder %s17, 7
      %s219 = scalar_select %p218, %s17, 7
      %s220 = smul.addr %s219, 2
      %s221 = smul.addr %s220, 8
      %s222 = scalar_lea.vmem %s5, %s221
      %p223 = scmp.lt.s32.totalorder %s17, 7
      %s224 = scalar_select %p223, %s17, 7
      %s225 = smul.addr %s224, 32
      %s226 = smul.addr %s225, 4
      %s227 = scalar_lea.vmem %s0, %s226
      %p228 = scmp.lt.s32.totalorder %s17, 7
      %s229 = scalar_select %p228, %s17, 7
      %s230 = smul.addr %s229, 2
      %s231 = smul.addr %s230, 8
      %s232 = scalar_lea.vmem %s4, %s231
      %p233 = scmp.lt.s32.totalorder %s17, 7
      %s234 = scalar_select %p233, %s17, 7
      %s235 = smul.addr %s234, 2
      %s236 = smul.addr %s235, 8
      %s237 = scalar_lea.vmem %s5, %s236
      %v239 = vld [vmem:[%s227] sm:$0xf]
      %v240 = vld [vmem:[%s227 + $0x4] sm:$0xf]
      %v241 = vld [vmem:[%s227 + $0x8] sm:$0xf]
      %v242 = vld [vmem:[%s227 + $0xc] sm:$0xf]
      %v243 = vld [vmem:[%s227 + $0x10] sm:$0xf]
      %v244 = vld [vmem:[%s227 + $0x14] sm:$0xf]
      %v245 = vld [vmem:[%s227 + $0x18] sm:$0xf]
      %v246 = vld [vmem:[%s227 + $0x1c] sm:$0xf]
      %v247 = vld [vmem:[%s227 + $0x20] sm:$0xf]
      %v248 = vld [vmem:[%s227 + $0x24] sm:$0xf]
      %v249 = vld [vmem:[%s227 + $0x28] sm:$0xf]
      %v250 = vld [vmem:[%s227 + $0x2c] sm:$0xf]
      %v251 = vld [vmem:[%s227 + $0x30] sm:$0xf]
      %v252 = vld [vmem:[%s227 + $0x34] sm:$0xf]
      %v253 = vld [vmem:[%s227 + $0x38] sm:$0xf]
      %v254 = vld [vmem:[%s227 + $0x3c] sm:$0xf]
      %v255 = vld [vmem:[%s227 + $0x40] sm:$0xf]
      %v256 = vld [vmem:[%s227 + $0x44] sm:$0xf]
      %v257 = vld [vmem:[%s227 + $0x48] sm:$0xf]
      %v258 = vld [vmem:[%s227 + $0x4c] sm:$0xf]
      %v259 = vld [vmem:[%s227 + $0x50] sm:$0xf]
      %v260 = vld [vmem:[%s227 + $0x54] sm:$0xf]
      %v261 = vld [vmem:[%s227 + $0x58] sm:$0xf]
      %v262 = vld [vmem:[%s227 + $0x5c] sm:$0xf]
      %v263 = vld [vmem:[%s227 + $0x60] sm:$0xf]
      %v264 = vld [vmem:[%s227 + $0x64] sm:$0xf]
      %v265 = vld [vmem:[%s227 + $0x68] sm:$0xf]
      %v266 = vld [vmem:[%s227 + $0x6c] sm:$0xf]
      %v267 = vld [vmem:[%s227 + $0x70] sm:$0xf]
      %v268 = vld [vmem:[%s227 + $0x74] sm:$0xf]
      %v269 = vld [vmem:[%s227 + $0x78] sm:$0xf]
      %v270 = vld [vmem:[%s227 + $0x7c] sm:$0xf]
      %v271 = vld [vmem:[%s1] sm:$0xf]
      %v272 = vld [vmem:[%s2] sm:$0x1]
      %v274 = vperm.slane %v272, 0
      %v308 = vunpack.c.l.b16 %v239
      %v309 = vunpack.c.l.b16 %v240
      %v310 = vunpack.c.l.b16 %v241
      %v311 = vunpack.c.l.b16 %v242
      %v312 = vunpack.c.l.b16 %v243
      %v313 = vunpack.c.l.b16 %v244
      %v314 = vunpack.c.l.b16 %v245
      %v315 = vunpack.c.l.b16 %v246
      %v316 = vunpack.c.l.b16 %v247
      %v317 = vunpack.c.l.b16 %v248
      %v318 = vunpack.c.l.b16 %v249
      %v319 = vunpack.c.l.b16 %v250
      %v320 = vunpack.c.l.b16 %v251
      %v321 = vunpack.c.l.b16 %v252
      %v322 = vunpack.c.l.b16 %v253
      %v323 = vunpack.c.l.b16 %v254
      %v324 = vunpack.c.l.b16 %v255
      %v325 = vunpack.c.l.b16 %v256
      %v326 = vunpack.c.l.b16 %v257
      %v327 = vunpack.c.l.b16 %v258
      %v328 = vunpack.c.l.b16 %v259
      %v329 = vunpack.c.l.b16 %v260
      %v330 = vunpack.c.l.b16 %v261
      %v331 = vunpack.c.l.b16 %v262
      %v332 = vunpack.c.l.b16 %v263
      %v333 = vunpack.c.l.b16 %v264
      %v334 = vunpack.c.l.b16 %v265
      %v335 = vunpack.c.l.b16 %v266
      %v336 = vunpack.c.l.b16 %v267
      %v337 = vunpack.c.l.b16 %v268
      %v338 = vunpack.c.l.b16 %v269
      %v339 = vunpack.c.l.b16 %v270
      %v340 = vpack.c.b16 %v309, %v308
      %v341 = vpack.c.b16 %v311, %v310
      %v342 = vpack.c.b16 %v313, %v312
      %v343 = vpack.c.b16 %v315, %v314
      %v344 = vpack.c.b16 %v317, %v316
      %v345 = vpack.c.b16 %v319, %v318
      %v346 = vpack.c.b16 %v321, %v320
      %v347 = vpack.c.b16 %v323, %v322
      %v348 = vpack.c.b16 %v325, %v324
      %v349 = vpack.c.b16 %v327, %v326
      %v350 = vpack.c.b16 %v329, %v328
      %v351 = vpack.c.b16 %v331, %v330
      %v352 = vpack.c.b16 %v333, %v332
      %v353 = vpack.c.b16 %v335, %v334
      %v354 = vpack.c.b16 %v337, %v336
      %v355 = vpack.c.b16 %v339, %v338
      %vm356 = vcmask 64512
      %v358 = vsel %vm356, %v340, 0
      %v361 = vsel %vm356, %v341, 0
      %v364 = vsel %vm356, %v342, 0
      %v367 = vsel %vm356, %v343, 0
      %v370 = vsel %vm356, %v344, 0
      %v373 = vsel %vm356, %v345, 0
      %v376 = vsel %vm356, %v346, 0
      %v379 = vsel %vm356, %v347, 0
      %v382 = vsel %vm356, %v348, 0
      %v385 = vsel %vm356, %v349, 0
      %v388 = vsel %vm356, %v350, 0
      %v391 = vsel %vm356, %v351, 0
      %v394 = vsel %vm356, %v352, 0
      %v397 = vsel %vm356, %v353, 0
      %v400 = vsel %vm356, %v354, 0
      %v403 = vsel %vm356, %v355, 0
      %vm405 = vcmask 1043456
      %v407 = vsel %vm405, %v271, 0
      %409 = vmatpush.bf16.msra.mxu0 0
      %410 = vmatpush.bf16.msra.mxu0 0
      %411 = vmatpush.bf16.msra.mxu0 0
      %412 = vmatpush.bf16.msra.mxu0 0
      %413 = vmatpush.bf16.msra.mxu0 0
      %414 = vmatpush.bf16.msra.mxu0 0
      %415 = vmatpush.bf16.msra.mxu0 0
      %416 = vmatpush.bf16.msra.mxu0 %v407
      %417 = vmatmul.bf16.gmra.mxu0 %v358
      %v418 = vpop.f32.mrf.mxu0
      %v419 = vadd.f32 %v274, %v418
      %v420 = vpop.f32.mrf.mxu0
      %v421 = vadd.f32 %v274, %v420
      %422 = vmatmul.bf16.gmra.mxu0 %v361
      %v423 = vpop.f32.mrf.mxu0
      %v424 = vadd.f32 %v274, %v423
      %v425 = vpop.f32.mrf.mxu0
      %v426 = vadd.f32 %v274, %v425
      %427 = vmatmul.bf16.gmra.mxu0 %v364
      %v428 = vpop.f32.mrf.mxu0
      %v429 = vadd.f32 %v274, %v428
      %v430 = vpop.f32.mrf.mxu0
      %v431 = vadd.f32 %v274, %v430
      %432 = vmatmul.bf16.gmra.mxu0 %v367
      %v433 = vpop.f32.mrf.mxu0
      %v434 = vadd.f32 %v274, %v433
      %v435 = vpop.f32.mrf.mxu0
      %v436 = vadd.f32 %v274, %v435
      %437 = vmatmul.bf16.gmra.mxu0 %v370
      %v438 = vpop.f32.mrf.mxu0
      %v439 = vadd.f32 %v274, %v438
      %v440 = vpop.f32.mrf.mxu0
      %v441 = vadd.f32 %v274, %v440
      %442 = vmatmul.bf16.gmra.mxu0 %v373
      %v443 = vpop.f32.mrf.mxu0
      %v444 = vadd.f32 %v274, %v443
      %v445 = vpop.f32.mrf.mxu0
      %v446 = vadd.f32 %v274, %v445
      %447 = vmatmul.bf16.gmra.mxu0 %v376
      %v448 = vpop.f32.mrf.mxu0
      %v449 = vadd.f32 %v274, %v448
      %v450 = vpop.f32.mrf.mxu0
      %v451 = vadd.f32 %v274, %v450
      %452 = vmatmul.bf16.gmra.mxu0 %v379
      %v453 = vpop.f32.mrf.mxu0
      %v454 = vadd.f32 %v274, %v453
      %v455 = vpop.f32.mrf.mxu0
      %v456 = vadd.f32 %v274, %v455
      %457 = vmatmul.bf16.gmra.mxu0 %v382
      %v458 = vpop.f32.mrf.mxu0
      %v459 = vadd.f32 %v274, %v458
      %v460 = vpop.f32.mrf.mxu0
      %v461 = vadd.f32 %v274, %v460
      %462 = vmatmul.bf16.gmra.mxu0 %v385
      %v463 = vpop.f32.mrf.mxu0
      %v464 = vadd.f32 %v274, %v463
      %v465 = vpop.f32.mrf.mxu0
      %v466 = vadd.f32 %v274, %v465
      %467 = vmatmul.bf16.gmra.mxu0 %v388
      %v468 = vpop.f32.mrf.mxu0
      %v469 = vadd.f32 %v274, %v468
      %v470 = vpop.f32.mrf.mxu0
      %v471 = vadd.f32 %v274, %v470
      %472 = vmatmul.bf16.gmra.mxu0 %v391
      %v473 = vpop.f32.mrf.mxu0
      %v474 = vadd.f32 %v274, %v473
      %v475 = vpop.f32.mrf.mxu0
      %v476 = vadd.f32 %v274, %v475
      %477 = vmatmul.bf16.gmra.mxu0 %v394
      %v478 = vpop.f32.mrf.mxu0
      %v479 = vadd.f32 %v274, %v478
      %v480 = vpop.f32.mrf.mxu0
      %v481 = vadd.f32 %v274, %v480
      %482 = vmatmul.bf16.gmra.mxu0 %v397
      %v483 = vpop.f32.mrf.mxu0
      %v484 = vadd.f32 %v274, %v483
      %v485 = vpop.f32.mrf.mxu0
      %v486 = vadd.f32 %v274, %v485
      %487 = vmatmul.bf16.gmra.mxu0 %v400
      %v488 = vpop.f32.mrf.mxu0
      %v489 = vadd.f32 %v274, %v488
      %v490 = vpop.f32.mrf.mxu0
      %v491 = vadd.f32 %v274, %v490
      %492 = vmatmul.bf16.gmra.mxu0 %v403
      %v493 = vpop.f32.mrf.mxu0
      %v494 = vadd.f32 %v274, %v493
      %v495 = vpop.f32.mrf.mxu0
      %v496 = vadd.f32 %v274, %v495
      %497 = vdwg.mxu0
      %v498 = vxor.u32 %v419, 2147483648
      %v499 = vxor.u32 %v421, 2147483648
      %v500 = vxor.u32 %v424, 2147483648
      %v501 = vxor.u32 %v426, 2147483648
      %v502 = vxor.u32 %v429, 2147483648
      %v503 = vxor.u32 %v431, 2147483648
      %v504 = vxor.u32 %v434, 2147483648
      %v505 = vxor.u32 %v436, 2147483648
      %v506 = vxor.u32 %v439, 2147483648
      %v507 = vxor.u32 %v441, 2147483648
      %v508 = vxor.u32 %v444, 2147483648
      %v509 = vxor.u32 %v446, 2147483648
      %v510 = vxor.u32 %v449, 2147483648
      %v511 = vxor.u32 %v451, 2147483648
      %v512 = vxor.u32 %v454, 2147483648
      %v513 = vxor.u32 %v456, 2147483648
      %v514 = vxor.u32 %v459, 2147483648
      %v515 = vxor.u32 %v461, 2147483648
      %v516 = vxor.u32 %v464, 2147483648
      %v517 = vxor.u32 %v466, 2147483648
      %v518 = vxor.u32 %v469, 2147483648
      %v519 = vxor.u32 %v471, 2147483648
      %v520 = vxor.u32 %v474, 2147483648
      %v521 = vxor.u32 %v476, 2147483648
      %v522 = vxor.u32 %v479, 2147483648
      %v523 = vxor.u32 %v481, 2147483648
      %v524 = vxor.u32 %v484, 2147483648
      %v525 = vxor.u32 %v486, 2147483648
      %v526 = vxor.u32 %v489, 2147483648
      %v527 = vxor.u32 %v491, 2147483648
      %v528 = vxor.u32 %v494, 2147483648
      %v529 = vxor.u32 %v496, 2147483648
      %v530 = vmul.f32 %v498, 1.442695
      %v531 = vpow.pop %v530
      %v532 = vmul.f32 %v499, 1.442695
      %v533 = vpow.pop %v532
      %v534 = vmul.f32 %v500, 1.442695
      %v535 = vpow.pop %v534
      %v536 = vmul.f32 %v501, 1.442695
      %v537 = vpow.pop %v536
      %v538 = vmul.f32 %v502, 1.442695
      %v539 = vpow.pop %v538
      %v540 = vmul.f32 %v503, 1.442695
      %v541 = vpow.pop %v540
      %v542 = vmul.f32 %v504, 1.442695
      %v543 = vpow.pop %v542
      %v544 = vmul.f32 %v505, 1.442695
      %v545 = vpow.pop %v544
      %v546 = vmul.f32 %v506, 1.442695
      %v547 = vpow.pop %v546
      %v548 = vmul.f32 %v507, 1.442695
      %v549 = vpow.pop %v548
      %v550 = vmul.f32 %v508, 1.442695
      %v551 = vpow.pop %v550
      %v552 = vmul.f32 %v509, 1.442695
      %v553 = vpow.pop %v552
      %v554 = vmul.f32 %v510, 1.442695
      %v555 = vpow.pop %v554
      %v556 = vmul.f32 %v511, 1.442695
      %v557 = vpow.pop %v556
      %v558 = vmul.f32 %v512, 1.442695
      %v559 = vpow.pop %v558
      %v560 = vmul.f32 %v513, 1.442695
      %v561 = vpow.pop %v560
      %v562 = vmul.f32 %v514, 1.442695
      %v563 = vpow.pop %v562
      %v564 = vmul.f32 %v515, 1.442695
      %v565 = vpow.pop %v564
      %v566 = vmul.f32 %v516, 1.442695
      %v567 = vpow.pop %v566
      %v568 = vmul.f32 %v517, 1.442695
      %v569 = vpow.pop %v568
      %v570 = vmul.f32 %v518, 1.442695
      %v571 = vpow.pop %v570
      %v572 = vmul.f32 %v519, 1.442695
      %v573 = vpow.pop %v572
      %v574 = vmul.f32 %v520, 1.442695
      %v575 = vpow.pop %v574
      %v576 = vmul.f32 %v521, 1.442695
      %v577 = vpow.pop %v576
      %v578 = vmul.f32 %v522, 1.442695
      %v579 = vpow.pop %v578
      %v580 = vmul.f32 %v523, 1.442695
      %v581 = vpow.pop %v580
      %v582 = vmul.f32 %v524, 1.442695
      %v583 = vpow.pop %v582
      %v584 = vmul.f32 %v525, 1.442695
      %v585 = vpow.pop %v584
      %v586 = vmul.f32 %v526, 1.442695
      %v587 = vpow.pop %v586
      %v588 = vmul.f32 %v527, 1.442695
      %v589 = vpow.pop %v588
      %v590 = vmul.f32 %v528, 1.442695
      %v591 = vpow.pop %v590
      %v592 = vmul.f32 %v529, 1.442695
      %v593 = vpow.pop %v592
      %v594 = vadd.f32 %v531, 1.0
      %v595 = vadd.f32 %v533, 1.0
      %v596 = vadd.f32 %v535, 1.0
      %v597 = vadd.f32 %v537, 1.0
      %v598 = vadd.f32 %v539, 1.0
      %v599 = vadd.f32 %v541, 1.0
      %v600 = vadd.f32 %v543, 1.0
      %v601 = vadd.f32 %v545, 1.0
      %v602 = vadd.f32 %v547, 1.0
      %v603 = vadd.f32 %v549, 1.0
      %v604 = vadd.f32 %v551, 1.0
      %v605 = vadd.f32 %v553, 1.0
      %v606 = vadd.f32 %v555, 1.0
      %v607 = vadd.f32 %v557, 1.0
      %v608 = vadd.f32 %v559, 1.0
      %v609 = vadd.f32 %v561, 1.0
      %v610 = vadd.f32 %v563, 1.0
      %v611 = vadd.f32 %v565, 1.0
      %v612 = vadd.f32 %v567, 1.0
      %v613 = vadd.f32 %v569, 1.0
      %v614 = vadd.f32 %v571, 1.0
      %v615 = vadd.f32 %v573, 1.0
      %v616 = vadd.f32 %v575, 1.0
      %v617 = vadd.f32 %v577, 1.0
      %v618 = vadd.f32 %v579, 1.0
      %v619 = vadd.f32 %v581, 1.0
      %v620 = vadd.f32 %v583, 1.0
      %v621 = vadd.f32 %v585, 1.0
      %v622 = vadd.f32 %v587, 1.0
      %v623 = vadd.f32 %v589, 1.0
      %v624 = vadd.f32 %v591, 1.0
      %v625 = vadd.f32 %v593, 1.0
      %v626 = vrcp.pop %v594
      %v627 = vmul.f32 %v594, %v626
      %v628 = vsub.f32 1.0, %v627
      %v629 = vmul.f32 %v626, %v628
      %v630 = vadd.f32 %v626, %v629
      %vm631 = vweird.f32 %v594
      %vm632 = vweird.f32 %v626
      %vm633 = vmor %vm631, %vm632
      %v634 = vsel %vm633, %v626, %v630
      %v635 = vand.u32 2147483647, %v594
      %vm636 = vcmp.eq.f32.partialorder %v635, 8.507059e+37
      %v637 = vand.u32 %v594, 2147483648
      %v638 = vor.u32 1.1754944e-38, %v637
      %v639 = vsel %vm636, %v638, %v634
      %v640 = vmul.f32 1.0, %v639
      %v641 = vrcp.pop %v595
      %v642 = vmul.f32 %v595, %v641
      %v643 = vsub.f32 1.0, %v642
      %v644 = vmul.f32 %v641, %v643
      %v645 = vadd.f32 %v641, %v644
      %vm646 = vweird.f32 %v595
      %vm647 = vweird.f32 %v641
      %vm648 = vmor %vm646, %vm647
      %v649 = vsel %vm648, %v641, %v645
      %v650 = vand.u32 2147483647, %v595
      %vm651 = vcmp.eq.f32.partialorder %v650, 8.507059e+37
      %v652 = vand.u32 %v595, 2147483648
      %v653 = vor.u32 1.1754944e-38, %v652
      %v654 = vsel %vm651, %v653, %v649
      %v655 = vmul.f32 1.0, %v654
      %v656 = vrcp.pop %v596
      %v657 = vmul.f32 %v596, %v656
      %v658 = vsub.f32 1.0, %v657
      %v659 = vmul.f32 %v656, %v658
      %v660 = vadd.f32 %v656, %v659
      %vm661 = vweird.f32 %v596
      %vm662 = vweird.f32 %v656
      %vm663 = vmor %vm661, %vm662
      %v664 = vsel %vm663, %v656, %v660
      %v665 = vand.u32 2147483647, %v596
      %vm666 = vcmp.eq.f32.partialorder %v665, 8.507059e+37
      %v667 = vand.u32 %v596, 2147483648
      %v668 = vor.u32 1.1754944e-38, %v667
      %v669 = vsel %vm666, %v668, %v664
      %v670 = vmul.f32 1.0, %v669
      %v671 = vrcp.pop %v597
      %v672 = vmul.f32 %v597, %v671
      %v673 = vsub.f32 1.0, %v672
      %v674 = vmul.f32 %v671, %v673
      %v675 = vadd.f32 %v671, %v674
      %vm676 = vweird.f32 %v597
      %vm677 = vweird.f32 %v671
      %vm678 = vmor %vm676, %vm677
      %v679 = vsel %vm678, %v671, %v675
      %v680 = vand.u32 2147483647, %v597
      %vm681 = vcmp.eq.f32.partialorder %v680, 8.507059e+37
      %v682 = vand.u32 %v597, 2147483648
      %v683 = vor.u32 1.1754944e-38, %v682
      %v684 = vsel %vm681, %v683, %v679
      %v685 = vmul.f32 1.0, %v684
      %v686 = vrcp.pop %v598
      %v687 = vmul.f32 %v598, %v686
      %v688 = vsub.f32 1.0, %v687
      %v689 = vmul.f32 %v686, %v688
      %v690 = vadd.f32 %v686, %v689
      %vm691 = vweird.f32 %v598
      %vm692 = vweird.f32 %v686
      %vm693 = vmor %vm691, %vm692
      %v694 = vsel %vm693, %v686, %v690
      %v695 = vand.u32 2147483647, %v598
      %vm696 = vcmp.eq.f32.partialorder %v695, 8.507059e+37
      %v697 = vand.u32 %v598, 2147483648
      %v698 = vor.u32 1.1754944e-38, %v697
      %v699 = vsel %vm696, %v698, %v694
      %v700 = vmul.f32 1.0, %v699
      %v701 = vrcp.pop %v599
      %v702 = vmul.f32 %v599, %v701
      %v703 = vsub.f32 1.0, %v702
      %v704 = vmul.f32 %v701, %v703
      %v705 = vadd.f32 %v701, %v704
      %vm706 = vweird.f32 %v599
      %vm707 = vweird.f32 %v701
      %vm708 = vmor %vm706, %vm707
      %v709 = vsel %vm708, %v701, %v705
      %v710 = vand.u32 2147483647, %v599
      %vm711 = vcmp.eq.f32.partialorder %v710, 8.507059e+37
      %v712 = vand.u32 %v599, 2147483648
      %v713 = vor.u32 1.1754944e-38, %v712
      %v714 = vsel %vm711, %v713, %v709
      %v715 = vmul.f32 1.0, %v714
      %v716 = vrcp.pop %v600
      %v717 = vmul.f32 %v600, %v716
      %v718 = vsub.f32 1.0, %v717
      %v719 = vmul.f32 %v716, %v718
      %v720 = vadd.f32 %v716, %v719
      %vm721 = vweird.f32 %v600
      %vm722 = vweird.f32 %v716
      %vm723 = vmor %vm721, %vm722
      %v724 = vsel %vm723, %v716, %v720
      %v725 = vand.u32 2147483647, %v600
      %vm726 = vcmp.eq.f32.partialorder %v725, 8.507059e+37
      %v727 = vand.u32 %v600, 2147483648
      %v728 = vor.u32 1.1754944e-38, %v727
      %v729 = vsel %vm726, %v728, %v724
      %v730 = vmul.f32 1.0, %v729
      %v731 = vrcp.pop %v601
      %v732 = vmul.f32 %v601, %v731
      %v733 = vsub.f32 1.0, %v732
      %v734 = vmul.f32 %v731, %v733
      %v735 = vadd.f32 %v731, %v734
      %vm736 = vweird.f32 %v601
      %vm737 = vweird.f32 %v731
      %vm738 = vmor %vm736, %vm737
      %v739 = vsel %vm738, %v731, %v735
      %v740 = vand.u32 2147483647, %v601
      %vm741 = vcmp.eq.f32.partialorder %v740, 8.507059e+37
      %v742 = vand.u32 %v601, 2147483648
      %v743 = vor.u32 1.1754944e-38, %v742
      %v744 = vsel %vm741, %v743, %v739
      %v745 = vmul.f32 1.0, %v744
      %v746 = vrcp.pop %v602
      %v747 = vmul.f32 %v602, %v746
      %v748 = vsub.f32 1.0, %v747
      %v749 = vmul.f32 %v746, %v748
      %v750 = vadd.f32 %v746, %v749
      %vm751 = vweird.f32 %v602
      %vm752 = vweird.f32 %v746
      %vm753 = vmor %vm751, %vm752
      %v754 = vsel %vm753, %v746, %v750
      %v755 = vand.u32 2147483647, %v602
      %vm756 = vcmp.eq.f32.partialorder %v755, 8.507059e+37
      %v757 = vand.u32 %v602, 2147483648
      %v758 = vor.u32 1.1754944e-38, %v757
      %v759 = vsel %vm756, %v758, %v754
      %v760 = vmul.f32 1.0, %v759
      %v761 = vrcp.pop %v603
      %v762 = vmul.f32 %v603, %v761
      %v763 = vsub.f32 1.0, %v762
      %v764 = vmul.f32 %v761, %v763
      %v765 = vadd.f32 %v761, %v764
      %vm766 = vweird.f32 %v603
      %vm767 = vweird.f32 %v761
      %vm768 = vmor %vm766, %vm767
      %v769 = vsel %vm768, %v761, %v765
      %v770 = vand.u32 2147483647, %v603
      %vm771 = vcmp.eq.f32.partialorder %v770, 8.507059e+37
      %v772 = vand.u32 %v603, 2147483648
      %v773 = vor.u32 1.1754944e-38, %v772
      %v774 = vsel %vm771, %v773, %v769
      %v775 = vmul.f32 1.0, %v774
      %v776 = vrcp.pop %v604
      %v777 = vmul.f32 %v604, %v776
      %v778 = vsub.f32 1.0, %v777
      %v779 = vmul.f32 %v776, %v778
      %v780 = vadd.f32 %v776, %v779
      %vm781 = vweird.f32 %v604
      %vm782 = vweird.f32 %v776
      %vm783 = vmor %vm781, %vm782
      %v784 = vsel %vm783, %v776, %v780
      %v785 = vand.u32 2147483647, %v604
      %vm786 = vcmp.eq.f32.partialorder %v785, 8.507059e+37
      %v787 = vand.u32 %v604, 2147483648
      %v788 = vor.u32 1.1754944e-38, %v787
      %v789 = vsel %vm786, %v788, %v784
      %v790 = vmul.f32 1.0, %v789
      %v791 = vrcp.pop %v605
      %v792 = vmul.f32 %v605, %v791
      %v793 = vsub.f32 1.0, %v792
      %v794 = vmul.f32 %v791, %v793
      %v795 = vadd.f32 %v791, %v794
      %vm796 = vweird.f32 %v605
      %vm797 = vweird.f32 %v791
      %vm798 = vmor %vm796, %vm797
      %v799 = vsel %vm798, %v791, %v795
      %v800 = vand.u32 2147483647, %v605
      %vm801 = vcmp.eq.f32.partialorder %v800, 8.507059e+37
      %v802 = vand.u32 %v605, 2147483648
      %v803 = vor.u32 1.1754944e-38, %v802
      %v804 = vsel %vm801, %v803, %v799
      %v805 = vmul.f32 1.0, %v804
      %v806 = vrcp.pop %v606
      %v807 = vmul.f32 %v606, %v806
      %v808 = vsub.f32 1.0, %v807
      %v809 = vmul.f32 %v806, %v808
      %v810 = vadd.f32 %v806, %v809
      %vm811 = vweird.f32 %v606
      %vm812 = vweird.f32 %v806
      %vm813 = vmor %vm811, %vm812
      %v814 = vsel %vm813, %v806, %v810
      %v815 = vand.u32 2147483647, %v606
      %vm816 = vcmp.eq.f32.partialorder %v815, 8.507059e+37
      %v817 = vand.u32 %v606, 2147483648
      %v818 = vor.u32 1.1754944e-38, %v817
      %v819 = vsel %vm816, %v818, %v814
      %v820 = vmul.f32 1.0, %v819
      %v821 = vrcp.pop %v607
      %v822 = vmul.f32 %v607, %v821
      %v823 = vsub.f32 1.0, %v822
      %v824 = vmul.f32 %v821, %v823
      %v825 = vadd.f32 %v821, %v824
      %vm826 = vweird.f32 %v607
      %vm827 = vweird.f32 %v821
      %vm828 = vmor %vm826, %vm827
      %v829 = vsel %vm828, %v821, %v825
      %v830 = vand.u32 2147483647, %v607
      %vm831 = vcmp.eq.f32.partialorder %v830, 8.507059e+37
      %v832 = vand.u32 %v607, 2147483648
      %v833 = vor.u32 1.1754944e-38, %v832
      %v834 = vsel %vm831, %v833, %v829
      %v835 = vmul.f32 1.0, %v834
      %v836 = vrcp.pop %v608
      %v837 = vmul.f32 %v608, %v836
      %v838 = vsub.f32 1.0, %v837
      %v839 = vmul.f32 %v836, %v838
      %v840 = vadd.f32 %v836, %v839
      %vm841 = vweird.f32 %v608
      %vm842 = vweird.f32 %v836
      %vm843 = vmor %vm841, %vm842
      %v844 = vsel %vm843, %v836, %v840
      %v845 = vand.u32 2147483647, %v608
      %vm846 = vcmp.eq.f32.partialorder %v845, 8.507059e+37
      %v847 = vand.u32 %v608, 2147483648
      %v848 = vor.u32 1.1754944e-38, %v847
      %v849 = vsel %vm846, %v848, %v844
      %v850 = vmul.f32 1.0, %v849
      %v851 = vrcp.pop %v609
      %v852 = vmul.f32 %v609, %v851
      %v853 = vsub.f32 1.0, %v852
      %v854 = vmul.f32 %v851, %v853
      %v855 = vadd.f32 %v851, %v854
      %vm856 = vweird.f32 %v609
      %vm857 = vweird.f32 %v851
      %vm858 = vmor %vm856, %vm857
      %v859 = vsel %vm858, %v851, %v855
      %v860 = vand.u32 2147483647, %v609
      %vm861 = vcmp.eq.f32.partialorder %v860, 8.507059e+37
      %v862 = vand.u32 %v609, 2147483648
      %v863 = vor.u32 1.1754944e-38, %v862
      %v864 = vsel %vm861, %v863, %v859
      %v865 = vmul.f32 1.0, %v864
      %v866 = vrcp.pop %v610
      %v867 = vmul.f32 %v610, %v866
      %v868 = vsub.f32 1.0, %v867
      %v869 = vmul.f32 %v866, %v868
      %v870 = vadd.f32 %v866, %v869
      %vm871 = vweird.f32 %v610
      %vm872 = vweird.f32 %v866
      %vm873 = vmor %vm871, %vm872
      %v874 = vsel %vm873, %v866, %v870
      %v875 = vand.u32 2147483647, %v610
      %vm876 = vcmp.eq.f32.partialorder %v875, 8.507059e+37
      %v877 = vand.u32 %v610, 2147483648
      %v878 = vor.u32 1.1754944e-38, %v877
      %v879 = vsel %vm876, %v878, %v874
      %v880 = vmul.f32 1.0, %v879
      %v881 = vrcp.pop %v611
      %v882 = vmul.f32 %v611, %v881
      %v883 = vsub.f32 1.0, %v882
      %v884 = vmul.f32 %v881, %v883
      %v885 = vadd.f32 %v881, %v884
      %vm886 = vweird.f32 %v611
      %vm887 = vweird.f32 %v881
      %vm888 = vmor %vm886, %vm887
      %v889 = vsel %vm888, %v881, %v885
      %v890 = vand.u32 2147483647, %v611
      %vm891 = vcmp.eq.f32.partialorder %v890, 8.507059e+37
      %v892 = vand.u32 %v611, 2147483648
      %v893 = vor.u32 1.1754944e-38, %v892
      %v894 = vsel %vm891, %v893, %v889
      %v895 = vmul.f32 1.0, %v894
      %v896 = vrcp.pop %v612
      %v897 = vmul.f32 %v612, %v896
      %v898 = vsub.f32 1.0, %v897
      %v899 = vmul.f32 %v896, %v898
      %v900 = vadd.f32 %v896, %v899
      %vm901 = vweird.f32 %v612
      %vm902 = vweird.f32 %v896
      %vm903 = vmor %vm901, %vm902
      %v904 = vsel %vm903, %v896, %v900
      %v905 = vand.u32 2147483647, %v612
      %vm906 = vcmp.eq.f32.partialorder %v905, 8.507059e+37
      %v907 = vand.u32 %v612, 2147483648
      %v908 = vor.u32 1.1754944e-38, %v907
      %v909 = vsel %vm906, %v908, %v904
      %v910 = vmul.f32 1.0, %v909
      %v911 = vrcp.pop %v613
      %v912 = vmul.f32 %v613, %v911
      %v913 = vsub.f32 1.0, %v912
      %v914 = vmul.f32 %v911, %v913
      %v915 = vadd.f32 %v911, %v914
      %vm916 = vweird.f32 %v613
      %vm917 = vweird.f32 %v911
      %vm918 = vmor %vm916, %vm917
      %v919 = vsel %vm918, %v911, %v915
      %v920 = vand.u32 2147483647, %v613
      %vm921 = vcmp.eq.f32.partialorder %v920, 8.507059e+37
      %v922 = vand.u32 %v613, 2147483648
      %v923 = vor.u32 1.1754944e-38, %v922
      %v924 = vsel %vm921, %v923, %v919
      %v925 = vmul.f32 1.0, %v924
      %v926 = vrcp.pop %v614
      %v927 = vmul.f32 %v614, %v926
      %v928 = vsub.f32 1.0, %v927
      %v929 = vmul.f32 %v926, %v928
      %v930 = vadd.f32 %v926, %v929
      %vm931 = vweird.f32 %v614
      %vm932 = vweird.f32 %v926
      %vm933 = vmor %vm931, %vm932
      %v934 = vsel %vm933, %v926, %v930
      %v935 = vand.u32 2147483647, %v614
      %vm936 = vcmp.eq.f32.partialorder %v935, 8.507059e+37
      %v937 = vand.u32 %v614, 2147483648
      %v938 = vor.u32 1.1754944e-38, %v937
      %v939 = vsel %vm936, %v938, %v934
      %v940 = vmul.f32 1.0, %v939
      %v941 = vrcp.pop %v615
      %v942 = vmul.f32 %v615, %v941
      %v943 = vsub.f32 1.0, %v942
      %v944 = vmul.f32 %v941, %v943
      %v945 = vadd.f32 %v941, %v944
      %vm946 = vweird.f32 %v615
      %vm947 = vweird.f32 %v941
      %vm948 = vmor %vm946, %vm947
      %v949 = vsel %vm948, %v941, %v945
      %v950 = vand.u32 2147483647, %v615
      %vm951 = vcmp.eq.f32.partialorder %v950, 8.507059e+37
      %v952 = vand.u32 %v615, 2147483648
      %v953 = vor.u32 1.1754944e-38, %v952
      %v954 = vsel %vm951, %v953, %v949
      %v955 = vmul.f32 1.0, %v954
      %v956 = vrcp.pop %v616
      %v957 = vmul.f32 %v616, %v956
      %v958 = vsub.f32 1.0, %v957
      %v959 = vmul.f32 %v956, %v958
      %v960 = vadd.f32 %v956, %v959
      %vm961 = vweird.f32 %v616
      %vm962 = vweird.f32 %v956
      %vm963 = vmor %vm961, %vm962
      %v964 = vsel %vm963, %v956, %v960
      %v965 = vand.u32 2147483647, %v616
      %vm966 = vcmp.eq.f32.partialorder %v965, 8.507059e+37
      %v967 = vand.u32 %v616, 2147483648
      %v968 = vor.u32 1.1754944e-38, %v967
      %v969 = vsel %vm966, %v968, %v964
      %v970 = vmul.f32 1.0, %v969
      %v971 = vrcp.pop %v617
      %v972 = vmul.f32 %v617, %v971
      %v973 = vsub.f32 1.0, %v972
      %v974 = vmul.f32 %v971, %v973
      %v975 = vadd.f32 %v971, %v974
      %vm976 = vweird.f32 %v617
      %vm977 = vweird.f32 %v971
      %vm978 = vmor %vm976, %vm977
      %v979 = vsel %vm978, %v971, %v975
      %v980 = vand.u32 2147483647, %v617
      %vm981 = vcmp.eq.f32.partialorder %v980, 8.507059e+37
      %v982 = vand.u32 %v617, 2147483648
      %v983 = vor.u32 1.1754944e-38, %v982
      %v984 = vsel %vm981, %v983, %v979
      %v985 = vmul.f32 1.0, %v984
      %v986 = vrcp.pop %v618
      %v987 = vmul.f32 %v618, %v986
      %v988 = vsub.f32 1.0, %v987
      %v989 = vmul.f32 %v986, %v988
      %v990 = vadd.f32 %v986, %v989
      %vm991 = vweird.f32 %v618
      %vm992 = vweird.f32 %v986
      %vm993 = vmor %vm991, %vm992
      %v994 = vsel %vm993, %v986, %v990
      %v995 = vand.u32 2147483647, %v618
      %vm996 = vcmp.eq.f32.partialorder %v995, 8.507059e+37
      %v997 = vand.u32 %v618, 2147483648
      %v998 = vor.u32 1.1754944e-38, %v997
      %v999 = vsel %vm996, %v998, %v994
      %v1000 = vmul.f32 1.0, %v999
      %v1001 = vrcp.pop %v619
      %v1002 = vmul.f32 %v619, %v1001
      %v1003 = vsub.f32 1.0, %v1002
      %v1004 = vmul.f32 %v1001, %v1003
      %v1005 = vadd.f32 %v1001, %v1004
      %vm1006 = vweird.f32 %v619
      %vm1007 = vweird.f32 %v1001
      %vm1008 = vmor %vm1006, %vm1007
      %v1009 = vsel %vm1008, %v1001, %v1005
      %v1010 = vand.u32 2147483647, %v619
      %vm1011 = vcmp.eq.f32.partialorder %v1010, 8.507059e+37
      %v1012 = vand.u32 %v619, 2147483648
      %v1013 = vor.u32 1.1754944e-38, %v1012
      %v1014 = vsel %vm1011, %v1013, %v1009
      %v1015 = vmul.f32 1.0, %v1014
      %v1016 = vrcp.pop %v620
      %v1017 = vmul.f32 %v620, %v1016
      %v1018 = vsub.f32 1.0, %v1017
      %v1019 = vmul.f32 %v1016, %v1018
      %v1020 = vadd.f32 %v1016, %v1019
      %vm1021 = vweird.f32 %v620
      %vm1022 = vweird.f32 %v1016
      %vm1023 = vmor %vm1021, %vm1022
      %v1024 = vsel %vm1023, %v1016, %v1020
      %v1025 = vand.u32 2147483647, %v620
      %vm1026 = vcmp.eq.f32.partialorder %v1025, 8.507059e+37
      %v1027 = vand.u32 %v620, 2147483648
      %v1028 = vor.u32 1.1754944e-38, %v1027
      %v1029 = vsel %vm1026, %v1028, %v1024
      %v1030 = vmul.f32 1.0, %v1029
      %v1031 = vrcp.pop %v621
      %v1032 = vmul.f32 %v621, %v1031
      %v1033 = vsub.f32 1.0, %v1032
      %v1034 = vmul.f32 %v1031, %v1033
      %v1035 = vadd.f32 %v1031, %v1034
      %vm1036 = vweird.f32 %v621
      %vm1037 = vweird.f32 %v1031
      %vm1038 = vmor %vm1036, %vm1037
      %v1039 = vsel %vm1038, %v1031, %v1035
      %v1040 = vand.u32 2147483647, %v621
      %vm1041 = vcmp.eq.f32.partialorder %v1040, 8.507059e+37
      %v1042 = vand.u32 %v621, 2147483648
      %v1043 = vor.u32 1.1754944e-38, %v1042
      %v1044 = vsel %vm1041, %v1043, %v1039
      %v1045 = vmul.f32 1.0, %v1044
      %v1046 = vrcp.pop %v622
      %v1047 = vmul.f32 %v622, %v1046
      %v1048 = vsub.f32 1.0, %v1047
      %v1049 = vmul.f32 %v1046, %v1048
      %v1050 = vadd.f32 %v1046, %v1049
      %vm1051 = vweird.f32 %v622
      %vm1052 = vweird.f32 %v1046
      %vm1053 = vmor %vm1051, %vm1052
      %v1054 = vsel %vm1053, %v1046, %v1050
      %v1055 = vand.u32 2147483647, %v622
      %vm1056 = vcmp.eq.f32.partialorder %v1055, 8.507059e+37
      %v1057 = vand.u32 %v622, 2147483648
      %v1058 = vor.u32 1.1754944e-38, %v1057
      %v1059 = vsel %vm1056, %v1058, %v1054
      %v1060 = vmul.f32 1.0, %v1059
      %v1061 = vrcp.pop %v623
      %v1062 = vmul.f32 %v623, %v1061
      %v1063 = vsub.f32 1.0, %v1062
      %v1064 = vmul.f32 %v1061, %v1063
      %v1065 = vadd.f32 %v1061, %v1064
      %vm1066 = vweird.f32 %v623
      %vm1067 = vweird.f32 %v1061
      %vm1068 = vmor %vm1066, %vm1067
      %v1069 = vsel %vm1068, %v1061, %v1065
      %v1070 = vand.u32 2147483647, %v623
      %vm1071 = vcmp.eq.f32.partialorder %v1070, 8.507059e+37
      %v1072 = vand.u32 %v623, 2147483648
      %v1073 = vor.u32 1.1754944e-38, %v1072
      %v1074 = vsel %vm1071, %v1073, %v1069
      %v1075 = vmul.f32 1.0, %v1074
      %v1076 = vrcp.pop %v624
      %v1077 = vmul.f32 %v624, %v1076
      %v1078 = vsub.f32 1.0, %v1077
      %v1079 = vmul.f32 %v1076, %v1078
      %v1080 = vadd.f32 %v1076, %v1079
      %vm1081 = vweird.f32 %v624
      %vm1082 = vweird.f32 %v1076
      %vm1083 = vmor %vm1081, %vm1082
      %v1084 = vsel %vm1083, %v1076, %v1080
      %v1085 = vand.u32 2147483647, %v624
      %vm1086 = vcmp.eq.f32.partialorder %v1085, 8.507059e+37
      %v1087 = vand.u32 %v624, 2147483648
      %v1088 = vor.u32 1.1754944e-38, %v1087
      %v1089 = vsel %vm1086, %v1088, %v1084
      %v1090 = vmul.f32 1.0, %v1089
      %v1091 = vrcp.pop %v625
      %v1092 = vmul.f32 %v625, %v1091
      %v1093 = vsub.f32 1.0, %v1092
      %v1094 = vmul.f32 %v1091, %v1093
      %v1095 = vadd.f32 %v1091, %v1094
      %vm1096 = vweird.f32 %v625
      %vm1097 = vweird.f32 %v1091
      %vm1098 = vmor %vm1096, %vm1097
      %v1099 = vsel %vm1098, %v1091, %v1095
      %v1100 = vand.u32 2147483647, %v625
      %vm1101 = vcmp.eq.f32.partialorder %v1100, 8.507059e+37
      %v1102 = vand.u32 %v625, 2147483648
      %v1103 = vor.u32 1.1754944e-38, %v1102
      %v1104 = vsel %vm1101, %v1103, %v1099
      %v1105 = vmul.f32 1.0, %v1104
      %v1106 = vmul.f32 %v419, %v640
      %v1107 = vmul.f32 %v421, %v655
      %v1108 = vmul.f32 %v424, %v670
      %v1109 = vmul.f32 %v426, %v685
      %v1110 = vmul.f32 %v429, %v700
      %v1111 = vmul.f32 %v431, %v715
      %v1112 = vmul.f32 %v434, %v730
      %v1113 = vmul.f32 %v436, %v745
      %v1114 = vmul.f32 %v439, %v760
      %v1115 = vmul.f32 %v441, %v775
      %v1116 = vmul.f32 %v444, %v790
      %v1117 = vmul.f32 %v446, %v805
      %v1118 = vmul.f32 %v449, %v820
      %v1119 = vmul.f32 %v451, %v835
      %v1120 = vmul.f32 %v454, %v850
      %v1121 = vmul.f32 %v456, %v865
      %v1122 = vmul.f32 %v459, %v880
      %v1123 = vmul.f32 %v461, %v895
      %v1124 = vmul.f32 %v464, %v910
      %v1125 = vmul.f32 %v466, %v925
      %v1126 = vmul.f32 %v469, %v940
      %v1127 = vmul.f32 %v471, %v955
      %v1128 = vmul.f32 %v474, %v970
      %v1129 = vmul.f32 %v476, %v985
      %v1130 = vmul.f32 %v479, %v1000
      %v1131 = vmul.f32 %v481, %v1015
      %v1132 = vmul.f32 %v484, %v1030
      %v1133 = vmul.f32 %v486, %v1045
      %v1134 = vmul.f32 %v489, %v1060
      %v1135 = vmul.f32 %v491, %v1075
      %v1136 = vmul.f32 %v494, %v1090
      %v1137 = vmul.f32 %v496, %v1105
      %v1138 = vld [vmem:[%s3] sm:$0xff]
      %v1139 = vld [vmem:[%s3 + $0x8] sm:$0xff]
      %v1140 = vld [vmem:[%s3 + $0x10] sm:$0xff]
      %v1141 = vld [vmem:[%s3 + $0x18] sm:$0xff]
      %1142 = vmatpush.msra.mxu0 %v1121
      %1143 = vmatpush.msra.mxu0 %v1120
      %1144 = vmatpush.msra.mxu0 %v1119
      %1145 = vmatpush.msra.mxu0 %v1118
      %1146 = vmatpush.msra.mxu0 %v1117
      %1147 = vmatpush.msra.mxu0 %v1116
      %1148 = vmatpush.msra.mxu0 %v1115
      %1149 = vmatpush.msra.mxu0 %v1114
      %1150 = vmatpush.msra.mxu0 %v1113
      %1151 = vmatpush.msra.mxu0 %v1112
      %1152 = vmatpush.msra.mxu0 %v1111
      %1153 = vmatpush.msra.mxu0 %v1110
      %1154 = vmatpush.msra.mxu0 %v1109
      %1155 = vmatpush.msra.mxu0 %v1108
      %1156 = vmatpush.msra.mxu0 %v1107
      %1157 = vmatpush.msra.mxu0 %v1106
      %1158 = vmatmul.f32.gmra.mxu0 %v1138
      %v1159 = vpop.f32.mrf.mxu0
      %v1160 = vadd.f32 0.0, %v1159
      %1161 = vmatmul.f32.gmra.mxu0 %v1140
      %v1162 = vpop.f32.mrf.mxu0
      %v1163 = vadd.f32 0.0, %v1162
      %1164 = vdwg.mxu0
      %1165 = vmatpush.msra.mxu0 %v1137
      %1166 = vmatpush.msra.mxu0 %v1136
      %1167 = vmatpush.msra.mxu0 %v1135
      %1168 = vmatpush.msra.mxu0 %v1134
      %1169 = vmatpush.msra.mxu0 %v1133
      %1170 = vmatpush.msra.mxu0 %v1132
      %1171 = vmatpush.msra.mxu0 %v1131
      %1172 = vmatpush.msra.mxu0 %v1130
      %1173 = vmatpush.msra.mxu0 %v1129
      %1174 = vmatpush.msra.mxu0 %v1128
      %1175 = vmatpush.msra.mxu0 %v1127
      %1176 = vmatpush.msra.mxu0 %v1126
      %1177 = vmatpush.msra.mxu0 %v1125
      %1178 = vmatpush.msra.mxu0 %v1124
      %1179 = vmatpush.msra.mxu0 %v1123
      %1180 = vmatpush.msra.mxu0 %v1122
      %1181 = vmatmul.f32.gmra.mxu0 %v1139
      %v1182 = vpop.f32.mrf.mxu0
      %v1183 = vadd.f32 %v1160, %v1182
      %1184 = vmatmul.f32.gmra.mxu0 %v1141
      %v1185 = vpop.f32.mrf.mxu0
      %v1186 = vadd.f32 %v1163, %v1185
      %1187 = vdwg.mxu0
      %1188 = vst.msk [vmem:[%s237] sm:$0xff] %vm356, %v1183
      %1189 = vst.msk [vmem:[%s237 + $0x8] sm:$0xff] %vm356, %v1186
      %vm1190 = vcmask 60416
      %v1191 = vsel %vm1190, %v1106, -inf
      %v1192 = vrot.slane %v1191, 4
      %v1193 = vmax.f32 %v1191, %v1192
      %v1194 = vrot.slane %v1193, 2
      %v1195 = vmax.f32 %v1193, %v1194
      %v1196 = vrot.slane %v1195, 1
      %v1197 = vmax.f32 %v1195, %v1196
      %v1198 = vsel %vm1190, %v1108, -inf
      %v1199 = vrot.slane %v1198, 4
      %v1200 = vmax.f32 %v1198, %v1199
      %v1201 = vrot.slane %v1200, 2
      %v1202 = vmax.f32 %v1200, %v1201
      %v1203 = vrot.slane %v1202, 1
      %v1204 = vmax.f32 %v1202, %v1203
      %v1205 = vmax.f32 %v1197, %v1204
      %v1206 = vsel %vm1190, %v1110, -inf
      %v1207 = vrot.slane %v1206, 4
      %v1208 = vmax.f32 %v1206, %v1207
      %v1209 = vrot.slane %v1208, 2
      %v1210 = vmax.f32 %v1208, %v1209
      %v1211 = vrot.slane %v1210, 1
      %v1212 = vmax.f32 %v1210, %v1211
      %v1213 = vmax.f32 %v1205, %v1212
      %v1214 = vsel %vm1190, %v1112, -inf
      %v1215 = vrot.slane %v1214, 4
      %v1216 = vmax.f32 %v1214, %v1215
      %v1217 = vrot.slane %v1216, 2
      %v1218 = vmax.f32 %v1216, %v1217
      %v1219 = vrot.slane %v1218, 1
      %v1220 = vmax.f32 %v1218, %v1219
      %v1221 = vmax.f32 %v1213, %v1220
      %vm1222 = vcmask 64516
      %v1223 = vsel %vm1222, %v1106, -inf
      %v1224 = vrot.slane %v1223, 4
      %v1225 = vmax.f32 %v1223, %v1224
      %v1226 = vrot.slane %v1225, 2
      %v1227 = vmax.f32 %v1225, %v1226
      %v1228 = vrot.slane %v1227, 1
      %v1229 = vmax.f32 %v1227, %v1228
      %v1230 = vsel %vm1222, %v1108, -inf
      %v1231 = vrot.slane %v1230, 4
      %v1232 = vmax.f32 %v1230, %v1231
      %v1233 = vrot.slane %v1232, 2
      %v1234 = vmax.f32 %v1232, %v1233
      %v1235 = vrot.slane %v1234, 1
      %v1236 = vmax.f32 %v1234, %v1235
      %v1237 = vmax.f32 %v1229, %v1236
      %v1238 = vsel %vm1222, %v1110, -inf
      %v1239 = vrot.slane %v1238, 4
      %v1240 = vmax.f32 %v1238, %v1239
      %v1241 = vrot.slane %v1240, 2
      %v1242 = vmax.f32 %v1240, %v1241
      %v1243 = vrot.slane %v1242, 1
      %v1244 = vmax.f32 %v1242, %v1243
      %v1245 = vmax.f32 %v1237, %v1244
      %v1246 = vsel %vm1222, %v1112, -inf
      %v1247 = vrot.slane %v1246, 4
      %v1248 = vmax.f32 %v1246, %v1247
      %v1249 = vrot.slane %v1248, 2
      %v1250 = vmax.f32 %v1248, %v1249
      %v1251 = vrot.slane %v1250, 1
      %v1252 = vmax.f32 %v1250, %v1251
      %v1253 = vmax.f32 %v1245, %v1252
      %v1254 = vsel %vm1190, %v1107, -inf
      %v1255 = vrot.slane %v1254, 4
      %v1256 = vmax.f32 %v1254, %v1255
      %v1257 = vrot.slane %v1256, 2
      %v1258 = vmax.f32 %v1256, %v1257
      %v1259 = vrot.slane %v1258, 1
      %v1260 = vmax.f32 %v1258, %v1259
      %v1261 = vsel %vm1190, %v1109, -inf
      %v1262 = vrot.slane %v1261, 4
      %v1263 = vmax.f32 %v1261, %v1262
      %v1264 = vrot.slane %v1263, 2
      %v1265 = vmax.f32 %v1263, %v1264
      %v1266 = vrot.slane %v1265, 1
      %v1267 = vmax.f32 %v1265, %v1266
      %v1268 = vmax.f32 %v1260, %v1267
      %v1269 = vsel %vm1190, %v1111, -inf
      %v1270 = vrot.slane %v1269, 4
      %v1271 = vmax.f32 %v1269, %v1270
      %v1272 = vrot.slane %v1271, 2
      %v1273 = vmax.f32 %v1271, %v1272
      %v1274 = vrot.slane %v1273, 1
      %v1275 = vmax.f32 %v1273, %v1274
      %v1276 = vmax.f32 %v1268, %v1275
      %v1277 = vsel %vm1190, %v1113, -inf
      %v1278 = vrot.slane %v1277, 4
      %v1279 = vmax.f32 %v1277, %v1278
      %v1280 = vrot.slane %v1279, 2
      %v1281 = vmax.f32 %v1279, %v1280
      %v1282 = vrot.slane %v1281, 1
      %v1283 = vmax.f32 %v1281, %v1282
      %v1284 = vmax.f32 %v1276, %v1283
      %v1285 = vsel %vm1222, %v1107, -inf
      %v1286 = vrot.slane %v1285, 4
      %v1287 = vmax.f32 %v1285, %v1286
      %v1288 = vrot.slane %v1287, 2
      %v1289 = vmax.f32 %v1287, %v1288
      %v1290 = vrot.slane %v1289, 1
      %v1291 = vmax.f32 %v1289, %v1290
      %v1292 = vsel %vm1222, %v1109, -inf
      %v1293 = vrot.slane %v1292, 4
      %v1294 = vmax.f32 %v1292, %v1293
      %v1295 = vrot.slane %v1294, 2
      %v1296 = vmax.f32 %v1294, %v1295
      %v1297 = vrot.slane %v1296, 1
      %v1298 = vmax.f32 %v1296, %v1297
      %v1299 = vmax.f32 %v1291, %v1298
      %v1300 = vsel %vm1222, %v1111, -inf
      %v1301 = vrot.slane %v1300, 4
      %v1302 = vmax.f32 %v1300, %v1301
      %v1303 = vrot.slane %v1302, 2
      %v1304 = vmax.f32 %v1302, %v1303
      %v1305 = vrot.slane %v1304, 1
      %v1306 = vmax.f32 %v1304, %v1305
      %v1307 = vmax.f32 %v1299, %v1306
      %v1308 = vsel %vm1222, %v1113, -inf
      %v1309 = vrot.slane %v1308, 4
      %v1310 = vmax.f32 %v1308, %v1309
      %v1311 = vrot.slane %v1310, 2
      %v1312 = vmax.f32 %v1310, %v1311
      %v1313 = vrot.slane %v1312, 1
      %v1314 = vmax.f32 %v1312, %v1313
      %v1315 = vmax.f32 %v1307, %v1314
      %v1316 = vsel %vm1190, %v1114, -inf
      %v1317 = vrot.slane %v1316, 4
      %v1318 = vmax.f32 %v1316, %v1317
      %v1319 = vrot.slane %v1318, 2
      %v1320 = vmax.f32 %v1318, %v1319
      %v1321 = vrot.slane %v1320, 1
      %v1322 = vmax.f32 %v1320, %v1321
      %v1323 = vsel %vm1190, %v1116, -inf
      %v1324 = vrot.slane %v1323, 4
      %v1325 = vmax.f32 %v1323, %v1324
      %v1326 = vrot.slane %v1325, 2
      %v1327 = vmax.f32 %v1325, %v1326
      %v1328 = vrot.slane %v1327, 1
      %v1329 = vmax.f32 %v1327, %v1328
      %v1330 = vmax.f32 %v1322, %v1329
      %v1331 = vsel %vm1190, %v1118, -inf
      %v1332 = vrot.slane %v1331, 4
      %v1333 = vmax.f32 %v1331, %v1332
      %v1334 = vrot.slane %v1333, 2
      %v1335 = vmax.f32 %v1333, %v1334
      %v1336 = vrot.slane %v1335, 1
      %v1337 = vmax.f32 %v1335, %v1336
      %v1338 = vmax.f32 %v1330, %v1337
      %v1339 = vsel %vm1190, %v1120, -inf
      %v1340 = vrot.slane %v1339, 4
      %v1341 = vmax.f32 %v1339, %v1340
      %v1342 = vrot.slane %v1341, 2
      %v1343 = vmax.f32 %v1341, %v1342
      %v1344 = vrot.slane %v1343, 1
      %v1345 = vmax.f32 %v1343, %v1344
      %v1346 = vmax.f32 %v1338, %v1345
      %v1347 = vsel %vm1222, %v1114, -inf
      %v1348 = vrot.slane %v1347, 4
      %v1349 = vmax.f32 %v1347, %v1348
      %v1350 = vrot.slane %v1349, 2
      %v1351 = vmax.f32 %v1349, %v1350
      %v1352 = vrot.slane %v1351, 1
      %v1353 = vmax.f32 %v1351, %v1352
      %v1354 = vsel %vm1222, %v1116, -inf
      %v1355 = vrot.slane %v1354, 4
      %v1356 = vmax.f32 %v1354, %v1355
      %v1357 = vrot.slane %v1356, 2
      %v1358 = vmax.f32 %v1356, %v1357
      %v1359 = vrot.slane %v1358, 1
      %v1360 = vmax.f32 %v1358, %v1359
      %v1361 = vmax.f32 %v1353, %v1360
      %v1362 = vsel %vm1222, %v1118, -inf
      %v1363 = vrot.slane %v1362, 4
      %v1364 = vmax.f32 %v1362, %v1363
      %v1365 = vrot.slane %v1364, 2
      %v1366 = vmax.f32 %v1364, %v1365
      %v1367 = vrot.slane %v1366, 1
      %v1368 = vmax.f32 %v1366, %v1367
      %v1369 = vmax.f32 %v1361, %v1368
      %v1370 = vsel %vm1222, %v1120, -inf
      %v1371 = vrot.slane %v1370, 4
      %v1372 = vmax.f32 %v1370, %v1371
      %v1373 = vrot.slane %v1372, 2
      %v1374 = vmax.f32 %v1372, %v1373
      %v1375 = vrot.slane %v1374, 1
      %v1376 = vmax.f32 %v1374, %v1375
      %v1377 = vmax.f32 %v1369, %v1376
      %v1378 = vsel %vm1190, %v1115, -inf
      %v1379 = vrot.slane %v1378, 4
      %v1380 = vmax.f32 %v1378, %v1379
      %v1381 = vrot.slane %v1380, 2
      %v1382 = vmax.f32 %v1380, %v1381
      %v1383 = vrot.slane %v1382, 1
      %v1384 = vmax.f32 %v1382, %v1383
      %v1385 = vsel %vm1190, %v1117, -inf
      %v1386 = vrot.slane %v1385, 4
      %v1387 = vmax.f32 %v1385, %v1386
      %v1388 = vrot.slane %v1387, 2
      %v1389 = vmax.f32 %v1387, %v1388
      %v1390 = vrot.slane %v1389, 1
      %v1391 = vmax.f32 %v1389, %v1390
      %v1392 = vmax.f32 %v1384, %v1391
      %v1393 = vsel %vm1190, %v1119, -inf
      %v1394 = vrot.slane %v1393, 4
      %v1395 = vmax.f32 %v1393, %v1394
      %v1396 = vrot.slane %v1395, 2
      %v1397 = vmax.f32 %v1395, %v1396
      %v1398 = vrot.slane %v1397, 1
      %v1399 = vmax.f32 %v1397, %v1398
      %v1400 = vmax.f32 %v1392, %v1399
      %v1401 = vsel %vm1190, %v1121, -inf
      %v1402 = vrot.slane %v1401, 4
      %v1403 = vmax.f32 %v1401, %v1402
      %v1404 = vrot.slane %v1403, 2
      %v1405 = vmax.f32 %v1403, %v1404
      %v1406 = vrot.slane %v1405, 1
      %v1407 = vmax.f32 %v1405, %v1406
      %v1408 = vmax.f32 %v1400, %v1407
      %v1409 = vsel %vm1222, %v1115, -inf
      %v1410 = vrot.slane %v1409, 4
      %v1411 = vmax.f32 %v1409, %v1410
      %v1412 = vrot.slane %v1411, 2
      %v1413 = vmax.f32 %v1411, %v1412
      %v1414 = vrot.slane %v1413, 1
      %v1415 = vmax.f32 %v1413, %v1414
      %v1416 = vsel %vm1222, %v1117, -inf
      %v1417 = vrot.slane %v1416, 4
      %v1418 = vmax.f32 %v1416, %v1417
      %v1419 = vrot.slane %v1418, 2
      %v1420 = vmax.f32 %v1418, %v1419
      %v1421 = vrot.slane %v1420, 1
      %v1422 = vmax.f32 %v1420, %v1421
      %v1423 = vmax.f32 %v1415, %v1422
      %v1424 = vsel %vm1222, %v1119, -inf
      %v1425 = vrot.slane %v1424, 4
      %v1426 = vmax.f32 %v1424, %v1425
      %v1427 = vrot.slane %v1426, 2
      %v1428 = vmax.f32 %v1426, %v1427
      %v1429 = vrot.slane %v1428, 1
      %v1430 = vmax.f32 %v1428, %v1429
      %v1431 = vmax.f32 %v1423, %v1430
      %v1432 = vsel %vm1222, %v1121, -inf
      %v1433 = vrot.slane %v1432, 4
      %v1434 = vmax.f32 %v1432, %v1433
      %v1435 = vrot.slane %v1434, 2
      %v1436 = vmax.f32 %v1434, %v1435
      %v1437 = vrot.slane %v1436, 1
      %v1438 = vmax.f32 %v1436, %v1437
      %v1439 = vmax.f32 %v1431, %v1438
      %v1440 = vsel %vm1190, %v1122, -inf
      %v1441 = vrot.slane %v1440, 4
      %v1442 = vmax.f32 %v1440, %v1441
      %v1443 = vrot.slane %v1442, 2
      %v1444 = vmax.f32 %v1442, %v1443
      %v1445 = vrot.slane %v1444, 1
      %v1446 = vmax.f32 %v1444, %v1445
      %v1447 = vsel %vm1190, %v1124, -inf
      %v1448 = vrot.slane %v1447, 4
      %v1449 = vmax.f32 %v1447, %v1448
      %v1450 = vrot.slane %v1449, 2
      %v1451 = vmax.f32 %v1449, %v1450
      %v1452 = vrot.slane %v1451, 1
      %v1453 = vmax.f32 %v1451, %v1452
      %v1454 = vmax.f32 %v1446, %v1453
      %v1455 = vsel %vm1190, %v1126, -inf
      %v1456 = vrot.slane %v1455, 4
      %v1457 = vmax.f32 %v1455, %v1456
      %v1458 = vrot.slane %v1457, 2
      %v1459 = vmax.f32 %v1457, %v1458
      %v1460 = vrot.slane %v1459, 1
      %v1461 = vmax.f32 %v1459, %v1460
      %v1462 = vmax.f32 %v1454, %v1461
      %v1463 = vsel %vm1190, %v1128, -inf
      %v1464 = vrot.slane %v1463, 4
      %v1465 = vmax.f32 %v1463, %v1464
      %v1466 = vrot.slane %v1465, 2
      %v1467 = vmax.f32 %v1465, %v1466
      %v1468 = vrot.slane %v1467, 1
      %v1469 = vmax.f32 %v1467, %v1468
      %v1470 = vmax.f32 %v1462, %v1469
      %v1471 = vsel %vm1222, %v1122, -inf
      %v1472 = vrot.slane %v1471, 4
      %v1473 = vmax.f32 %v1471, %v1472
      %v1474 = vrot.slane %v1473, 2
      %v1475 = vmax.f32 %v1473, %v1474
      %v1476 = vrot.slane %v1475, 1
      %v1477 = vmax.f32 %v1475, %v1476
      %v1478 = vsel %vm1222, %v1124, -inf
      %v1479 = vrot.slane %v1478, 4
      %v1480 = vmax.f32 %v1478, %v1479
      %v1481 = vrot.slane %v1480, 2
      %v1482 = vmax.f32 %v1480, %v1481
      %v1483 = vrot.slane %v1482, 1
      %v1484 = vmax.f32 %v1482, %v1483
      %v1485 = vmax.f32 %v1477, %v1484
      %v1486 = vsel %vm1222, %v1126, -inf
      %v1487 = vrot.slane %v1486, 4
      %v1488 = vmax.f32 %v1486, %v1487
      %v1489 = vrot.slane %v1488, 2
      %v1490 = vmax.f32 %v1488, %v1489
      %v1491 = vrot.slane %v1490, 1
      %v1492 = vmax.f32 %v1490, %v1491
      %v1493 = vmax.f32 %v1485, %v1492
      %v1494 = vsel %vm1222, %v1128, -inf
      %v1495 = vrot.slane %v1494, 4
      %v1496 = vmax.f32 %v1494, %v1495
      %v1497 = vrot.slane %v1496, 2
      %v1498 = vmax.f32 %v1496, %v1497
      %v1499 = vrot.slane %v1498, 1
      %v1500 = vmax.f32 %v1498, %v1499
      %v1501 = vmax.f32 %v1493, %v1500
      %v1502 = vsel %vm1190, %v1123, -inf
      %v1503 = vrot.slane %v1502, 4
      %v1504 = vmax.f32 %v1502, %v1503
      %v1505 = vrot.slane %v1504, 2
      %v1506 = vmax.f32 %v1504, %v1505
      %v1507 = vrot.slane %v1506, 1
      %v1508 = vmax.f32 %v1506, %v1507
      %v1509 = vsel %vm1190, %v1125, -inf
      %v1510 = vrot.slane %v1509, 4
      %v1511 = vmax.f32 %v1509, %v1510
      %v1512 = vrot.slane %v1511, 2
      %v1513 = vmax.f32 %v1511, %v1512
      %v1514 = vrot.slane %v1513, 1
      %v1515 = vmax.f32 %v1513, %v1514
      %v1516 = vmax.f32 %v1508, %v1515
      %v1517 = vsel %vm1190, %v1127, -inf
      %v1518 = vrot.slane %v1517, 4
      %v1519 = vmax.f32 %v1517, %v1518
      %v1520 = vrot.slane %v1519, 2
      %v1521 = vmax.f32 %v1519, %v1520
      %v1522 = vrot.slane %v1521, 1
      %v1523 = vmax.f32 %v1521, %v1522
      %v1524 = vmax.f32 %v1516, %v1523
      %v1525 = vsel %vm1190, %v1129, -inf
      %v1526 = vrot.slane %v1525, 4
      %v1527 = vmax.f32 %v1525, %v1526
      %v1528 = vrot.slane %v1527, 2
      %v1529 = vmax.f32 %v1527, %v1528
      %v1530 = vrot.slane %v1529, 1
      %v1531 = vmax.f32 %v1529, %v1530
      %v1532 = vmax.f32 %v1524, %v1531
      %v1533 = vsel %vm1222, %v1123, -inf
      %v1534 = vrot.slane %v1533, 4
      %v1535 = vmax.f32 %v1533, %v1534
      %v1536 = vrot.slane %v1535, 2
      %v1537 = vmax.f32 %v1535, %v1536
      %v1538 = vrot.slane %v1537, 1
      %v1539 = vmax.f32 %v1537, %v1538
      %v1540 = vsel %vm1222, %v1125, -inf
      %v1541 = vrot.slane %v1540, 4
      %v1542 = vmax.f32 %v1540, %v1541
      %v1543 = vrot.slane %v1542, 2
      %v1544 = vmax.f32 %v1542, %v1543
      %v1545 = vrot.slane %v1544, 1
      %v1546 = vmax.f32 %v1544, %v1545
      %v1547 = vmax.f32 %v1539, %v1546
      %v1548 = vsel %vm1222, %v1127, -inf
      %v1549 = vrot.slane %v1548, 4
      %v1550 = vmax.f32 %v1548, %v1549
      %v1551 = vrot.slane %v1550, 2
      %v1552 = vmax.f32 %v1550, %v1551
      %v1553 = vrot.slane %v1552, 1
      %v1554 = vmax.f32 %v1552, %v1553
      %v1555 = vmax.f32 %v1547, %v1554
      %v1556 = vsel %vm1222, %v1129, -inf
      %v1557 = vrot.slane %v1556, 4
      %v1558 = vmax.f32 %v1556, %v1557
      %v1559 = vrot.slane %v1558, 2
      %v1560 = vmax.f32 %v1558, %v1559
      %v1561 = vrot.slane %v1560, 1
      %v1562 = vmax.f32 %v1560, %v1561
      %v1563 = vmax.f32 %v1555, %v1562
      %v1564 = vsel %vm1190, %v1130, -inf
      %v1565 = vrot.slane %v1564, 4
      %v1566 = vmax.f32 %v1564, %v1565
      %v1567 = vrot.slane %v1566, 2
      %v1568 = vmax.f32 %v1566, %v1567
      %v1569 = vrot.slane %v1568, 1
      %v1570 = vmax.f32 %v1568, %v1569
      %v1571 = vsel %vm1190, %v1132, -inf
      %v1572 = vrot.slane %v1571, 4
      %v1573 = vmax.f32 %v1571, %v1572
      %v1574 = vrot.slane %v1573, 2
      %v1575 = vmax.f32 %v1573, %v1574
      %v1576 = vrot.slane %v1575, 1
      %v1577 = vmax.f32 %v1575, %v1576
      %v1578 = vmax.f32 %v1570, %v1577
      %v1579 = vsel %vm1190, %v1134, -inf
      %v1580 = vrot.slane %v1579, 4
      %v1581 = vmax.f32 %v1579, %v1580
      %v1582 = vrot.slane %v1581, 2
      %v1583 = vmax.f32 %v1581, %v1582
      %v1584 = vrot.slane %v1583, 1
      %v1585 = vmax.f32 %v1583, %v1584
      %v1586 = vmax.f32 %v1578, %v1585
      %v1587 = vsel %vm1190, %v1136, -inf
      %v1588 = vrot.slane %v1587, 4
      %v1589 = vmax.f32 %v1587, %v1588
      %v1590 = vrot.slane %v1589, 2
      %v1591 = vmax.f32 %v1589, %v1590
      %v1592 = vrot.slane %v1591, 1
      %v1593 = vmax.f32 %v1591, %v1592
      %v1594 = vmax.f32 %v1586, %v1593
      %v1595 = vsel %vm1222, %v1130, -inf
      %v1596 = vrot.slane %v1595, 4
      %v1597 = vmax.f32 %v1595, %v1596
      %v1598 = vrot.slane %v1597, 2
      %v1599 = vmax.f32 %v1597, %v1598
      %v1600 = vrot.slane %v1599, 1
      %v1601 = vmax.f32 %v1599, %v1600
      %v1602 = vsel %vm1222, %v1132, -inf
      %v1603 = vrot.slane %v1602, 4
      %v1604 = vmax.f32 %v1602, %v1603
      %v1605 = vrot.slane %v1604, 2
      %v1606 = vmax.f32 %v1604, %v1605
      %v1607 = vrot.slane %v1606, 1
      %v1608 = vmax.f32 %v1606, %v1607
      %v1609 = vmax.f32 %v1601, %v1608
      %v1610 = vsel %vm1222, %v1134, -inf
      %v1611 = vrot.slane %v1610, 4
      %v1612 = vmax.f32 %v1610, %v1611
      %v1613 = vrot.slane %v1612, 2
      %v1614 = vmax.f32 %v1612, %v1613
      %v1615 = vrot.slane %v1614, 1
      %v1616 = vmax.f32 %v1614, %v1615
      %v1617 = vmax.f32 %v1609, %v1616
      %v1618 = vsel %vm1222, %v1136, -inf
      %v1619 = vrot.slane %v1618, 4
      %v1620 = vmax.f32 %v1618, %v1619
      %v1621 = vrot.slane %v1620, 2
      %v1622 = vmax.f32 %v1620, %v1621
      %v1623 = vrot.slane %v1622, 1
      %v1624 = vmax.f32 %v1622, %v1623
      %v1625 = vmax.f32 %v1617, %v1624
      %v1626 = vsel %vm1190, %v1131, -inf
      %v1627 = vrot.slane %v1626, 4
      %v1628 = vmax.f32 %v1626, %v1627
      %v1629 = vrot.slane %v1628, 2
      %v1630 = vmax.f32 %v1628, %v1629
      %v1631 = vrot.slane %v1630, 1
      %v1632 = vmax.f32 %v1630, %v1631
      %v1633 = vsel %vm1190, %v1133, -inf
      %v1634 = vrot.slane %v1633, 4
      %v1635 = vmax.f32 %v1633, %v1634
      %v1636 = vrot.slane %v1635, 2
      %v1637 = vmax.f32 %v1635, %v1636
      %v1638 = vrot.slane %v1637, 1
      %v1639 = vmax.f32 %v1637, %v1638
      %v1640 = vmax.f32 %v1632, %v1639
      %v1641 = vsel %vm1190, %v1135, -inf
      %v1642 = vrot.slane %v1641, 4
      %v1643 = vmax.f32 %v1641, %v1642
      %v1644 = vrot.slane %v1643, 2
      %v1645 = vmax.f32 %v1643, %v1644
      %v1646 = vrot.slane %v1645, 1
      %v1647 = vmax.f32 %v1645, %v1646
      %v1648 = vmax.f32 %v1640, %v1647
      %v1649 = vsel %vm1190, %v1137, -inf
      %v1650 = vrot.slane %v1649, 4
      %v1651 = vmax.f32 %v1649, %v1650
      %v1652 = vrot.slane %v1651, 2
      %v1653 = vmax.f32 %v1651, %v1652
      %v1654 = vrot.slane %v1653, 1
      %v1655 = vmax.f32 %v1653, %v1654
      %v1656 = vmax.f32 %v1648, %v1655
      %v1657 = vsel %vm1222, %v1131, -inf
      %v1658 = vrot.slane %v1657, 4
      %v1659 = vmax.f32 %v1657, %v1658
      %v1660 = vrot.slane %v1659, 2
      %v1661 = vmax.f32 %v1659, %v1660
      %v1662 = vrot.slane %v1661, 1
      %v1663 = vmax.f32 %v1661, %v1662
      %v1664 = vsel %vm1222, %v1133, -inf
      %v1665 = vrot.slane %v1664, 4
      %v1666 = vmax.f32 %v1664, %v1665
      %v1667 = vrot.slane %v1666, 2
      %v1668 = vmax.f32 %v1666, %v1667
      %v1669 = vrot.slane %v1668, 1
      %v1670 = vmax.f32 %v1668, %v1669
      %v1671 = vmax.f32 %v1663, %v1670
      %v1672 = vsel %vm1222, %v1135, -inf
      %v1673 = vrot.slane %v1672, 4
      %v1674 = vmax.f32 %v1672, %v1673
      %v1675 = vrot.slane %v1674, 2
      %v1676 = vmax.f32 %v1674, %v1675
      %v1677 = vrot.slane %v1676, 1
      %v1678 = vmax.f32 %v1676, %v1677
      %v1679 = vmax.f32 %v1671, %v1678
      %v1680 = vsel %vm1222, %v1137, -inf
      %v1681 = vrot.slane %v1680, 4
      %v1682 = vmax.f32 %v1680, %v1681
      %v1683 = vrot.slane %v1682, 2
      %v1684 = vmax.f32 %v1682, %v1683
      %v1685 = vrot.slane %v1684, 1
      %v1686 = vmax.f32 %v1684, %v1685
      %v1687 = vmax.f32 %v1679, %v1686
      %vm1688 = vcmask 1040384
      %v1689 = vsel %vm1688, %v1221, %v1253
      %vm1690 = vcmask 1041408
      %v1691 = vsel %vm1690, %v1689, %v1284
      %vm1692 = vcmask 1042432
      %v1693 = vsel %vm1692, %v1691, %v1315
      %v1694 = vsel %vm405, %v1693, %v1346
      %vm1695 = vcmask 1044480
      %v1696 = vsel %vm1695, %v1694, %v1377
      %vm1697 = vcmask 1045504
      %v1698 = vsel %vm1697, %v1696, %v1408
      %vm1699 = vcmask 1046528
      %v1700 = vsel %vm1699, %v1698, %v1439
      %v1701 = vsel %vm1688, %v1470, %v1501
      %v1702 = vsel %vm1690, %v1701, %v1532
      %v1703 = vsel %vm1692, %v1702, %v1563
      %v1704 = vsel %vm405, %v1703, %v1594
      %v1705 = vsel %vm1695, %v1704, %v1625
      %v1706 = vsel %vm1697, %v1705, %v1656
      %v1707 = vsel %vm1699, %v1706, %v1687
      %1708 = vst.msk [vmem:[%s232] sm:$0xff] %vm356, %v1700
      %1709 = vst.msk [vmem:[%s232 + $0x8] sm:$0xff] %vm356, %v1707
      %p1710 = scmp.lt.s32.totalorder %s17, 7
      %s1711 = scalar_select %p1710, %s17, 7
      %s1712 = smul.addr %s1711, 2
      %s1713 = smul.addr %s1712, 8
      %s1714 = scalar_lea.vmem %s4, %s1713
      %p1715 = scmp.lt.s32.totalorder %s17, 7
      %s1716 = scalar_select %p1715, %s17, 7
      %s1717 = smul.addr %s1716, 2
      %s1718 = smul.addr %s1717, 8
      %s1719 = scalar_lea.vmem %s5, %s1718
      // Predicated region
      $region37: #{ta_block_forward.2} parent=35 // pred_check
        %p1720 = pneg %p124
      $region38: #{ta_block_forward.2} parent=35 // pred_check_branch
        %1722 = sbr.rel (%p1720) target = $region40
      $region39: #{ta_block_forward.2} parent=35 // pred_region
        _
      $region40: #{ta_block_forward.2} parent=35 // pred_fallthru
        _
      // Predicated region
      $region41: #{ta_block_forward.2} parent=35 // pred_check
        %p1723 = pneg %p150
      $region42: #{ta_block_forward.2} parent=35 // pred_check_branch
        %1725 = sbr.rel (%p1723) target = $region44
      $region43: #{ta_block_forward.2} parent=35 // pred_region
        _
      $region44: #{ta_block_forward.2} parent=35 // pred_fallthru
        _
    $region36: #{ta_block_forward.2} parent=5 // pred_fallthru
      _
    %p1726 = scmp.le.s32.totalorder 2, %s12
    // Predicated region
    $region45: #{ta_block_forward.2} parent=5 // pred_check
      %p1727 = pneg %p1726
    $region46: #{ta_block_forward.2} parent=5 // pred_check_branch
      %1729 = sbr.rel (%p1727) target = $region48
    $region47: #{ta_block_forward.2} parent=5 // pred_region
      %s1730 = ssub.s32 %s12, 2
      // Predicated region
      $region49: #{ta_block_forward.2} parent=47 // pred_check
        %p1731 = pneg %p130
      $region50: #{ta_block_forward.2} parent=47 // pred_check_branch
        %1733 = sbr.rel (%p1731) target = $region52
      $region51: #{ta_block_forward.2} parent=47 // pred_region
        %p1734 = scmp.lt.s32.totalorder %s18, 7
        %s1735 = scalar_select %p1734, %s18, 7
        %s1736 = smul.addr %s1735, 2
        %s1737 = smul.addr %s1736, 8
        %s1738 = scalar_lea.vmem %s4, %s1737
      $region52: #{ta_block_forward.2} parent=47 // pred_fallthru
        _
      // Predicated region
      $region53: #{ta_block_forward.2} parent=47 // pred_check
        %p1739 = pneg %p156
      $region54: #{ta_block_forward.2} parent=47 // pred_check_branch
        %1741 = sbr.rel (%p1739) target = $region56
      $region55: #{ta_block_forward.2} parent=47 // pred_region
        %p1742 = scmp.lt.s32.totalorder %s18, 7
        %s1743 = scalar_select %p1742, %s18, 7
        %s1744 = smul.addr %s1743, 2
        %s1745 = smul.addr %s1744, 8
        %s1746 = scalar_lea.vmem %s5, %s1745
      $region56: #{ta_block_forward.2} parent=47 // pred_fallthru
        _
    $region48: #{ta_block_forward.2} parent=5 // pred_fallthru
      _
  $region6: #{ta_block_forward.2} parent=0 // loop_footer
    %s16 = sadd.s32 1, %s12
  $region7: #{ta_block_forward.2} parent=0 // loop_footer_branch
    %11 = sbr.rel target = $region3
  $region8: #{ta_block_forward.2} parent=0 // loop_exit
    _

// kernel: ta_block_forward.3
$region0: #{ta_block_forward.3}
  #allocation0 [shape = 'u32[]', space=smem, size = 0x4, offset = 0x4, fixed_abs, tag = 'smem constant byte address 0x4 - core index']
  #allocation1 [shape = 'u32[72,128]{1,0:T(1,128)}', space=vmem, size = 0x9000, scoped, tag = 'internal scratch']
  %s0 = inlined_call_operand.vmem [shape: f32[2,4,16,8], index: 0, kind: input, shape index: {}]
  %s1 = inlined_call_operand.vmem [shape: f32[2,4,16,8], index: 1, kind: input, shape index: {}]
  %s2 = inlined_call_operand.vmem [shape: f32[2,48,1], index: 2, kind: input, shape index: {}]
  %s3 = inlined_call_operand.vmem [shape: f32[2,32,1], index: 3, kind: input, shape index: {}]
  %s4 = inlined_call_operand.vmem [shape: f32[1,8], index: 4, kind: input, shape index: {}]
  %s5 = inlined_call_operand.vmem [shape: f32[1,8], index: 5, kind: input, shape index: {}]
  %s6 = inlined_call_operand.vmem [shape: f32[8,8], index: 6, kind: input, shape index: {}]
  %s7 = inlined_call_operand.vmem [shape: f32[8,8], index: 7, kind: input, shape index: {}]
  %s8 = inlined_call_operand.vmem [shape: f32[1,8], index: 8, kind: input, shape index: {}]
  %s9 = inlined_call_operand.vmem [shape: f32[8,8], index: 9, kind: input, shape index: {}]
  %s10 = inlined_call_operand.vmem [shape: f32[1,8], index: 10, kind: input, shape index: {}]
  %s11 = inlined_call_operand.vmem [shape: f32[8,8], index: 11, kind: input, shape index: {}]
  %s12 = inlined_call_operand.vmem [shape: f32[1,8], index: 12, kind: input, shape index: {}]
  %s13 = inlined_call_operand.vmem [shape: f32[16,256], index: 13, kind: input, shape index: {}]
  %s14 = inlined_call_operand.vmem [shape: f32[2,8,256], index: 14, kind: input, shape index: {}]
  %s15 = inlined_call_operand.vmem [shape: f32[2,2,8,256], index: 15, kind: output, shape index: {}]
  %s16 = sld [smem:[#allocation0]]
  $region93: #{ta_block_forward.3} parent=0
    _
  %s18 = ssub.s32 1, %s16
  %s19 = scalar_select 0, %s18, %s16
  loop: start=0, step=1, limit=4
  $region2: #{ta_block_forward.3} parent=0 // loop_pre_header
    _
  $region3: #{ta_block_forward.3} parent=0 // loop_header
    %s21 = sphi 0, %s25
    %p22 = scmp.ge.s32.totalorder %s21, 4
    %s31 = sphi 0, %s33
    %s34 = sphi 0, %s31
    %s35 = sphi 0, %s34
    %s51 = sphi 0, %s35
    %s57 = sphi 0, %s59
    %s60 = sphi 0, %s57
    %s61 = sphi 0, %s60
    %s77 = sphi 0, %s61
    %s83 = sphi 0, %s85
    %s86 = sphi 0, %s83
    %s87 = sphi 0, %s86
    %s103 = sphi 0, %s87
    %s109 = sphi 0, %s111
    %s112 = sphi 0, %s109
    %s113 = sphi 0, %s112
    %s129 = sphi 0, %s113
    %s133 = sphi 0, %s133
    %s135 = sphi 0, %s133
    %s136 = sphi 0, %s135
    %s150 = sphi 0, %s136
    %s154 = sphi 0, %s154
    %s156 = sphi 0, %s154
    %s157 = sphi 0, %s156
    %s171 = sphi 0, %s157
    %s175 = sphi 0, %s175
    %s177 = sphi 0, %s175
    %s178 = sphi 0, %s177
    %s192 = sphi 0, %s178
    %s196 = sphi 0, %s196
    %s198 = sphi 0, %s196
    %s199 = sphi 0, %s198
    %s213 = sphi 0, %s199
    %s217 = sphi 0, %s217
    %s219 = sphi 0, %s217
    %s220 = sphi 0, %s219
    %s234 = sphi 0, %s220
    %s238 = sphi 0, %s238
    %s240 = sphi 0, %s238
    %s241 = sphi 0, %s240
    %s255 = sphi 0, %s241
    %s259 = sphi 0, %s259
    %s261 = sphi 0, %s259
    %s262 = sphi 0, %s261
    %s276 = sphi 0, %s262
    %s280 = sphi 0, %s280
    %s282 = sphi 0, %s280
    %s283 = sphi 0, %s282
    %s297 = sphi 0, %s283
    %s301 = sphi 0, %s301
    %s303 = sphi 0, %s301
    %s304 = sphi 0, %s303
    %s318 = sphi 0, %s304
    %s322 = sphi 0, %s322
    %s324 = sphi 0, %s322
    %s325 = sphi 0, %s324
    %s339 = sphi 0, %s325
    %s345 = sphi 0, %s347
    %s348 = sphi 0, %s345
    %s349 = sphi 0, %s348
    %s365 = sphi 0, %s349
    %s371 = sphi 0, %s373
    %s374 = sphi 0, %s371
    %s375 = sphi 0, %s374
    %s391 = sphi 0, %s375
  $region4: #{ta_block_forward.3} parent=0 // loop_header_branch
    %24 = sbr.rel (%p22) target = $region8
  $region5: #{ta_block_forward.3} parent=0 // loop_body
    %s26 = ssub.s32 %s21, 1
    %s27 = ssub.s32 %s21, 2
    %s28 = sadd.s32 %s21, 1
    %s29 = ssub.s32 %s21, %s28
    %p30 = scmp.eq.s32.totalorder %s29, 0
    %s32 = sadd.s32 %s31, 1
    %s33 = scalar_select %p30, %s31, %s32
    %p36 = pneg %p30
    %p37 = scmp.eq.s32.totalorder %s21, 1
    %p38 = por %p36, %p37
    %p39 = scmp.ne.s32.totalorder %s31, %s34
    %p40 = scmp.eq.s32.totalorder %s21, 0
    %p41 = por %p39, %p40
    %p42 = scmp.ne.s32.totalorder %s31, %s34
    %p43 = scmp.eq.s32.totalorder %s26, 1
    %p44 = por %p42, %p43
    %p45 = scmp.ne.s32.totalorder %s34, %s35
    %p46 = scmp.eq.s32.totalorder %s26, 0
    %p47 = por %p45, %p46
    %p48 = scmp.ne.s32.totalorder %s34, %s35
    %p49 = scmp.eq.s32.totalorder %s27, 1
    %p50 = por %p48, %p49
    %p52 = scmp.ne.s32.totalorder %s35, %s51
    %p53 = scmp.eq.s32.totalorder %s27, 0
    %p54 = por %p52, %p53
    %s55 = ssub.s32 %s21, %s28
    %p56 = scmp.eq.s32.totalorder %s55, 0
    %s58 = sadd.s32 %s57, 1
    %s59 = scalar_select %p56, %s57, %s58
    %p62 = pneg %p56
    %p63 = scmp.eq.s32.totalorder %s21, 1
    %p64 = por %p62, %p63
    %p65 = scmp.ne.s32.totalorder %s57, %s60
    %p66 = scmp.eq.s32.totalorder %s21, 0
    %p67 = por %p65, %p66
    %p68 = scmp.ne.s32.totalorder %s57, %s60
    %p69 = scmp.eq.s32.totalorder %s26, 1
    %p70 = por %p68, %p69
    %p71 = scmp.ne.s32.totalorder %s60, %s61
    %p72 = scmp.eq.s32.totalorder %s26, 0
    %p73 = por %p71, %p72
    %p74 = scmp.ne.s32.totalorder %s60, %s61
    %p75 = scmp.eq.s32.totalorder %s27, 1
    %p76 = por %p74, %p75
    %p78 = scmp.ne.s32.totalorder %s61, %s77
    %p79 = scmp.eq.s32.totalorder %s27, 0
    %p80 = por %p78, %p79
    %s81 = ssub.s32 %s21, %s28
    %p82 = scmp.eq.s32.totalorder %s81, 0
    %s84 = sadd.s32 %s83, 1
    %s85 = scalar_select %p82, %s83, %s84
    %p88 = pneg %p82
    %p89 = scmp.eq.s32.totalorder %s21, 1
    %p90 = por %p88, %p89
    %p91 = scmp.ne.s32.totalorder %s83, %s86
    %p92 = scmp.eq.s32.totalorder %s21, 0
    %p93 = por %p91, %p92
    %p94 = scmp.ne.s32.totalorder %s83, %s86
    %p95 = scmp.eq.s32.totalorder %s26, 1
    %p96 = por %p94, %p95
    %p97 = scmp.ne.s32.totalorder %s86, %s87
    %p98 = scmp.eq.s32.totalorder %s26, 0
    %p99 = por %p97, %p98
    %p100 = scmp.ne.s32.totalorder %s86, %s87
    %p101 = scmp.eq.s32.totalorder %s27, 1
    %p102 = por %p100, %p101
    %p104 = scmp.ne.s32.totalorder %s87, %s103
    %p105 = scmp.eq.s32.totalorder %s27, 0
    %p106 = por %p104, %p105
    %s107 = ssub.s32 %s21, %s28
    %p108 = scmp.eq.s32.totalorder %s107, 0
    %s110 = sadd.s32 %s109, 1
    %s111 = scalar_select %p108, %s109, %s110
    %p114 = pneg %p108
    %p115 = scmp.eq.s32.totalorder %s21, 1
    %p116 = por %p114, %p115
    %p117 = scmp.ne.s32.totalorder %s109, %s112
    %p118 = scmp.eq.s32.totalorder %s21, 0
    %p119 = por %p117, %p118
    %p120 = scmp.ne.s32.totalorder %s109, %s112
    %p121 = scmp.eq.s32.totalorder %s26, 1
    %p122 = por %p120, %p121
    %p123 = scmp.ne.s32.totalorder %s112, %s113
    %p124 = scmp.eq.s32.totalorder %s26, 0
    %p125 = por %p123, %p124
    %p126 = scmp.ne.s32.totalorder %s112, %s113
    %p127 = scmp.eq.s32.totalorder %s27, 1
    %p128 = por %p126, %p127
    %p130 = scmp.ne.s32.totalorder %s113, %s129
    %p131 = scmp.eq.s32.totalorder %s27, 0
    %p132 = por %p130, %p131
    %s134 = sadd.s32 %s133, 1
    %p137 = scmp.eq.s32.totalorder %s21, 1
    %p138 = scmp.ne.s32.totalorder %s133, %s135
    %p139 = scmp.eq.s32.totalorder %s21, 0
    %p140 = por %p138, %p139
    %p141 = scmp.ne.s32.totalorder %s133, %s135
    %p142 = scmp.eq.s32.totalorder %s26, 1
    %p143 = por %p141, %p142
    %p144 = scmp.ne.s32.totalorder %s135, %s136
    %p145 = scmp.eq.s32.totalorder %s26, 0
    %p146 = por %p144, %p145
    %p147 = scmp.ne.s32.totalorder %s135, %s136
    %p148 = scmp.eq.s32.totalorder %s27, 1
    %p149 = por %p147, %p148
    %p151 = scmp.ne.s32.totalorder %s136, %s150
    %p152 = scmp.eq.s32.totalorder %s27, 0
    %p153 = por %p151, %p152
    %s155 = sadd.s32 %s154, 1
    %p158 = scmp.eq.s32.totalorder %s21, 1
    %p159 = scmp.ne.s32.totalorder %s154, %s156
    %p160 = scmp.eq.s32.totalorder %s21, 0
    %p161 = por %p159, %p160
    %p162 = scmp.ne.s32.totalorder %s154, %s156
    %p163 = scmp.eq.s32.totalorder %s26, 1
    %p164 = por %p162, %p163
    %p165 = scmp.ne.s32.totalorder %s156, %s157
    %p166 = scmp.eq.s32.totalorder %s26, 0
    %p167 = por %p165, %p166
    %p168 = scmp.ne.s32.totalorder %s156, %s157
    %p169 = scmp.eq.s32.totalorder %s27, 1
    %p170 = por %p168, %p169
    %p172 = scmp.ne.s32.totalorder %s157, %s171
    %p173 = scmp.eq.s32.totalorder %s27, 0
    %p174 = por %p172, %p173
    %s176 = sadd.s32 %s175, 1
    %p179 = scmp.eq.s32.totalorder %s21, 1
    %p180 = scmp.ne.s32.totalorder %s175, %s177
    %p181 = scmp.eq.s32.totalorder %s21, 0
    %p182 = por %p180, %p181
    %p183 = scmp.ne.s32.totalorder %s175, %s177
    %p184 = scmp.eq.s32.totalorder %s26, 1
    %p185 = por %p183, %p184
    %p186 = scmp.ne.s32.totalorder %s177, %s178
    %p187 = scmp.eq.s32.totalorder %s26, 0
    %p188 = por %p186, %p187
    %p189 = scmp.ne.s32.totalorder %s177, %s178
    %p190 = scmp.eq.s32.totalorder %s27, 1
    %p191 = por %p189, %p190
    %p193 = scmp.ne.s32.totalorder %s178, %s192
    %p194 = scmp.eq.s32.totalorder %s27, 0
    %p195 = por %p193, %p194
    %s197 = sadd.s32 %s196, 1
    %p200 = scmp.eq.s32.totalorder %s21, 1
    %p201 = scmp.ne.s32.totalorder %s196, %s198
    %p202 = scmp.eq.s32.totalorder %s21, 0
    %p203 = por %p201, %p202
    %p204 = scmp.ne.s32.totalorder %s196, %s198
    %p205 = scmp.eq.s32.totalorder %s26, 1
    %p206 = por %p204, %p205
    %p207 = scmp.ne.s32.totalorder %s198, %s199
    %p208 = scmp.eq.s32.totalorder %s26, 0
    %p209 = por %p207, %p208
    %p210 = scmp.ne.s32.totalorder %s198, %s199
    %p211 = scmp.eq.s32.totalorder %s27, 1
    %p212 = por %p210, %p211
    %p214 = scmp.ne.s32.totalorder %s199, %s213
    %p215 = scmp.eq.s32.totalorder %s27, 0
    %p216 = por %p214, %p215
    %s218 = sadd.s32 %s217, 1
    %p221 = scmp.eq.s32.totalorder %s21, 1
    %p222 = scmp.ne.s32.totalorder %s217, %s219
    %p223 = scmp.eq.s32.totalorder %s21, 0
    %p224 = por %p222, %p223
    %p225 = scmp.ne.s32.totalorder %s217, %s219
    %p226 = scmp.eq.s32.totalorder %s26, 1
    %p227 = por %p225, %p226
    %p228 = scmp.ne.s32.totalorder %s219, %s220
    %p229 = scmp.eq.s32.totalorder %s26, 0
    %p230 = por %p228, %p229
    %p231 = scmp.ne.s32.totalorder %s219, %s220
    %p232 = scmp.eq.s32.totalorder %s27, 1
    %p233 = por %p231, %p232
    %p235 = scmp.ne.s32.totalorder %s220, %s234
    %p236 = scmp.eq.s32.totalorder %s27, 0
    %p237 = por %p235, %p236
    %s239 = sadd.s32 %s238, 1
    %p242 = scmp.eq.s32.totalorder %s21, 1
    %p243 = scmp.ne.s32.totalorder %s238, %s240
    %p244 = scmp.eq.s32.totalorder %s21, 0
    %p245 = por %p243, %p244
    %p246 = scmp.ne.s32.totalorder %s238, %s240
    %p247 = scmp.eq.s32.totalorder %s26, 1
    %p248 = por %p246, %p247
    %p249 = scmp.ne.s32.totalorder %s240, %s241
    %p250 = scmp.eq.s32.totalorder %s26, 0
    %p251 = por %p249, %p250
    %p252 = scmp.ne.s32.totalorder %s240, %s241
    %p253 = scmp.eq.s32.totalorder %s27, 1
    %p254 = por %p252, %p253
    %p256 = scmp.ne.s32.totalorder %s241, %s255
    %p257 = scmp.eq.s32.totalorder %s27, 0
    %p258 = por %p256, %p257
    %s260 = sadd.s32 %s259, 1
    %p263 = scmp.eq.s32.totalorder %s21, 1
    %p264 = scmp.ne.s32.totalorder %s259, %s261
    %p265 = scmp.eq.s32.totalorder %s21, 0
    %p266 = por %p264, %p265
    %p267 = scmp.ne.s32.totalorder %s259, %s261
    %p268 = scmp.eq.s32.totalorder %s26, 1
    %p269 = por %p267, %p268
    %p270 = scmp.ne.s32.totalorder %s261, %s262
    %p271 = scmp.eq.s32.totalorder %s26, 0
    %p272 = por %p270, %p271
    %p273 = scmp.ne.s32.totalorder %s261, %s262
    %p274 = scmp.eq.s32.totalorder %s27, 1
    %p275 = por %p273, %p274
    %p277 = scmp.ne.s32.totalorder %s262, %s276
    %p278 = scmp.eq.s32.totalorder %s27, 0
    %p279 = por %p277, %p278
    %s281 = sadd.s32 %s280, 1
    %p284 = scmp.eq.s32.totalorder %s21, 1
    %p285 = scmp.ne.s32.totalorder %s280, %s282
    %p286 = scmp.eq.s32.totalorder %s21, 0
    %p287 = por %p285, %p286
    %p288 = scmp.ne.s32.totalorder %s280, %s282
    %p289 = scmp.eq.s32.totalorder %s26, 1
    %p290 = por %p288, %p289
    %p291 = scmp.ne.s32.totalorder %s282, %s283
    %p292 = scmp.eq.s32.totalorder %s26, 0
    %p293 = por %p291, %p292
    %p294 = scmp.ne.s32.totalorder %s282, %s283
    %p295 = scmp.eq.s32.totalorder %s27, 1
    %p296 = por %p294, %p295
    %p298 = scmp.ne.s32.totalorder %s283, %s297
    %p299 = scmp.eq.s32.totalorder %s27, 0
    %p300 = por %p298, %p299
    %s302 = sadd.s32 %s301, 1
    %p305 = scmp.eq.s32.totalorder %s21, 1
    %p306 = scmp.ne.s32.totalorder %s301, %s303
    %p307 = scmp.eq.s32.totalorder %s21, 0
    %p308 = por %p306, %p307
    %p309 = scmp.ne.s32.totalorder %s301, %s303
    %p310 = scmp.eq.s32.totalorder %s26, 1
    %p311 = por %p309, %p310
    %p312 = scmp.ne.s32.totalorder %s303, %s304
    %p313 = scmp.eq.s32.totalorder %s26, 0
    %p314 = por %p312, %p313
    %p315 = scmp.ne.s32.totalorder %s303, %s304
    %p316 = scmp.eq.s32.totalorder %s27, 1
    %p317 = por %p315, %p316
    %p319 = scmp.ne.s32.totalorder %s304, %s318
    %p320 = scmp.eq.s32.totalorder %s27, 0
    %p321 = por %p319, %p320
    %s323 = sadd.s32 %s322, 1
    %p326 = scmp.eq.s32.totalorder %s21, 1
    %p327 = scmp.ne.s32.totalorder %s322, %s324
    %p328 = scmp.eq.s32.totalorder %s21, 0
    %p329 = por %p327, %p328
    %p330 = scmp.ne.s32.totalorder %s322, %s324
    %p331 = scmp.eq.s32.totalorder %s26, 1
    %p332 = por %p330, %p331
    %p333 = scmp.ne.s32.totalorder %s324, %s325
    %p334 = scmp.eq.s32.totalorder %s26, 0
    %p335 = por %p333, %p334
    %p336 = scmp.ne.s32.totalorder %s324, %s325
    %p337 = scmp.eq.s32.totalorder %s27, 1
    %p338 = por %p336, %p337
    %p340 = scmp.ne.s32.totalorder %s325, %s339
    %p341 = scmp.eq.s32.totalorder %s27, 0
    %p342 = por %p340, %p341
    %s343 = ssub.s32 %s21, %s28
    %p344 = scmp.eq.s32.totalorder %s343, 0
    %s346 = sadd.s32 %s345, 1
    %s347 = scalar_select %p344, %s345, %s346
    %p350 = pneg %p344
    %p351 = scmp.eq.s32.totalorder %s21, 1
    %p352 = por %p350, %p351
    %p353 = scmp.ne.s32.totalorder %s345, %s348
    %p354 = scmp.eq.s32.totalorder %s21, 0
    %p355 = por %p353, %p354
    %p356 = scmp.ne.s32.totalorder %s345, %s348
    %p357 = scmp.eq.s32.totalorder %s26, 1
    %p358 = por %p356, %p357
    %p359 = scmp.ne.s32.totalorder %s348, %s349
    %p360 = scmp.eq.s32.totalorder %s26, 0
    %p361 = por %p359, %p360
    %p362 = scmp.ne.s32.totalorder %s348, %s349
    %p363 = scmp.eq.s32.totalorder %s27, 1
    %p364 = por %p362, %p363
    %p366 = scmp.ne.s32.totalorder %s349, %s365
    %p367 = scmp.eq.s32.totalorder %s27, 0
    %p368 = por %p366, %p367
    %s369 = ssub.s32 %s21, %s28
    %p370 = scmp.eq.s32.totalorder %s369, 0
    %s372 = sadd.s32 %s371, 1
    %s373 = scalar_select %p370, %s371, %s372
    %p376 = pneg %p370
    %p377 = scmp.eq.s32.totalorder %s21, 1
    %p378 = por %p376, %p377
    %p379 = scmp.ne.s32.totalorder %s371, %s374
    %p380 = scmp.eq.s32.totalorder %s21, 0
    %p381 = por %p379, %p380
    %p382 = scmp.ne.s32.totalorder %s371, %s374
    %p383 = scmp.eq.s32.totalorder %s26, 1
    %p384 = por %p382, %p383
    %p385 = scmp.ne.s32.totalorder %s374, %s375
    %p386 = scmp.eq.s32.totalorder %s26, 0
    %p387 = por %p385, %p386
    %p388 = scmp.ne.s32.totalorder %s374, %s375
    %p389 = scmp.eq.s32.totalorder %s27, 1
    %p390 = por %p388, %p389
    %p392 = scmp.ne.s32.totalorder %s375, %s391
    %p393 = scmp.eq.s32.totalorder %s27, 0
    %p394 = por %p392, %p393
    %p395 = scmp.le.s32.totalorder 1, %s21
    %p396 = scmp.lt.s32.totalorder %s21, 3
    %p397 = pnand %p395, %p396
    %p398 = pneg %p397
    // Predicated region
    $region9: #{ta_block_forward.3} parent=5 // pred_check
      _
    $region10: #{ta_block_forward.3} parent=5 // pred_check_branch
      %400 = sbr.rel (%p397) target = $region12
    $region11: #{ta_block_forward.3} parent=5 // pred_region
      %s401 = ssub.s32 %s21, 1
      // Predicated region
      $region13: #{ta_block_forward.3} parent=11 // pred_check
        %p402 = pneg %p146
      $region14: #{ta_block_forward.3} parent=11 // pred_check_branch
        %404 = sbr.rel (%p402) target = $region16
      $region15: #{ta_block_forward.3} parent=11 // pred_region
        _
      $region16: #{ta_block_forward.3} parent=11 // pred_fallthru
        _
      // Predicated region
      $region17: #{ta_block_forward.3} parent=11 // pred_check
        %p405 = pneg %p167
      $region18: #{ta_block_forward.3} parent=11 // pred_check_branch
        %407 = sbr.rel (%p405) target = $region20
      $region19: #{ta_block_forward.3} parent=11 // pred_region
        _
      $region20: #{ta_block_forward.3} parent=11 // pred_fallthru
        _
      // Predicated region
      $region21: #{ta_block_forward.3} parent=11 // pred_check
        %p408 = pneg %p188
      $region22: #{ta_block_forward.3} parent=11 // pred_check_branch
        %410 = sbr.rel (%p408) target = $region24
      $region23: #{ta_block_forward.3} parent=11 // pred_region
        _
      $region24: #{ta_block_forward.3} parent=11 // pred_fallthru
        _
      // Predicated region
      $region25: #{ta_block_forward.3} parent=11 // pred_check
        %p411 = pneg %p209
      $region26: #{ta_block_forward.3} parent=11 // pred_check_branch
        %413 = sbr.rel (%p411) target = $region28
      $region27: #{ta_block_forward.3} parent=11 // pred_region
        _
      $region28: #{ta_block_forward.3} parent=11 // pred_fallthru
        _
      // Predicated region
      $region29: #{ta_block_forward.3} parent=11 // pred_check
        %p414 = pneg %p230
      $region30: #{ta_block_forward.3} parent=11 // pred_check_branch
        %416 = sbr.rel (%p414) target = $region32
      $region31: #{ta_block_forward.3} parent=11 // pred_region
        _
      $region32: #{ta_block_forward.3} parent=11 // pred_fallthru
        _
      // Predicated region
      $region33: #{ta_block_forward.3} parent=11 // pred_check
        %p417 = pneg %p251
      $region34: #{ta_block_forward.3} parent=11 // pred_check_branch
        %419 = sbr.rel (%p417) target = $region36
      $region35: #{ta_block_forward.3} parent=11 // pred_region
        _
      $region36: #{ta_block_forward.3} parent=11 // pred_fallthru
        _
      // Predicated region
      $region37: #{ta_block_forward.3} parent=11 // pred_check
        %p420 = pneg %p272
      $region38: #{ta_block_forward.3} parent=11 // pred_check_branch
        %422 = sbr.rel (%p420) target = $region40
      $region39: #{ta_block_forward.3} parent=11 // pred_region
        _
      $region40: #{ta_block_forward.3} parent=11 // pred_fallthru
        _
      // Predicated region
      $region41: #{ta_block_forward.3} parent=11 // pred_check
        %p423 = pneg %p293
      $region42: #{ta_block_forward.3} parent=11 // pred_check_branch
        %425 = sbr.rel (%p423) target = $region44
      $region43: #{ta_block_forward.3} parent=11 // pred_region
        _
      $region44: #{ta_block_forward.3} parent=11 // pred_fallthru
        _
      // Predicated region
      $region45: #{ta_block_forward.3} parent=11 // pred_check
        %p426 = pneg %p314
      $region46: #{ta_block_forward.3} parent=11 // pred_check_branch
        %428 = sbr.rel (%p426) target = $region48
      $region47: #{ta_block_forward.3} parent=11 // pred_region
        _
      $region48: #{ta_block_forward.3} parent=11 // pred_fallthru
        _
      // Predicated region
      $region49: #{ta_block_forward.3} parent=11 // pred_check
        %p429 = pneg %p335
      $region50: #{ta_block_forward.3} parent=11 // pred_check_branch
        %431 = sbr.rel (%p429) target = $region52
      $region51: #{ta_block_forward.3} parent=11 // pred_region
        _
      $region52: #{ta_block_forward.3} parent=11 // pred_fallthru
        _
    $region12: #{ta_block_forward.3} parent=5 // pred_fallthru
      _
    %p432 = scmp.lt.s32.totalorder %s21, 2
    // Predicated region
    $region53: #{ta_block_forward.3} parent=5 // pred_check
      %p433 = pneg %p432
    $region54: #{ta_block_forward.3} parent=5 // pred_check_branch
      %435 = sbr.rel (%p433) target = $region56
    $region55: #{ta_block_forward.3} parent=5 // pred_region
      // Predicated region
      $region57: #{ta_block_forward.3} parent=55 // pred_check
        %p436 = pneg %p41
      $region58: #{ta_block_forward.3} parent=55 // pred_check_branch
        %438 = sbr.rel (%p436) target = $region60
      $region59: #{ta_block_forward.3} parent=55 // pred_region
        %p439 = scmp.lt.s32.totalorder %s21, 1
        %s440 = scalar_select %p439, %s21, 1
        %s441 = smul.addr %s440, 8
        %s442 = smul.addr %s441, 8
        %s443 = scalar_lea.vmem %s0, %s442
      $region60: #{ta_block_forward.3} parent=55 // pred_fallthru
        _
      // Predicated region
      $region61: #{ta_block_forward.3} parent=55 // pred_check
        %p444 = pneg %p67
      $region62: #{ta_block_forward.3} parent=55 // pred_check_branch
        %446 = sbr.rel (%p444) target = $region64
      $region63: #{ta_block_forward.3} parent=55 // pred_region
        %p447 = scmp.lt.s32.totalorder %s21, 1
        %s448 = scalar_select %p447, %s21, 1
        %s449 = smul.addr %s448, 8
        %s450 = smul.addr %s449, 8
        %s451 = scalar_lea.vmem %s1, %s450
      $region64: #{ta_block_forward.3} parent=55 // pred_fallthru
        _
      // Predicated region
      $region65: #{ta_block_forward.3} parent=55 // pred_check
        %p452 = pneg %p93
      $region66: #{ta_block_forward.3} parent=55 // pred_check_branch
        %454 = sbr.rel (%p452) target = $region68
      $region67: #{ta_block_forward.3} parent=55 // pred_region
        %p455 = scmp.lt.s32.totalorder %s21, 1
        %s456 = scalar_select %p455, %s21, 1
        %s457 = smul.addr %s456, 6
        %s458 = smul.addr %s457, 8
        %s459 = scalar_lea.vmem %s2, %s458
      $region68: #{ta_block_forward.3} parent=55 // pred_fallthru
        _
      // Predicated region
      $region69: #{ta_block_forward.3} parent=55 // pred_check
        %p460 = pneg %p119
      $region70: #{ta_block_forward.3} parent=55 // pred_check_branch
        %462 = sbr.rel (%p460) target = $region72
      $region71: #{ta_block_forward.3} parent=55 // pred_region
        %p463 = scmp.lt.s32.totalorder %s21, 1
        %s464 = scalar_select %p463, %s21, 1
        %s465 = smul.addr %s464, 4
        %s466 = smul.addr %s465, 8
        %s467 = scalar_lea.vmem %s3, %s466
      $region72: #{ta_block_forward.3} parent=55 // pred_fallthru
        _
      // Predicated region
      $region73: #{ta_block_forward.3} parent=55 // pred_check
        %p468 = pneg %p355
      $region74: #{ta_block_forward.3} parent=55 // pred_check_branch
        %470 = sbr.rel (%p468) target = $region76
      $region75: #{ta_block_forward.3} parent=55 // pred_region
        %p471 = scmp.lt.s32.totalorder %s21, 1
        %s472 = scalar_select %p471, %s21, 1
        %s473 = smul.addr %s472, 2
        %s474 = smul.addr %s473, 8
        %s475 = scalar_lea.vmem %s14, %s474
      $region76: #{ta_block_forward.3} parent=55 // pred_fallthru
        _
    $region56: #{ta_block_forward.3} parent=5 // pred_fallthru
      _
    %p476 = scmp.le.s32.totalorder 1, %s21
    %p477 = scmp.lt.s32.totalorder %s21, 3
    %p478 = pnand %p476, %p477
    %p479 = pneg %p478
    // Predicated region
    $region77: #{ta_block_forward.3} parent=5 // pred_check
      _
    $region78: #{ta_block_forward.3} parent=5 // pred_check_branch
      %481 = sbr.rel (%p478) target = $region80
    $region79: #{ta_block_forward.3} parent=5 // pred_region
      %s482 = ssub.s32 %s21, 1
      %p483 = scmp.lt.s32.totalorder %s26, 1
      %s484 = scalar_select %p483, %s26, 1
      %s485 = smul.addr %s484, 8
      %s486 = smul.addr %s485, 8
      %s487 = scalar_lea.vmem %s0, %s486
      %p488 = pneg %p47
      %p489 = pneg %p44
      %p490 = scmp.lt.s32.totalorder %s26, 1
      %s491 = scalar_select %p490, %s26, 1
      %s492 = smul.addr %s491, 8
      %s493 = smul.addr %s492, 8
      %s494 = scalar_lea.vmem %s1, %s493
      %p495 = pneg %p73
      %p496 = pneg %p70
      %p497 = scmp.lt.s32.totalorder %s26, 1
      %s498 = scalar_select %p497, %s26, 1
      %s499 = smul.addr %s498, 6
      %s500 = smul.addr %s499, 8
      %s501 = scalar_lea.vmem %s2, %s500
      %p502 = pneg %p99
      %p503 = pneg %p96
      %p504 = scmp.lt.s32.totalorder %s26, 1
      %s505 = scalar_select %p504, %s26, 1
      %s506 = smul.addr %s505, 4
      %s507 = smul.addr %s506, 8
      %s508 = scalar_lea.vmem %s3, %s507
      %p509 = pneg %p125
      %p510 = pneg %p122
      %p511 = pneg %p146
      %p512 = pneg %p143
      %p513 = pneg %p167
      %p514 = pneg %p164
      %p515 = pneg %p188
      %p516 = pneg %p185
      %p517 = pneg %p209
      %p518 = pneg %p206
      %p519 = pneg %p230
      %p520 = pneg %p227
      %p521 = pneg %p251
      %p522 = pneg %p248
      %p523 = pneg %p272
      %p524 = pneg %p269
      %p525 = pneg %p293
      %p526 = pneg %p290
      %p527 = pneg %p314
      %p528 = pneg %p311
      %p529 = pneg %p335
      %p530 = pneg %p332
      %p531 = scmp.lt.s32.totalorder %s26, 1
      %s532 = scalar_select %p531, %s26, 1
      %s533 = smul.addr %s532, 2
      %s534 = smul.addr %s533, 8
      %s535 = scalar_lea.vmem %s14, %s534
      %p536 = pneg %p361
      %p537 = pneg %p358
      %p538 = pneg %p387
      %p539 = pneg %p384
      %p540 = scmp.lt.s32.totalorder %s26, 1
      %s541 = scalar_select %p540, %s26, 1
      %s542 = smul.addr %s541, 4
      %s543 = smul.addr %s542, 8
      %s544 = scalar_lea.vmem %s15, %s543
      %p545 = scmp.lt.s32.totalorder %s26, 1
      %s546 = scalar_select %p545, %s26, 1
      %s547 = smul.addr %s546, 8
      %s548 = smul.addr %s547, 8
      %s549 = scalar_lea.vmem %s0, %s548
      %p550 = scmp.lt.s32.totalorder %s26, 1
      %s551 = scalar_select %p550, %s26, 1
      %s552 = smul.addr %s551, 8
      %s553 = smul.addr %s552, 8
      %s554 = scalar_lea.vmem %s1, %s553
      %p555 = scmp.lt.s32.totalorder %s26, 1
      %s556 = scalar_select %p555, %s26, 1
      %s557 = smul.addr %s556, 6
      %s558 = smul.addr %s557, 8
      %s559 = scalar_lea.vmem %s2, %s558
      %p560 = scmp.lt.s32.totalorder %s26, 1
      %s561 = scalar_select %p560, %s26, 1
      %s562 = smul.addr %s561, 4
      %s563 = smul.addr %s562, 8
      %s564 = scalar_lea.vmem %s3, %s563
      %p565 = scmp.lt.s32.totalorder %s26, 1
      %s566 = scalar_select %p565, %s26, 1
      %s567 = smul.addr %s566, 2
      %s568 = smul.addr %s567, 8
      %s569 = scalar_lea.vmem %s14, %s568
      %p570 = scmp.lt.s32.totalorder %s26, 1
      %s571 = scalar_select %p570, %s26, 1
      %s572 = smul.addr %s571, 4
      %s573 = smul.addr %s572, 8
      %s574 = scalar_lea.vmem %s15, %s573
      %v575 = vld [vmem:[%s549] sm:$0xff]
      %v576 = vld [vmem:[%s549 + $0x8] sm:$0xff]
      %v577 = vld [vmem:[%s549 + $0x10] sm:$0xff]
      %v578 = vld [vmem:[%s549 + $0x18] sm:$0xff]
      %v579 = vld [vmem:[%s549 + $0x20] sm:$0xff]
      %v580 = vld [vmem:[%s549 + $0x28] sm:$0xff]
      %v581 = vld [vmem:[%s549 + $0x30] sm:$0xff]
      %v582 = vld [vmem:[%s549 + $0x38] sm:$0xff]
      %v583 = vld [vmem:[%s554] sm:$0xff]
      %v584 = vld [vmem:[%s554 + $0x8] sm:$0xff]
      %v585 = vld [vmem:[%s554 + $0x10] sm:$0xff]
      %v586 = vld [vmem:[%s554 + $0x18] sm:$0xff]
      %v587 = vld [vmem:[%s554 + $0x20] sm:$0xff]
      %v588 = vld [vmem:[%s554 + $0x28] sm:$0xff]
      %v589 = vld [vmem:[%s554 + $0x30] sm:$0xff]
      %v590 = vld [vmem:[%s554 + $0x38] sm:$0xff]
      %v591 = vld [vmem:[%s559] sm:$0xff]
      %v592 = vld [vmem:[%s559 + $0x8] sm:$0xff]
      %v593 = vld [vmem:[%s559 + $0x10] sm:$0xff]
      %v594 = vld [vmem:[%s559 + $0x18] sm:$0xff]
      %v595 = vld [vmem:[%s559 + $0x20] sm:$0xff]
      %v596 = vld [vmem:[%s559 + $0x28] sm:$0xff]
      %v597 = vld [vmem:[%s4] sm:$0x1]
      %599 = vset.pattern.permute.xlu0 0
      %600 = vperm.xlu0 %599, %v591
      %v601 = vpop.permute.xlu0 %600
      %604 = vset.pattern.permute.xlu0 0
      %605 = vperm.xlu0 %604, %v592
      %v606 = vpop.permute.xlu0 %605
      %609 = vset.pattern.permute.xlu0 0
      %610 = vperm.xlu0 %609, %v593
      %v611 = vpop.permute.xlu0 %610
      %614 = vset.pattern.permute.xlu0 0
      %615 = vperm.xlu0 %614, %v594
      %v616 = vpop.permute.xlu0 %615
      %619 = vset.pattern.permute.xlu0 0
      %620 = vperm.xlu0 %619, %v595
      %v621 = vpop.permute.xlu0 %620
      %624 = vset.pattern.permute.xlu0 0
      %625 = vperm.xlu0 %624, %v596
      %v626 = vpop.permute.xlu0 %625
      %v629 = vperm.slane %v597, 0
      %v631 = vmul.f32 %v601, %v629
      %v632 = vmul.f32 %v606, %v629
      %v633 = vmul.f32 %v611, %v629
      %v634 = vmul.f32 %v616, %v629
      %v635 = vmul.f32 %v621, %v629
      %v636 = vmul.f32 %v626, %v629
      %v637 = vld [vmem:[%s5] sm:$0x1]
      %v639 = vperm.slane %v637, 0
      %v641 = vadd.f32 %v631, %v639
      %v642 = vadd.f32 %v632, %v639
      %v643 = vadd.f32 %v633, %v639
      %v644 = vadd.f32 %v634, %v639
      %v645 = vadd.f32 %v635, %v639
      %v646 = vadd.f32 %v636, %v639
      %v647 = vtanh.pop %v641
      %v648 = vtanh.pop %v642
      %v649 = vtanh.pop %v643
      %v650 = vtanh.pop %v644
      %v651 = vtanh.pop %v645
      %v652 = vtanh.pop %v646
      %v653 = vld [vmem:[%s564] sm:$0xff]
      %v654 = vld [vmem:[%s564 + $0x8] sm:$0xff]
      %v655 = vld [vmem:[%s564 + $0x10] sm:$0xff]
      %v656 = vld [vmem:[%s564 + $0x18] sm:$0xff]
      %658 = vset.pattern.permute.xlu0 0
      %659 = vperm.xlu0 %658, %v653
      %v660 = vpop.permute.xlu0 %659
      %663 = vset.pattern.permute.xlu0 0
      %664 = vperm.xlu0 %663, %v654
      %v665 = vpop.permute.xlu0 %664
      %668 = vset.pattern.permute.xlu0 0
      %669 = vperm.xlu0 %668, %v655
      %v670 = vpop.permute.xlu0 %669
      %673 = vset.pattern.permute.xlu0 0
      %674 = vperm.xlu0 %673, %v656
      %v675 = vpop.permute.xlu0 %674
      %v677 = vmul.f32 %v660, %v629
      %v678 = vmul.f32 %v665, %v629
      %v679 = vmul.f32 %v670, %v629
      %v680 = vmul.f32 %v675, %v629
      %v681 = vadd.f32 %v677, %v639
      %v682 = vadd.f32 %v678, %v639
      %v683 = vadd.f32 %v679, %v639
      %v684 = vadd.f32 %v680, %v639
      %v685 = vtanh.pop %v681
      %v686 = vtanh.pop %v682
      %v687 = vtanh.pop %v683
      %v688 = vtanh.pop %v684
      %v689 = vld [vmem:[%s6] sm:$0xff]
      %v690 = vld [vmem:[%s7] sm:$0xff]
      %vm691 = vcmask 64512
      %v693 = vsel %vm691, %v583, 0
      %v696 = vsel %vm691, %v584, 0
      %v699 = vsel %vm691, %v585, 0
      %v702 = vsel %vm691, %v586, 0
      %v705 = vsel %vm691, %v587, 0
      %v708 = vsel %vm691, %v588, 0
      %710 = vmatpush.msra.mxu0 0.0
      %711 = vmatpush.msra.mxu0 0.0
      %712 = vmatpush.msra.mxu0 0.0
      %713 = vmatpush.msra.mxu0 0.0
      %714 = vmatpush.msra.mxu0 0.0
      %715 = vmatpush.msra.mxu0 0.0
      %716 = vmatpush.msra.mxu0 0.0
      %717 = vmatpush.msra.mxu0 0.0
      %718 = vmatpush.msra.mxu0 0.0
      %719 = vmatpush.msra.mxu0 0.0
      %720 = vmatpush.msra.mxu0 0.0
      %721 = vmatpush.msra.mxu0 0.0
      %722 = vmatpush.msra.mxu0 0.0
      %723 = vmatpush.msra.mxu0 0.0
      %724 = vmatpush.msra.mxu0 0.0
      %725 = vmatpush.msra.mxu0 %v690
      %726 = vmatmul.f32.gmra.mxu0 %v693
      %v727 = vpop.f32.mrf.mxu0
      %v728 = vadd.f32 0.0, %v727
      %729 = vmatmul.f32.gmra.mxu0 %v696
      %v730 = vpop.f32.mrf.mxu0
      %v731 = vadd.f32 0.0, %v730
      %732 = vmatmul.f32.gmra.mxu0 %v699
      %v733 = vpop.f32.mrf.mxu0
      %v734 = vadd.f32 0.0, %v733
      %735 = vmatmul.f32.gmra.mxu0 %v702
      %v736 = vpop.f32.mrf.mxu0
      %v737 = vadd.f32 0.0, %v736
      %738 = vmatmul.f32.gmra.mxu0 %v705
      %v739 = vpop.f32.mrf.mxu0
      %v740 = vadd.f32 0.0, %v739
      %741 = vmatmul.f32.gmra.mxu0 %v708
      %v742 = vpop.f32.mrf.mxu0
      %v743 = vadd.f32 0.0, %v742
      %744 = vdwg.mxu0
      %v746 = vsel %vm691, %v575, 0
      %v749 = vsel %vm691, %v576, 0
      %v752 = vsel %vm691, %v577, 0
      %v755 = vsel %vm691, %v578, 0
      %v758 = vsel %vm691, %v579, 0
      %v761 = vsel %vm691, %v580, 0
      %763 = vmatpush.msra.mxu0 0.0
      %764 = vmatpush.msra.mxu0 0.0
      %765 = vmatpush.msra.mxu0 0.0
      %766 = vmatpush.msra.mxu0 0.0
      %767 = vmatpush.msra.mxu0 0.0
      %768 = vmatpush.msra.mxu0 0.0
      %769 = vmatpush.msra.mxu0 0.0
      %770 = vmatpush.msra.mxu0 0.0
      %771 = vmatpush.msra.mxu0 0.0
      %772 = vmatpush.msra.mxu0 0.0
      %773 = vmatpush.msra.mxu0 0.0
      %774 = vmatpush.msra.mxu0 0.0
      %775 = vmatpush.msra.mxu0 0.0
      %776 = vmatpush.msra.mxu0 0.0
      %777 = vmatpush.msra.mxu0 0.0
      %778 = vmatpush.msra.mxu0 %v689
      %779 = vmatmul.f32.gmra.mxu0 %v746
      %v780 = vpop.f32.mrf.mxu0
      %v781 = vadd.f32 %v728, %v780
      %782 = vmatmul.f32.gmra.mxu0 %v749
      %v783 = vpop.f32.mrf.mxu0
      %v784 = vadd.f32 %v731, %v783
      %785 = vmatmul.f32.gmra.mxu0 %v752
      %v786 = vpop.f32.mrf.mxu0
      %v787 = vadd.f32 %v734, %v786
      %788 = vmatmul.f32.gmra.mxu0 %v755
      %v789 = vpop.f32.mrf.mxu0
      %v790 = vadd.f32 %v737, %v789
      %791 = vmatmul.f32.gmra.mxu0 %v758
      %v792 = vpop.f32.mrf.mxu0
      %v793 = vadd.f32 %v740, %v792
      %794 = vmatmul.f32.gmra.mxu0 %v761
      %v795 = vpop.f32.mrf.mxu0
      %v796 = vadd.f32 %v743, %v795
      %797 = vdwg.mxu0
      %v798 = vld [vmem:[%s8] sm:$0x1]
      %v800 = vperm.slane %v798, 0
      %v802 = vadd.f32 %v781, %v800
      %v803 = vadd.f32 %v784, %v800
      %v804 = vadd.f32 %v787, %v800
      %v805 = vadd.f32 %v790, %v800
      %v806 = vadd.f32 %v793, %v800
      %v807 = vadd.f32 %v796, %v800
      %v808 = vxor.u32 %v802, 2147483648
      %v809 = vxor.u32 %v803, 2147483648
      %v810 = vxor.u32 %v804, 2147483648
      %v811 = vxor.u32 %v805, 2147483648
      %v812 = vxor.u32 %v806, 2147483648
      %v813 = vxor.u32 %v807, 2147483648
      %v814 = vmul.f32 %v808, 1.442695
      %v815 = vpow.pop %v814
      %v816 = vmul.f32 %v809, 1.442695
      %v817 = vpow.pop %v816
      %v818 = vmul.f32 %v810, 1.442695
      %v819 = vpow.pop %v818
      %v820 = vmul.f32 %v811, 1.442695
      %v821 = vpow.pop %v820
      %v822 = vmul.f32 %v812, 1.442695
      %v823 = vpow.pop %v822
      %v824 = vmul.f32 %v813, 1.442695
      %v825 = vpow.pop %v824
      %v826 = vadd.f32 %v815, 1.0
      %v827 = vadd.f32 %v817, 1.0
      %v828 = vadd.f32 %v819, 1.0
      %v829 = vadd.f32 %v821, 1.0
      %v830 = vadd.f32 %v823, 1.0
      %v831 = vadd.f32 %v825, 1.0
      %v832 = vrcp.pop %v826
      %v833 = vmul.f32 %v826, %v832
      %v834 = vsub.f32 1.0, %v833
      %v835 = vmul.f32 %v832, %v834
      %v836 = vadd.f32 %v832, %v835
      %vm837 = vweird.f32 %v826
      %vm838 = vweird.f32 %v832
      %vm839 = vmor %vm837, %vm838
      %v840 = vsel %vm839, %v832, %v836
      %v841 = vand.u32 2147483647, %v826
      %vm842 = vcmp.eq.f32.partialorder %v841, 8.507059e+37
      %v843 = vand.u32 %v826, 2147483648
      %v844 = vor.u32 1.1754944e-38, %v843
      %v845 = vsel %vm842, %v844, %v840
      %v846 = vmul.f32 1.0, %v845
      %v847 = vrcp.pop %v827
      %v848 = vmul.f32 %v827, %v847
      %v849 = vsub.f32 1.0, %v848
      %v850 = vmul.f32 %v847, %v849
      %v851 = vadd.f32 %v847, %v850
      %vm852 = vweird.f32 %v827
      %vm853 = vweird.f32 %v847
      %vm854 = vmor %vm852, %vm853
      %v855 = vsel %vm854, %v847, %v851
      %v856 = vand.u32 2147483647, %v827
      %vm857 = vcmp.eq.f32.partialorder %v856, 8.507059e+37
      %v858 = vand.u32 %v827, 2147483648
      %v859 = vor.u32 1.1754944e-38, %v858
      %v860 = vsel %vm857, %v859, %v855
      %v861 = vmul.f32 1.0, %v860
      %v862 = vrcp.pop %v828
      %v863 = vmul.f32 %v828, %v862
      %v864 = vsub.f32 1.0, %v863
      %v865 = vmul.f32 %v862, %v864
      %v866 = vadd.f32 %v862, %v865
      %vm867 = vweird.f32 %v828
      %vm868 = vweird.f32 %v862
      %vm869 = vmor %vm867, %vm868
      %v870 = vsel %vm869, %v862, %v866
      %v871 = vand.u32 2147483647, %v828
      %vm872 = vcmp.eq.f32.partialorder %v871, 8.507059e+37
      %v873 = vand.u32 %v828, 2147483648
      %v874 = vor.u32 1.1754944e-38, %v873
      %v875 = vsel %vm872, %v874, %v870
      %v876 = vmul.f32 1.0, %v875
      %v877 = vrcp.pop %v829
      %v878 = vmul.f32 %v829, %v877
      %v879 = vsub.f32 1.0, %v878
      %v880 = vmul.f32 %v877, %v879
      %v881 = vadd.f32 %v877, %v880
      %vm882 = vweird.f32 %v829
      %vm883 = vweird.f32 %v877
      %vm884 = vmor %vm882, %vm883
      %v885 = vsel %vm884, %v877, %v881
      %v886 = vand.u32 2147483647, %v829
      %vm887 = vcmp.eq.f32.partialorder %v886, 8.507059e+37
      %v888 = vand.u32 %v829, 2147483648
      %v889 = vor.u32 1.1754944e-38, %v888
      %v890 = vsel %vm887, %v889, %v885
      %v891 = vmul.f32 1.0, %v890
      %v892 = vrcp.pop %v830
      %v893 = vmul.f32 %v830, %v892
      %v894 = vsub.f32 1.0, %v893
      %v895 = vmul.f32 %v892, %v894
      %v896 = vadd.f32 %v892, %v895
      %vm897 = vweird.f32 %v830
      %vm898 = vweird.f32 %v892
      %vm899 = vmor %vm897, %vm898
      %v900 = vsel %vm899, %v892, %v896
      %v901 = vand.u32 2147483647, %v830
      %vm902 = vcmp.eq.f32.partialorder %v901, 8.507059e+37
      %v903 = vand.u32 %v830, 2147483648
      %v904 = vor.u32 1.1754944e-38, %v903
      %v905 = vsel %vm902, %v904, %v900
      %v906 = vmul.f32 1.0, %v905
      %v907 = vrcp.pop %v831
      %v908 = vmul.f32 %v831, %v907
      %v909 = vsub.f32 1.0, %v908
      %v910 = vmul.f32 %v907, %v909
      %v911 = vadd.f32 %v907, %v910
      %vm912 = vweird.f32 %v831
      %vm913 = vweird.f32 %v907
      %vm914 = vmor %vm912, %vm913
      %v915 = vsel %vm914, %v907, %v911
      %v916 = vand.u32 2147483647, %v831
      %vm917 = vcmp.eq.f32.partialorder %v916, 8.507059e+37
      %v918 = vand.u32 %v831, 2147483648
      %v919 = vor.u32 1.1754944e-38, %v918
      %v920 = vsel %vm917, %v919, %v915
      %v921 = vmul.f32 1.0, %v920
      %v922 = vmul.f32 %v802, %v846
      %v923 = vmul.f32 %v803, %v861
      %v924 = vmul.f32 %v804, %v876
      %v925 = vmul.f32 %v805, %v891
      %v926 = vmul.f32 %v806, %v906
      %v927 = vmul.f32 %v807, %v921
      %v928 = vadd.f32 %v922, %v647
      %v929 = vadd.f32 %v923, %v648
      %v930 = vadd.f32 %v924, %v649
      %v931 = vadd.f32 %v925, %v650
      %v932 = vadd.f32 %v926, %v651
      %v933 = vadd.f32 %v927, %v652
      %v934 = vld [vmem:[%s11] sm:$0xff]
      %v935 = vld [vmem:[%s12] sm:$0x1]
      %v937 = vperm.slane %v935, 0
      %v940 = vsel %vm691, %v928, 0
      %v943 = vsel %vm691, %v929, 0
      %v946 = vsel %vm691, %v930, 0
      %v949 = vsel %vm691, %v931, 0
      %v952 = vsel %vm691, %v932, 0
      %v955 = vsel %vm691, %v933, 0
      %957 = vmatpush.msra.mxu0 0.0
      %958 = vmatpush.msra.mxu0 0.0
      %959 = vmatpush.msra.mxu0 0.0
      %960 = vmatpush.msra.mxu0 0.0
      %961 = vmatpush.msra.mxu0 0.0
      %962 = vmatpush.msra.mxu0 0.0
      %963 = vmatpush.msra.mxu0 0.0
      %964 = vmatpush.msra.mxu0 0.0
      %965 = vmatpush.msra.mxu0 0.0
      %966 = vmatpush.msra.mxu0 0.0
      %967 = vmatpush.msra.mxu0 0.0
      %968 = vmatpush.msra.mxu0 0.0
      %969 = vmatpush.msra.mxu0 0.0
      %970 = vmatpush.msra.mxu0 0.0
      %971 = vmatpush.msra.mxu0 0.0
      %972 = vmatpush.msra.mxu0 %v934
      %973 = vmatmul.f32.gmra.mxu0 %v940
      %v974 = vpop.f32.mrf.mxu0
      %v975 = vadd.f32 %v937, %v974
      %976 = vmatmul.f32.gmra.mxu0 %v943
      %v977 = vpop.f32.mrf.mxu0
      %v978 = vadd.f32 %v937, %v977
      %979 = vmatmul.f32.gmra.mxu0 %v946
      %v980 = vpop.f32.mrf.mxu0
      %v981 = vadd.f32 %v937, %v980
      %982 = vmatmul.f32.gmra.mxu0 %v949
      %v983 = vpop.f32.mrf.mxu0
      %v984 = vadd.f32 %v937, %v983
      %985 = vmatmul.f32.gmra.mxu0 %v952
      %v986 = vpop.f32.mrf.mxu0
      %v987 = vadd.f32 %v937, %v986
      %988 = vmatmul.f32.gmra.mxu0 %v955
      %v989 = vpop.f32.mrf.mxu0
      %v990 = vadd.f32 %v937, %v989
      %991 = vdwg.mxu0
      %v992 = vsub.f32 %v589, %v583
      %v993 = vsub.f32 %v590, %v584
      %v994 = vsub.f32 %v589, %v585
      %v995 = vsub.f32 %v590, %v586
      %v996 = vsub.f32 %v589, %v587
      %v997 = vsub.f32 %v590, %v588
      %v999 = vsel %vm691, %v589, 0
      %v1002 = vsel %vm691, %v590, 0
      %1004 = vmatpush.msra.mxu0 0.0
      %1005 = vmatpush.msra.mxu0 0.0
      %1006 = vmatpush.msra.mxu0 0.0
      %1007 = vmatpush.msra.mxu0 0.0
      %1008 = vmatpush.msra.mxu0 0.0
      %1009 = vmatpush.msra.mxu0 0.0
      %1010 = vmatpush.msra.mxu0 0.0
      %1011 = vmatpush.msra.mxu0 0.0
      %1012 = vmatpush.msra.mxu0 0.0
      %1013 = vmatpush.msra.mxu0 0.0
      %1014 = vmatpush.msra.mxu0 0.0
      %1015 = vmatpush.msra.mxu0 0.0
      %1016 = vmatpush.msra.mxu0 0.0
      %1017 = vmatpush.msra.mxu0 0.0
      %1018 = vmatpush.msra.mxu0 0.0
      %1019 = vmatpush.msra.mxu0 %v690
      %1020 = vmatmul.f32.gmra.mxu0 %v999
      %v1021 = vpop.f32.mrf.mxu0
      %v1022 = vadd.f32 0.0, %v1021
      %1023 = vmatmul.f32.gmra.mxu0 %v1002
      %v1024 = vpop.f32.mrf.mxu0
      %v1025 = vadd.f32 0.0, %v1024
      %1026 = vdwg.mxu0
      %v1028 = vsel %vm691, %v581, 0
      %v1031 = vsel %vm691, %v582, 0
      %1033 = vmatpush.msra.mxu0 0.0
      %1034 = vmatpush.msra.mxu0 0.0
      %1035 = vmatpush.msra.mxu0 0.0
      %1036 = vmatpush.msra.mxu0 0.0
      %1037 = vmatpush.msra.mxu0 0.0
      %1038 = vmatpush.msra.mxu0 0.0
      %1039 = vmatpush.msra.mxu0 0.0
      %1040 = vmatpush.msra.mxu0 0.0
      %1041 = vmatpush.msra.mxu0 0.0
      %1042 = vmatpush.msra.mxu0 0.0
      %1043 = vmatpush.msra.mxu0 0.0
      %1044 = vmatpush.msra.mxu0 0.0
      %1045 = vmatpush.msra.mxu0 0.0
      %1046 = vmatpush.msra.mxu0 0.0
      %1047 = vmatpush.msra.mxu0 0.0
      %1048 = vmatpush.msra.mxu0 %v689
      %1049 = vmatmul.f32.gmra.mxu0 %v1028
      %v1050 = vpop.f32.mrf.mxu0
      %v1051 = vadd.f32 %v1022, %v1050
      %1052 = vmatmul.f32.gmra.mxu0 %v1031
      %v1053 = vpop.f32.mrf.mxu0
      %v1054 = vadd.f32 %v1025, %v1053
      %1055 = vdwg.mxu0
      %v1056 = vadd.f32 %v1051, %v800
      %v1057 = vadd.f32 %v1054, %v800
      %v1058 = vxor.u32 %v1056, 2147483648
      %v1059 = vxor.u32 %v1057, 2147483648
      %v1060 = vmul.f32 %v1058, 1.442695
      %v1061 = vpow.pop %v1060
      %v1062 = vmul.f32 %v1059, 1.442695
      %v1063 = vpow.pop %v1062
      %v1064 = vadd.f32 %v1061, 1.0
      %v1065 = vadd.f32 %v1063, 1.0
      %v1066 = vrcp.pop %v1064
      %v1067 = vmul.f32 %v1064, %v1066
      %v1068 = vsub.f32 1.0, %v1067
      %v1069 = vmul.f32 %v1066, %v1068
      %v1070 = vadd.f32 %v1066, %v1069
      %vm1071 = vweird.f32 %v1064
      %vm1072 = vweird.f32 %v1066
      %vm1073 = vmor %vm1071, %vm1072
      %v1074 = vsel %vm1073, %v1066, %v1070
      %v1075 = vand.u32 2147483647, %v1064
      %vm1076 = vcmp.eq.f32.partialorder %v1075, 8.507059e+37
      %v1077 = vand.u32 %v1064, 2147483648
      %v1078 = vor.u32 1.1754944e-38, %v1077
      %v1079 = vsel %vm1076, %v1078, %v1074
      %v1080 = vmul.f32 1.0, %v1079
      %v1081 = vrcp.pop %v1065
      %v1082 = vmul.f32 %v1065, %v1081
      %v1083 = vsub.f32 1.0, %v1082
      %v1084 = vmul.f32 %v1081, %v1083
      %v1085 = vadd.f32 %v1081, %v1084
      %vm1086 = vweird.f32 %v1065
      %vm1087 = vweird.f32 %v1081
      %vm1088 = vmor %vm1086, %vm1087
      %v1089 = vsel %vm1088, %v1081, %v1085
      %v1090 = vand.u32 2147483647, %v1065
      %vm1091 = vcmp.eq.f32.partialorder %v1090, 8.507059e+37
      %v1092 = vand.u32 %v1065, 2147483648
      %v1093 = vor.u32 1.1754944e-38, %v1092
      %v1094 = vsel %vm1091, %v1093, %v1089
      %v1095 = vmul.f32 1.0, %v1094
      %v1096 = vmul.f32 %v1056, %v1080
      %v1097 = vmul.f32 %v1057, %v1095
      %v1098 = vld [vmem:[%s569] sm:$0xff]
      %v1099 = vld [vmem:[%s569 + $0x8] sm:$0xff]
      %v1100 = vadd.f32 %v1096, %v685
      %v1101 = vadd.f32 %v1097, %v686
      %v1102 = vld [vmem:[%s9] sm:$0xff]
      %v1103 = vld [vmem:[%s10] sm:$0x1]
      %v1105 = vperm.slane %v1103, 0
      %v1108 = vsel %vm691, %v1100, 0
      %v1111 = vsel %vm691, %v1101, 0
      %1113 = vmatpush.msra.mxu0 0.0
      %1114 = vmatpush.msra.mxu0 0.0
      %1115 = vmatpush.msra.mxu0 0.0
      %1116 = vmatpush.msra.mxu0 0.0
      %1117 = vmatpush.msra.mxu0 0.0
      %1118 = vmatpush.msra.mxu0 0.0
      %1119 = vmatpush.msra.mxu0 0.0
      %1120 = vmatpush.msra.mxu0 0.0
      %1121 = vmatpush.msra.mxu0 0.0
      %1122 = vmatpush.msra.mxu0 0.0
      %1123 = vmatpush.msra.mxu0 0.0
      %1124 = vmatpush.msra.mxu0 0.0
      %1125 = vmatpush.msra.mxu0 0.0
      %1126 = vmatpush.msra.mxu0 0.0
      %1127 = vmatpush.msra.mxu0 0.0
      %1128 = vmatpush.msra.mxu0 %v1102
      %1129 = vmatmul.f32.gmra.mxu0 %v1108
      %v1130 = vpop.f32.mrf.mxu0
      %v1131 = vadd.f32 %v1105, %v1130
      %1132 = vmatmul.f32.gmra.mxu0 %v1111
      %v1133 = vpop.f32.mrf.mxu0
      %v1134 = vadd.f32 %v1105, %v1133
      %1135 = vdwg.mxu0
      %v1137 = vsel %vm691, %v1131, 0
      %v1140 = vsel %vm691, %v1134, 0
      %v1143 = vsel %vm691, %v975, 0
      %v1146 = vsel %vm691, %v978, 0
      %v1149 = vsel %vm691, %v981, 0
      %v1152 = vsel %vm691, %v984, 0
      %v1155 = vsel %vm691, %v987, 0
      %v1158 = vsel %vm691, %v990, 0
      %1160 = vmatpush.xpose.msra.mxu0 0.0
      %1161 = vmatpush.xpose.msra.mxu0 0.0
      %1162 = vmatpush.xpose.msra.mxu0 0.0
      %1163 = vmatpush.xpose.msra.mxu0 0.0
      %1164 = vmatpush.xpose.msra.mxu0 0.0
      %1165 = vmatpush.xpose.msra.mxu0 0.0
      %1166 = vmatpush.xpose.msra.mxu0 0.0
      %1167 = vmatpush.xpose.msra.mxu0 0.0
      %1168 = vmatpush.xpose.msra.mxu0 0.0
      %1169 = vmatpush.xpose.msra.mxu0 0.0
      %1170 = vmatpush.xpose.msra.mxu0 %v1158
      %1171 = vmatpush.xpose.msra.mxu0 %v1155
      %1172 = vmatpush.xpose.msra.mxu0 %v1152
      %1173 = vmatpush.xpose.msra.mxu0 %v1149
      %1174 = vmatpush.xpose.msra.mxu0 %v1146
      %1175 = vmatpush.xpose.msra.mxu0 %v1143
      %1176 = vmatmul.f32.gmra.mxu0 %v1137
      %v1177 = vpop.f32.mrf.mxu0
      %v1178 = vadd.f32 0.0, %v1177
      %1179 = vmatmul.f32.gmra.mxu0 %v1140
      %v1180 = vpop.f32.mrf.mxu0
      %v1181 = vadd.f32 0.0, %v1180
      %1182 = vdwg.mxu0
      %vm1183 = vcmask 392192
      %v1185 = vsel %vm1183, %v1178, 0
      %v1188 = vsel %vm1183, %v1181, 0
      %1190 = vmatpush.msra.mxu0 0.0
      %1191 = vmatpush.msra.mxu0 0.0
      %1192 = vmatpush.msra.mxu0 0.0
      %1193 = vmatpush.msra.mxu0 0.0
      %1194 = vmatpush.msra.mxu0 0.0
      %1195 = vmatpush.msra.mxu0 0.0
      %1196 = vmatpush.msra.mxu0 0.0
      %1197 = vmatpush.msra.mxu0 0.0
      %1198 = vmatpush.msra.mxu0 0.0
      %1199 = vmatpush.msra.mxu0 0.0
      %1200 = vmatpush.msra.mxu0 %v997
      %1201 = vmatpush.msra.mxu0 %v996
      %1202 = vmatpush.msra.mxu0 %v995
      %1203 = vmatpush.msra.mxu0 %v994
      %1204 = vmatpush.msra.mxu0 %v993
      %1205 = vmatpush.msra.mxu0 %v992
      %1206 = vmatmul.f32.gmra.mxu0 %v1185
      %v1207 = vpop.f32.mrf.mxu0
      %v1208 = vadd.f32 0.0, %v1207
      %1209 = vmatmul.f32.gmra.mxu0 %v1188
      %v1210 = vpop.f32.mrf.mxu0
      %v1211 = vadd.f32 0.0, %v1210
      %1212 = vdwg.mxu0
      %v1213 = vld [vmem:[%s13] sm:$0xff]
      %v1214 = vld [vmem:[%s13 + $0x8] sm:$0xff]
      %v1215 = vld [vmem:[%s13 + $0x10] sm:$0xff]
      %v1216 = vld [vmem:[%s13 + $0x18] sm:$0xff]
      %1217 = vxpose.xlu0.b32.start [1/16] %v1208, 128
      %1218 = vxpose.xlu0.b32.cont [2/16] %v1211, 128
      %1219 = vxpose.xlu0.b32.cont [3/16] 0.0, 128
      %1220 = vxpose.xlu0.b32.cont [4/16] 0.0, 128
      %1221 = vxpose.xlu0.b32.cont [5/16] 0.0, 128
      %1222 = vxpose.xlu0.b32.cont [6/16] 0.0, 128
      %1223 = vxpose.xlu0.b32.cont [7/16] 0.0, 128
      %1224 = vxpose.xlu0.b32.cont [8/16] 0.0, 128
      %1225 = vxpose.xlu0.b32.cont [9/16] 0.0, 128
      %1226 = vxpose.xlu0.b32.cont [10/16] 0.0, 128
      %1227 = vxpose.xlu0.b32.cont [11/16] 0.0, 128
      %1228 = vxpose.xlu0.b32.cont [12/16] 0.0, 128
      %1229 = vxpose.xlu0.b32.cont [13/16] 0.0, 128
      %1230 = vxpose.xlu0.b32.cont [14/16] 0.0, 128
      %1231 = vxpose.xlu0.b32.cont [15/16] 0.0, 128
      %1232 = vxpose.xlu0.b32.end [16/16] 0.0, 128
      %v1233 = vpop.trf.xlu0
      %v1234 = vpop.trf.xlu0
      %v1235 = vpop.trf.xlu0
      %v1236 = vpop.trf.xlu0
      %v1237 = vpop.trf.xlu0
      %v1238 = vpop.trf.xlu0
      %v1239 = vpop.trf.xlu0
      %v1240 = vpop.trf.xlu0
      %v1241 = vpop.trf.xlu0
      %v1242 = vpop.trf.xlu0
      %v1243 = vpop.trf.xlu0
      %v1244 = vpop.trf.xlu0
      %v1245 = vpop.trf.xlu0
      %v1246 = vpop.trf.xlu0
      %v1247 = vpop.trf.xlu0
      %v1248 = vpop.trf.xlu0
      %vm1249 = vcmask 130048
      %v1251 = vsel %vm1249, %v1233, 0
      %1253 = vmatpush.msra.mxu0 0.0
      %1254 = vmatpush.msra.mxu0 0.0
      %1255 = vmatpush.msra.mxu0 0.0
      %1256 = vmatpush.msra.mxu0 0.0
      %1257 = vmatpush.msra.mxu0 0.0
      %1258 = vmatpush.msra.mxu0 0.0
      %1259 = vmatpush.msra.mxu0 0.0
      %1260 = vmatpush.msra.mxu0 0.0
      %1261 = vmatpush.msra.mxu0 0.0
      %1262 = vmatpush.msra.mxu0 0.0
      %1263 = vmatpush.msra.mxu0 0.0
      %1264 = vmatpush.msra.mxu0 0.0
      %1265 = vmatpush.msra.mxu0 0.0
      %1266 = vmatpush.msra.mxu0 0.0
      %1267 = vmatpush.msra.mxu0 %v1215
      %1268 = vmatpush.msra.mxu0 %v1213
      %1269 = vmatmul.f32.gmra.mxu0 %v1251
      %v1270 = vpop.f32.mrf.mxu0
      %v1271 = vadd.f32 0.0, %v1270
      %1272 = vdwg.mxu0
      %1273 = vmatpush.msra.mxu0 0.0
      %1274 = vmatpush.msra.mxu0 0.0
      %1275 = vmatpush.msra.mxu0 0.0
      %1276 = vmatpush.msra.mxu0 0.0
      %1277 = vmatpush.msra.mxu0 0.0
      %1278 = vmatpush.msra.mxu0 0.0
      %1279 = vmatpush.msra.mxu0 0.0
      %1280 = vmatpush.msra.mxu0 0.0
      %1281 = vmatpush.msra.mxu0 0.0
      %1282 = vmatpush.msra.mxu0 0.0
      %1283 = vmatpush.msra.mxu0 0.0
      %1284 = vmatpush.msra.mxu0 0.0
      %1285 = vmatpush.msra.mxu0 0.0
      %1286 = vmatpush.msra.mxu0 0.0
      %1287 = vmatpush.msra.mxu0 %v1216
      %1288 = vmatpush.msra.mxu0 %v1214
      %1289 = vmatmul.f32.gmra.mxu0 %v1251
      %v1290 = vpop.f32.mrf.mxu0
      %v1291 = vadd.f32 0.0, %v1290
      %1292 = vdwg.mxu0
      %v1293 = vadd.f32 %v1098, %v1271
      %v1294 = vadd.f32 %v1099, %v1291
      %1295 = vst [vmem:[%s574] sm:$0xff] %v1293
      %1296 = vst [vmem:[%s574 + $0x8] sm:$0xff] %v1294
      %v1297 = vadd.f32 %v1096, %v687
      %v1298 = vadd.f32 %v1097, %v688
      %v1299 = vld [vmem:[%s9] sm:$0xff]
      %v1300 = vld [vmem:[%s10] sm:$0x1]
      %v1302 = vperm.slane %v1300, 0
      %v1305 = vsel %vm691, %v1297, 0
      %v1308 = vsel %vm691, %v1298, 0
      %1310 = vmatpush.msra.mxu0 0.0
      %1311 = vmatpush.msra.mxu0 0.0
      %1312 = vmatpush.msra.mxu0 0.0
      %1313 = vmatpush.msra.mxu0 0.0
      %1314 = vmatpush.msra.mxu0 0.0
      %1315 = vmatpush.msra.mxu0 0.0
      %1316 = vmatpush.msra.mxu0 0.0
      %1317 = vmatpush.msra.mxu0 0.0
      %1318 = vmatpush.msra.mxu0 0.0
      %1319 = vmatpush.msra.mxu0 0.0
      %1320 = vmatpush.msra.mxu0 0.0
      %1321 = vmatpush.msra.mxu0 0.0
      %1322 = vmatpush.msra.mxu0 0.0
      %1323 = vmatpush.msra.mxu0 0.0
      %1324 = vmatpush.msra.mxu0 0.0
      %1325 = vmatpush.msra.mxu0 %v1299
      %1326 = vmatmul.f32.gmra.mxu0 %v1305
      %v1327 = vpop.f32.mrf.mxu0
      %v1328 = vadd.f32 %v1302, %v1327
      %1329 = vmatmul.f32.gmra.mxu0 %v1308
      %v1330 = vpop.f32.mrf.mxu0
      %v1331 = vadd.f32 %v1302, %v1330
      %1332 = vdwg.mxu0
      %v1334 = vsel %vm691, %v1328, 0
      %v1337 = vsel %vm691, %v1331, 0
      %1339 = vmatpush.xpose.msra.mxu0 0.0
      %1340 = vmatpush.xpose.msra.mxu0 0.0
      %1341 = vmatpush.xpose.msra.mxu0 0.0
      %1342 = vmatpush.xpose.msra.mxu0 0.0
      %1343 = vmatpush.xpose.msra.mxu0 0.0
      %1344 = vmatpush.xpose.msra.mxu0 0.0
      %1345 = vmatpush.xpose.msra.mxu0 0.0
      %1346 = vmatpush.xpose.msra.mxu0 0.0
      %1347 = vmatpush.xpose.msra.mxu0 0.0
      %1348 = vmatpush.xpose.msra.mxu0 0.0
      %1349 = vmatpush.xpose.msra.mxu0 %v1158
      %1350 = vmatpush.xpose.msra.mxu0 %v1155
      %1351 = vmatpush.xpose.msra.mxu0 %v1152
      %1352 = vmatpush.xpose.msra.mxu0 %v1149
      %1353 = vmatpush.xpose.msra.mxu0 %v1146
      %1354 = vmatpush.xpose.msra.mxu0 %v1143
      %1355 = vmatmul.f32.gmra.mxu0 %v1334
      %v1356 = vpop.f32.mrf.mxu0
      %v1357 = vadd.f32 0.0, %v1356
      %1358 = vmatmul.f32.gmra.mxu0 %v1337
      %v1359 = vpop.f32.mrf.mxu0
      %v1360 = vadd.f32 0.0, %v1359
      %1361 = vdwg.mxu0
      %v1363 = vsel %vm1183, %v1357, 0
      %v1366 = vsel %vm1183, %v1360, 0
      %1368 = vmatpush.msra.mxu0 0.0
      %1369 = vmatpush.msra.mxu0 0.0
      %1370 = vmatpush.msra.mxu0 0.0
      %1371 = vmatpush.msra.mxu0 0.0
      %1372 = vmatpush.msra.mxu0 0.0
      %1373 = vmatpush.msra.mxu0 0.0
      %1374 = vmatpush.msra.mxu0 0.0
      %1375 = vmatpush.msra.mxu0 0.0
      %1376 = vmatpush.msra.mxu0 0.0
      %1377 = vmatpush.msra.mxu0 0.0
      %1378 = vmatpush.msra.mxu0 %v997
      %1379 = vmatpush.msra.mxu0 %v996
      %1380 = vmatpush.msra.mxu0 %v995
      %1381 = vmatpush.msra.mxu0 %v994
      %1382 = vmatpush.msra.mxu0 %v993
      %1383 = vmatpush.msra.mxu0 %v992
      %1384 = vmatmul.f32.gmra.mxu0 %v1363
      %v1385 = vpop.f32.mrf.mxu0
      %v1386 = vadd.f32 0.0, %v1385
      %1387 = vmatmul.f32.gmra.mxu0 %v1366
      %v1388 = vpop.f32.mrf.mxu0
      %v1389 = vadd.f32 0.0, %v1388
      %1390 = vdwg.mxu0
      %v1391 = vld [vmem:[%s13] sm:$0xff]
      %v1392 = vld [vmem:[%s13 + $0x8] sm:$0xff]
      %v1393 = vld [vmem:[%s13 + $0x10] sm:$0xff]
      %v1394 = vld [vmem:[%s13 + $0x18] sm:$0xff]
      %1395 = vxpose.xlu0.b32.start [1/16] %v1386, 128
      %1396 = vxpose.xlu0.b32.cont [2/16] %v1389, 128
      %1397 = vxpose.xlu0.b32.cont [3/16] 0.0, 128
      %1398 = vxpose.xlu0.b32.cont [4/16] 0.0, 128
      %1399 = vxpose.xlu0.b32.cont [5/16] 0.0, 128
      %1400 = vxpose.xlu0.b32.cont [6/16] 0.0, 128
      %1401 = vxpose.xlu0.b32.cont [7/16] 0.0, 128
      %1402 = vxpose.xlu0.b32.cont [8/16] 0.0, 128
      %1403 = vxpose.xlu0.b32.cont [9/16] 0.0, 128
      %1404 = vxpose.xlu0.b32.cont [10/16] 0.0, 128
      %1405 = vxpose.xlu0.b32.cont [11/16] 0.0, 128
      %1406 = vxpose.xlu0.b32.cont [12/16] 0.0, 128
      %1407 = vxpose.xlu0.b32.cont [13/16] 0.0, 128
      %1408 = vxpose.xlu0.b32.cont [14/16] 0.0, 128
      %1409 = vxpose.xlu0.b32.cont [15/16] 0.0, 128
      %1410 = vxpose.xlu0.b32.end [16/16] 0.0, 128
      %v1411 = vpop.trf.xlu0
      %v1412 = vpop.trf.xlu0
      %v1413 = vpop.trf.xlu0
      %v1414 = vpop.trf.xlu0
      %v1415 = vpop.trf.xlu0
      %v1416 = vpop.trf.xlu0
      %v1417 = vpop.trf.xlu0
      %v1418 = vpop.trf.xlu0
      %v1419 = vpop.trf.xlu0
      %v1420 = vpop.trf.xlu0
      %v1421 = vpop.trf.xlu0
      %v1422 = vpop.trf.xlu0
      %v1423 = vpop.trf.xlu0
      %v1424 = vpop.trf.xlu0
      %v1425 = vpop.trf.xlu0
      %v1426 = vpop.trf.xlu0
      %v1428 = vsel %vm1249, %v1411, 0
      %1430 = vmatpush.msra.mxu0 0.0
      %1431 = vmatpush.msra.mxu0 0.0
      %1432 = vmatpush.msra.mxu0 0.0
      %1433 = vmatpush.msra.mxu0 0.0
      %1434 = vmatpush.msra.mxu0 0.0
      %1435 = vmatpush.msra.mxu0 0.0
      %1436 = vmatpush.msra.mxu0 0.0
      %1437 = vmatpush.msra.mxu0 0.0
      %1438 = vmatpush.msra.mxu0 0.0
      %1439 = vmatpush.msra.mxu0 0.0
      %1440 = vmatpush.msra.mxu0 0.0
      %1441 = vmatpush.msra.mxu0 0.0
      %1442 = vmatpush.msra.mxu0 0.0
      %1443 = vmatpush.msra.mxu0 0.0
      %1444 = vmatpush.msra.mxu0 %v1393
      %1445 = vmatpush.msra.mxu0 %v1391
      %1446 = vmatmul.f32.gmra.mxu0 %v1428
      %v1447 = vpop.f32.mrf.mxu0
      %v1448 = vadd.f32 0.0, %v1447
      %1449 = vdwg.mxu0
      %1450 = vmatpush.msra.mxu0 0.0
      %1451 = vmatpush.msra.mxu0 0.0
      %1452 = vmatpush.msra.mxu0 0.0
      %1453 = vmatpush.msra.mxu0 0.0
      %1454 = vmatpush.msra.mxu0 0.0
      %1455 = vmatpush.msra.mxu0 0.0
      %1456 = vmatpush.msra.mxu0 0.0
      %1457 = vmatpush.msra.mxu0 0.0
      %1458 = vmatpush.msra.mxu0 0.0
      %1459 = vmatpush.msra.mxu0 0.0
      %1460 = vmatpush.msra.mxu0 0.0
      %1461 = vmatpush.msra.mxu0 0.0
      %1462 = vmatpush.msra.mxu0 0.0
      %1463 = vmatpush.msra.mxu0 0.0
      %1464 = vmatpush.msra.mxu0 %v1394
      %1465 = vmatpush.msra.mxu0 %v1392
      %1466 = vmatmul.f32.gmra.mxu0 %v1428
      %v1467 = vpop.f32.mrf.mxu0
      %v1468 = vadd.f32 0.0, %v1467
      %1469 = vdwg.mxu0
      %v1470 = vadd.f32 %v1098, %v1448
      %v1471 = vadd.f32 %v1099, %v1468
      %s1472 = scalar_lea.vmem %s574, 16
      %1473 = vst [vmem:[%s1472] sm:$0xff] %v1470
      %1474 = vst [vmem:[%s1472 + $0x8] sm:$0xff] %v1471
      %p1475 = scmp.lt.s32.totalorder %s26, 1
      %s1476 = scalar_select %p1475, %s26, 1
      %s1477 = smul.addr %s1476, 4
      %s1478 = smul.addr %s1477, 8
      %s1479 = scalar_lea.vmem %s15, %s1478
      // Predicated region
      $region81: #{ta_block_forward.3} parent=79 // pred_check
        %p1480 = pneg %p384
      $region82: #{ta_block_forward.3} parent=79 // pred_check_branch
        %1482 = sbr.rel (%p1480) target = $region84
      $region83: #{ta_block_forward.3} parent=79 // pred_region
        _
      $region84: #{ta_block_forward.3} parent=79 // pred_fallthru
        _
    $region80: #{ta_block_forward.3} parent=5 // pred_fallthru
      _
    %p1483 = scmp.le.s32.totalorder 2, %s21
    // Predicated region
    $region85: #{ta_block_forward.3} parent=5 // pred_check
      %p1484 = pneg %p1483
    $region86: #{ta_block_forward.3} parent=5 // pred_check_branch
      %1486 = sbr.rel (%p1484) target = $region88
    $region87: #{ta_block_forward.3} parent=5 // pred_region
      %s1487 = ssub.s32 %s21, 2
      // Predicated region
      $region89: #{ta_block_forward.3} parent=87 // pred_check
        %p1488 = pneg %p390
      $region90: #{ta_block_forward.3} parent=87 // pred_check_branch
        %1490 = sbr.rel (%p1488) target = $region92
      $region91: #{ta_block_forward.3} parent=87 // pred_region
        %p1491 = scmp.lt.s32.totalorder %s27, 1
        %s1492 = scalar_select %p1491, %s27, 1
        %s1493 = smul.addr %s1492, 4
        %s1494 = smul.addr %s1493, 8
        %s1495 = scalar_lea.vmem %s15, %s1494
      $region92: #{ta_block_forward.3} parent=87 // pred_fallthru
        _
    $region88: #{ta_block_forward.3} parent=5 // pred_fallthru
      _
  $region6: #{ta_block_forward.3} parent=0 // loop_footer
    %s25 = sadd.s32 1, %s21
  $region7: #{ta_block_forward.3} parent=0 // loop_footer_branch
    %20 = sbr.rel target = $region3
  $region8: #{ta_block_forward.3} parent=0 // loop_exit
    _

</llo_original>
